<compile_context>
chip_gen: v6e
topology: v6e:2x2x1
jax: 0.10.0
libtpu: 0.0.40
codegen_flags: <defaults>
</compile_context>

<pallas_src>
import jax
import jax.numpy as jnp
from jax.experimental import pallas as pl
from jax.experimental.pallas import tpu as pltpu

BN_EPS = 1e-5  # nn.BatchNorm1d default eps


def _round_up(x, m):
    return (x + m - 1) // m * m


# --------------------------------------------------------------------------- #
# Kernels
# --------------------------------------------------------------------------- #
def _folded_gap_kernel(x_ref, w1_ref, b1_ref, w2_ref, b2_ref, out_ref):
    # GAP (AdaptiveAvgPool2d(1) + Flatten), the 1/HW scale and BatchNorm1d are all
    # folded into w1/b1 on the host, so the body is: matmul -> bias -> ReLU -> matmul.
    h = jnp.dot(x_ref[...], w1_ref[...],
                preferred_element_type=jnp.float32) + b1_ref[...]       # (TB, HP) f32
    h = jnp.maximum(h, 0.0)
    # Dropout(p=0.5) is identity in eval/inference mode.
    # TODO(synk): training-mode dropout (pltpu.prng_seed / prng_random_bits) not implemented.
    logits = jnp.dot(h.astype(w2_ref.dtype), w2_ref[...],
                     preferred_element_type=jnp.float32) + b2_ref[...]  # (TB, NP) f32
    out_ref[...] = logits.astype(out_ref.dtype)


def _inkernel_gap_kernel(x_ref, w1_ref, b1_ref, w2_ref, b2_ref, out_ref):
    # Fallback for large C (GAP-expanded weight would not fit VMEM).  x tile is
    # (TB, C, HW) — the free contiguous reshape of NCHW — and the spatial reduction
    # runs on the lane axis (XLU), accumulated in f32.  1/HW is folded into w1.
    pooled = jnp.sum(x_ref[...].astype(jnp.float32), axis=2)            # (TB, C) f32
    h = jnp.dot(pooled.astype(w1_ref.dtype), w1_ref[...],
                preferred_element_type=jnp.float32) + b1_ref[...]       # (TB, HP) f32
    h = jnp.maximum(h, 0.0)
    logits = jnp.dot(h.astype(w2_ref.dtype), w2_ref[...],
                     preferred_element_type=jnp.float32) + b2_ref[...]
    out_ref[...] = logits.astype(out_ref.dtype)


# --------------------------------------------------------------------------- #
# Host-side parameter prep (BN fold, GAP fold, padding, dtype)
# --------------------------------------------------------------------------- #
def _prepare_operands(params, hw, weights_dtype, fold_gap):
    hidden = params["w1"].shape[1]
    out_classes = params["w2"].shape[1]
    HP = _round_up(hidden, 128)        # 1000 -> 1024 (lane-dense hidden / aligned K)
    NP = _round_up(out_classes, 128)   # e.g. 10 -> 128 (unmasked lane-dense stores)

    # Fold BatchNorm1d (inference, running stats) into fc1, plus the GAP 1/HW scale.
    scale = params["gamma"] * jax.lax.rsqrt(params["var"] + BN_EPS)       # (hidden,)
    w1f = params["w1"] * scale[None, :] * (1.0 / hw)
    b1f = (params["b1"] - params["mean"]) * scale + params["beta"]

    if fold_gap:
        # Expand to (C*HW, hidden): W1_big[c*HW + s, o] = w1f[c, o]
        w1f = jnp.repeat(w1f, hw, axis=0)
    else:
        w1f = w1f * hw                 # keep plain (C, hidden); kernel sums, 1/HW stays folded

    # Zero-padding is exact through ReLU and fc2.
    w1p = jnp.pad(w1f * (1.0 if fold_gap else (1.0 / hw)),
                  ((0, 0), (0, HP - hidden))).astype(weights_dtype)
    b1p = jnp.pad(b1f, (0, HP - hidden)).reshape(1, HP).astype(jnp.float32)
    w2p = jnp.pad(params["w2"],
                  ((0, HP - hidden), (0, NP - out_classes))).astype(weights_dtype)
    b2p = jnp.pad(params["b2"], (0, NP - out_classes)).reshape(1, NP).astype(jnp.float32)
    return w1p, b1p, w2p, b2p, HP, NP, out_classes


def _vmem_capacity_bytes():
    try:
        return int(pltpu.get_tpu_info().vmem_capacity_bytes)
    except Exception:
        return 64 << 20   # conservative (v7x per-TC VMEM)


# --------------------------------------------------------------------------- #
# Wrapper
# --------------------------------------------------------------------------- #
def recognition_classifier(x, params, *, batch_tile=256, weights_dtype=jnp.bfloat16,
                           x_dtype=jnp.bfloat16, mode="auto"):
    """x: (B, C, H, W) float32 NCHW.  Returns logits (B, out_classes)."""
    B, C, H, W = x.shape
    HW = H * W
    hidden = params["w1"].shape[1]
    HP = _round_up(hidden, 128)

    vmem_cap = _vmem_capacity_bytes()
    wbytes = jnp.dtype(weights_dtype).itemsize
    xbytes = jnp.dtype(x_dtype).itemsize

    # GAP-folded fc1 weight is (C*HW, HP): only viable while it fits comfortably in VMEM.
    folded_w1_bytes = C * HW * HP * wbytes
    if mode == "auto":
        fold_gap = folded_w1_bytes <= min(16 << 20, vmem_cap // 4)
    else:
        fold_gap = (mode == "folded")

    w1p, b1p, w2p, b2p, HP, NP, out_classes = _prepare_operands(
        params, HW, weights_dtype, fold_gap)

    if fold_gap:
        K = C * HW
        x_in = x.reshape(B, K).astype(x_dtype)          # free contiguous reshape, bf16 DMA
        x_row_bytes = 2 * _round_up(K, 128) * xbytes    # double-buffered x block, per row
        w_bytes = 2 * (K * HP + HP * NP) * wbytes + 2 * (HP + NP) * 4
    else:
        x_in = x.reshape(B, C, HW).astype(x_dtype)      # free contiguous reshape, bf16 DMA
        x_row_bytes = 2 * _round_up(C, 8) * _round_up(HW, 128) * xbytes
        w_bytes = 2 * (_round_up(C, 8) * HP + HP * NP) * wbytes + 2 * (HP + NP) * 4

    # Batch tile from a VMEM budget (v7x: 64 MiB, v5e/v6e: 128 MiB).
    per_row = x_row_bytes + 2 * NP * 4 + HP * 4         # + double-buffered out + f32 hidden
    budget = int(0.55 * vmem_cap)
    tb_cap = max(8, (budget - w_bytes) // max(per_row, 1) // 8 * 8)
    TB = int(min(batch_tile, tb_cap, _round_up(B, 8)))
    # v7x has two TensorCores: make sure the "parallel" grid axis has >= 2 steps when
    # the batch is big enough (costs one extra ~0.35us step on single-TC chips).
    if B >= 16 and _round_up(B, 8) <= TB:
        TB = max(8, _round_up(pl.cdiv(B, 2), 8))
    BP = _round_up(B, TB)
    if BP != B:
        pad = ((0, BP - B),) + ((0, 0),) * (x_in.ndim - 1)
        x_in = jnp.pad(x_in, pad)
    grid = (BP // TB,)

    est = w_bytes + TB * per_row
    vmem_bytes = int(min(max(int(1.5 * est), 16 << 20), int(0.7 * vmem_cap)))

    # NOTE: weight/bias blocks use constant index_maps so the pipeline never re-DMAs
    # them; single-buffering them (pipeline_mode=pl.Buffered(1)) would save VMEM at
    # very large C, but is left at the default for lowering portability.
    if fold_gap:
        kernel = _folded_gap_kernel
        in_specs = [
            pl.BlockSpec((TB, K), lambda i: (i, 0)),      # x: pipelined over batch
            pl.BlockSpec((K, HP), lambda i: (0, 0)),      # GAP+BN-folded fc1 weight (resident)
            pl.BlockSpec((1, HP), lambda i: (0, 0)),      # fc1 bias (BN-folded)
            pl.BlockSpec((HP, NP), lambda i: (0, 0)),     # fc2 weight (resident)
            pl.BlockSpec((1, NP), lambda i: (0, 0)),      # fc2 bias
        ]
    else:
        kernel = _inkernel_gap_kernel
        in_specs = [
            pl.BlockSpec((TB, C, HW), lambda i: (i, 0, 0)),
            pl.BlockSpec((C, HP), lambda i: (0, 0)),
            pl.BlockSpec((1, HP), lambda i: (0, 0)),
            pl.BlockSpec((HP, NP), lambda i: (0, 0)),
            pl.BlockSpec((1, NP), lambda i: (0, 0)),
        ]

    logits = pl.pallas_call(
        kernel,
        out_shape=jax.ShapeDtypeStruct((BP, NP), jnp.float32),
        grid=grid,
        in_specs=in_specs,
        out_specs=pl.BlockSpec((TB, NP), lambda i: (i, 0)),
        compiler_params=pltpu.CompilerParams(
            dimension_semantics=("parallel",),
            vmem_limit_bytes=vmem_bytes,
        ),
    )(x_in, w1p, b1p, w2p, b2p)

    # Slice away batch / class padding.
    return logits[:B, :out_classes]


# --------------------------------------------------------------------------- #
# References
# --------------------------------------------------------------------------- #
def _reference_fp32(x, params):
    """Pure-JAX fp32 reference of the PyTorch forward (eval mode)."""
    pooled = jnp.mean(x, axis=(2, 3))                     # GAP + Flatten (+squeeze, B>1)
    h = pooled @ params["w1"] + params["b1"]
    h = (h - params["mean"]) * jax.lax.rsqrt(params["var"] + BN_EPS)
    h = h * params["gamma"] + params["beta"]
    h = jnp.maximum(h, 0.0)
    return h @ params["w2"] + params["b2"]


def _reference_same_precision(x, params, *, mode, weights_dtype=jnp.bfloat16,
                              x_dtype=jnp.bfloat16):
    """Reference using exactly the kernel's math (folded params, bf16 in, f32 acc)."""
    B, C, H, W = x.shape
    HW = H * W
    fold_gap = (mode == "folded")
    w1p, b1p, w2p, b2p, _, _, out_classes = _prepare_operands(
        params, HW, weights_dtype, fold_gap)
    if fold_gap:
        xin = x.reshape(B, C * HW).astype(x_dtype)
        h = jnp.dot(xin, w1p, preferred_element_type=jnp.float32) + b1p
    else:
        xin = x.reshape(B, C, HW).astype(x_dtype)
        pooled = jnp.sum(xin.astype(jnp.float32), axis=2)
        h = jnp.dot(pooled.astype(weights_dtype), w1p,
                    preferred_element_type=jnp.float32) + b1p
    h = jnp.maximum(h, 0.0)
    logits = jnp.dot(h.astype(weights_dtype), w2p,
                     preferred_element_type=jnp.float32) + b2p
    return logits[:, :out_classes]


def make_params(key, in_channels, out_classes, hidden=1000):
    ks = jax.random.split(key, 8)
    s1 = 1.0 / jnp.sqrt(in_channels)
    s2 = 1.0 / jnp.sqrt(hidden)
    return {
        "w1": jax.random.uniform(ks[0], (in_channels, hidden), jnp.float32, -s1, s1),
        "b1": jax.random.uniform(ks[1], (hidden,), jnp.float32, -s1, s1),
        "gamma": 1.0 + 0.1 * jax.random.normal(ks[2], (hidden,), jnp.float32),
        "beta": 0.1 * jax.random.normal(ks[3], (hidden,), jnp.float32),
        "mean": 0.1 * jax.random.normal(ks[4], (hidden,), jnp.float32),
        "var": jnp.abs(jax.random.normal(ks[5], (hidden,), jnp.float32)) + 0.5,
        "w2": jax.random.uniform(ks[6], (hidden, out_classes), jnp.float32, -s2, s2),
        "b2": jax.random.uniform(ks[7], (out_classes,), jnp.float32, -s2, s2),
    }


if __name__ == "__main__":
    B, C, H, W = 2, 32, 7, 7          # module contract: input is (batch, in_channels, 7, 7)
    OUT_CLASSES = 10

    key = jax.random.PRNGKey(0)
    kx, kp = jax.random.split(key)
    x = jax.random.normal(kx, (B, C, H, W), jnp.float32)
    params = make_params(kp, C, OUT_CLASSES)

    ref_fp32 = _reference_fp32(x, params)

    # Primary path: GAP folded into fc1 (selected automatically for small C*HW).
    logits = jax.block_until_ready(recognition_classifier(x, params, mode="folded"))
    assert logits.shape == (B, OUT_CLASSES), logits.shape
    assert jnp.allclose(logits, _reference_same_precision(x, params, mode="folded"),
                        rtol=2e-3, atol=2e-3), "folded path: mismatch vs same-precision ref"
    assert jnp.allclose(logits, ref_fp32, rtol=5e-2, atol=5e-2), \
        "folded path: mismatch vs fp32 reference"

    # Fallback path (in-kernel GAP, used automatically for large C).
    logits2 = jax.block_until_ready(recognition_classifier(x, params, mode="pooled"))
    assert logits2.shape == (B, OUT_CLASSES), logits2.shape
    assert jnp.allclose(logits2, _reference_same_precision(x, params, mode="pooled"),
                        rtol=2e-3, atol=2e-3), "pooled path: mismatch vs same-precision ref"
    assert jnp.allclose(logits2, ref_fp32, rtol=5e-2, atol=5e-2), \
        "pooled path: mismatch vs fp32 reference"

    print("KERNEL_OK")
</pallas_src>

<mosaic_0001>
module attributes {stable_mosaic.version = 11 : i64} {
  func.func @_folded_gap_kernel(%arg0: i32, %arg1: memref<8x1568xbf16, #tpu.memory_space<vmem>>, %arg2: memref<1568x1024xbf16, #tpu.memory_space<vmem>>, %arg3: memref<1x1024xf32, #tpu.memory_space<vmem>>, %arg4: memref<1024x128xbf16, #tpu.memory_space<vmem>>, %arg5: memref<1x128xf32, #tpu.memory_space<vmem>>, %arg6: memref<8x128xf32, #tpu.memory_space<vmem>>) attributes {dimension_semantics = [#tpu.dimension_semantics<parallel>], iteration_bounds = array<i64: 1>, scalar_prefetch = 0 : i64, scratch_operands = 0 : i64, tpu.core_type = #tpu.core_type<tc>, window_params = [{transform_indices = @transform_0, window_bounds = array<i64: 8, 1568>}, {pipeline_mode = #tpu.pipeline_mode<synchronous>, transform_indices = @transform_1, window_bounds = array<i64: 1568, 1024>}, {pipeline_mode = #tpu.pipeline_mode<synchronous>, transform_indices = @transform_2, window_bounds = array<i64: 1, 1024>}, {pipeline_mode = #tpu.pipeline_mode<synchronous>, transform_indices = @transform_3, window_bounds = array<i64: 1024, 128>}, {pipeline_mode = #tpu.pipeline_mode<synchronous>, transform_indices = @transform_4, window_bounds = array<i64: 1, 128>}, {transform_indices = @transform_5, window_bounds = array<i64: 8, 128>}]} {
    %c0 = arith.constant 0 : index
    %c0_0 = arith.constant 0 : index
    %0 = vector.load %arg1[%c0, %c0_0] : memref<8x1568xbf16, #tpu.memory_space<vmem>>, vector<8x1568xbf16>
    %c0_1 = arith.constant 0 : index
    %c0_2 = arith.constant 0 : index
    %1 = vector.load %arg2[%c0_1, %c0_2] : memref<1568x1024xbf16, #tpu.memory_space<vmem>>, vector<1568x1024xbf16>
    %cst = arith.constant dense<0.000000e+00> : vector<8x1024xf32>
    %2 = tpu.matmul %0, %1, %cst {dimension_numbers = #tpu.dot_dimension_numbers<[1], [0], [0], [1], [0, 0, 1, 1], [], []>} : vector<8x1568xbf16>, vector<1568x1024xbf16>, vector<8x1024xf32> -> vector<8x1024xf32>
    %c0_3 = arith.constant 0 : index
    %c0_4 = arith.constant 0 : index
    %3 = vector.load %arg3[%c0_3, %c0_4] : memref<1x1024xf32, #tpu.memory_space<vmem>>, vector<1x1024xf32>
    %4 = vector.broadcast %3 : vector<1x1024xf32> to vector<8x1024xf32>
    %5 = arith.addf %2, %4 : vector<8x1024xf32>
    %cst_5 = arith.constant 0.000000e+00 : f32
    %6 = vector.broadcast %cst_5 : f32 to vector<8x1024xf32>
    %7 = arith.maximumf %5, %6 : vector<8x1024xf32>
    %8 = arith.truncf %7 : vector<8x1024xf32> to vector<8x1024xbf16>
    %c0_6 = arith.constant 0 : index
    %c0_7 = arith.constant 0 : index
    %9 = vector.load %arg4[%c0_6, %c0_7] : memref<1024x128xbf16, #tpu.memory_space<vmem>>, vector<1024x128xbf16>
    %cst_8 = arith.constant dense<0.000000e+00> : vector<8x128xf32>
    %10 = tpu.matmul %8, %9, %cst_8 {dimension_numbers = #tpu.dot_dimension_numbers<[1], [0], [0], [1], [0, 0, 1, 1], [], []>} : vector<8x1024xbf16>, vector<1024x128xbf16>, vector<8x128xf32> -> vector<8x128xf32>
    %c0_9 = arith.constant 0 : index
    %c0_10 = arith.constant 0 : index
    %11 = vector.load %arg5[%c0_9, %c0_10] : memref<1x128xf32, #tpu.memory_space<vmem>>, vector<1x128xf32>
    %12 = vector.broadcast %11 : vector<1x128xf32> to vector<8x128xf32>
    %13 = arith.addf %10, %12 : vector<8x128xf32>
    %c0_11 = arith.constant 0 : index
    %c0_12 = arith.constant 0 : index
    %14 = vector.load %arg6[%c0_11, %c0_12] : memref<8x128xf32, #tpu.memory_space<vmem>>, vector<8x128xf32>
    tpu.vector_store %arg6[%c0_11, %c0_12], %13 {strides = array<i32>} : memref<8x128xf32, #tpu.memory_space<vmem>>, vector<8x128xf32>,
    return
  }
  func.func @transform_0(%arg0: i32) -> (i32, i32) {
    %c0_i32 = arith.constant 0 : i32
    %c0_i32_0 = arith.constant 0 : i32
    return %arg0, %c0_i32 : i32, i32
  }
  func.func @transform_1(%arg0: i32) -> (i32, i32) {
    %c0_i32 = arith.constant 0 : i32
    %c0_i32_0 = arith.constant 0 : i32
    %c0_i32_1 = arith.constant 0 : i32
    return %c0_i32, %c0_i32_0 : i32, i32
  }
  func.func @transform_2(%arg0: i32) -> (i32, i32) {
    %c0_i32 = arith.constant 0 : i32
    %c0_i32_0 = arith.constant 0 : i32
    %c0_i32_1 = arith.constant 0 : i32
    return %c0_i32, %c0_i32_0 : i32, i32
  }
  func.func @transform_3(%arg0: i32) -> (i32, i32) {
    %c0_i32 = arith.constant 0 : i32
    %c0_i32_0 = arith.constant 0 : i32
    %c0_i32_1 = arith.constant 0 : i32
    return %c0_i32, %c0_i32_0 : i32, i32
  }
  func.func @transform_4(%arg0: i32) -> (i32, i32) {
    %c0_i32 = arith.constant 0 : i32
    %c0_i32_0 = arith.constant 0 : i32
    %c0_i32_1 = arith.constant 0 : i32
    return %c0_i32, %c0_i32_0 : i32, i32
  }
  func.func @transform_5(%arg0: i32) -> (i32, i32) {
    %c0_i32 = arith.constant 0 : i32
    %c0_i32_0 = arith.constant 0 : i32
    return %arg0, %c0_i32 : i32, i32
  }
}

</mosaic_0001>

<llo_original>
// kernel: tpu_custom_call.1
$region0: #{tpu_custom_call.1}
  #allocation0 [shape = 'u32[]', space=smem, size = 0x4, offset = 0x4, fixed_abs, tag = 'smem constant byte address 0x4 - core index']
  #allocation1 [shape = 'u32[144,128]{1,0:T(1,128)}', space=vmem, size = 0x12000, scoped, tag = 'internal scratch']
  %s0 = inlined_call_operand.hbm [shape: bf16[8,1568], index: 0, kind: input, shape index: {}]
  %s1 = inlined_call_operand.hbm [shape: bf16[1568,1024], index: 1, kind: input, shape index: {}]
  %s2 = inlined_call_operand.hbm [shape: f32[1,1024], index: 2, kind: input, shape index: {}]
  %s3 = inlined_call_operand.hbm [shape: bf16[1024,128], index: 3, kind: input, shape index: {}]
  %s4 = inlined_call_operand.hbm [shape: f32[1,128], index: 4, kind: input, shape index: {}]
  %s5 = inlined_call_operand.hbm [shape: f32[8,128], index: 5, kind: output, shape index: {}]
  %s6 = sld [smem:[#allocation0]]
  $region50: #{tpu_custom_call.1} parent=0
    _
  %s8 = ssub.s32 1, %s6
  %s9 = scalar_select 0, %s8, %s6
  $region1: #{tpu_custom_call.1} parent=0
    #allocation2 [shape = 'u8[26624]{0}', space=vmem, size = 0x6800, scoped, tag = 'input window, operand 0, single buffered']
    #allocation3 [shape = 's32[1]{0}', space=sflag, size = 0x4, scoped, tag = 'scoped memory for tpu_custom_call.1']
    #allocation4 [shape = 's32[1]{0}', space=sflag, size = 0x4, scoped, tag = 'scoped memory for tpu_custom_call.1']
    #allocation5 [shape = 'u8[3211264]{0}', space=vmem, size = 0x310000, scoped, tag = 'input window, operand 1, single buffered']
    #allocation6 [shape = 's32[1]{0}', space=sflag, size = 0x4, scoped, tag = 'scoped memory for tpu_custom_call.1']
    #allocation7 [shape = 'u8[4096]{0}', space=vmem, size = 0x1000, scoped, tag = 'input window, operand 2, single buffered']
    #allocation8 [shape = 'u8[262144]{0}', space=vmem, size = 0x40000, scoped, tag = 'input window, operand 3, single buffered']
    #allocation9 [shape = 's32[1]{0}', space=sflag, size = 0x4, scoped, tag = 'scoped memory for tpu_custom_call.1']
    #allocation10 [shape = 'u8[512]{0}', space=vmem, size = 0x400, scoped, tag = 'input window, operand 4, single buffered']
    #allocation11 [shape = 'u8[4096]{0}', space=vmem, size = 0x1000, scoped, tag = 'output window, operand 0, single buffered']
    %10 = vsyncpa [#allocation3], 0
    %11 = vsyncpa [#allocation6], 0
    %12 = vsyncpa [#allocation9], 0
    %13 = vsyncpa [#allocation4], 0
    // Predicated region
    $region2: #{tpu_custom_call.1} parent=1 // pred_check
      _
    $region3: #{tpu_custom_call.1} parent=1 // pred_check_branch
      %15 = sbr.rel (0) target = $region5
    $region4: #{tpu_custom_call.1} parent=1 // pred_region
      %s17 = ssub.s32 832, 832
      %18 = vsyncadd [#allocation3], %s17
      %s20 = sshll.u32 [#allocation2], 4
      %s21 = int_to_ptr.vmem [resolvable:$true] %s20
      %23 = dma.hbm_to_vmem [thread:$0]  %s0, 832, %s21, [#allocation3]
    $region5: #{tpu_custom_call.1} parent=1 // pred_fallthru
      _
    // Predicated region
    $region6: #{tpu_custom_call.1} parent=1 // pred_check
      _
    $region7: #{tpu_custom_call.1} parent=1 // pred_check_branch
      %25 = sbr.rel (0) target = $region9
    $region8: #{tpu_custom_call.1} parent=1 // pred_region
      %s27 = ssub.s32 100352, 100352
      %28 = vsyncadd [#allocation6], %s27
      %s29 = sshll.u32 [#allocation5], 4
      %s30 = int_to_ptr.vmem [resolvable:$true] %s29
      %35 = dma.hbm_to_vmem [thread:$0]  %s1, 100352, %s30, [#allocation6], 512, 512, 32
    $region9: #{tpu_custom_call.1} parent=1 // pred_fallthru
      _
    // Predicated region
    $region10: #{tpu_custom_call.1} parent=1 // pred_check
      _
    $region11: #{tpu_custom_call.1} parent=1 // pred_check_branch
      %37 = sbr.rel (0) target = $region13
    $region12: #{tpu_custom_call.1} parent=1 // pred_region
      %s39 = ssub.s32 128, 128
      %40 = vsyncadd [#allocation6], %s39
      %s42 = sshll.u32 [#allocation7], 4
      %s43 = int_to_ptr.vmem [resolvable:$true] %s42
      %45 = dma.hbm_to_vmem [thread:$0]  %s2, 128, %s43, [#allocation6]
    $region13: #{tpu_custom_call.1} parent=1 // pred_fallthru
      _
    // Predicated region
    $region14: #{tpu_custom_call.1} parent=1 // pred_check
      _
    $region15: #{tpu_custom_call.1} parent=1 // pred_check_branch
      %47 = sbr.rel (0) target = $region17
    $region16: #{tpu_custom_call.1} parent=1 // pred_region
      %s49 = ssub.s32 8192, 8192
      %50 = vsyncadd [#allocation9], %s49
      %s51 = sshll.u32 [#allocation8], 4
      %s52 = int_to_ptr.vmem [resolvable:$true] %s51
      %57 = dma.hbm_to_vmem [thread:$0]  %s3, 8192, %s52, [#allocation9], 64, 64, 4
    $region17: #{tpu_custom_call.1} parent=1 // pred_fallthru
      _
    // Predicated region
    $region18: #{tpu_custom_call.1} parent=1 // pred_check
      _
    $region19: #{tpu_custom_call.1} parent=1 // pred_check_branch
      %59 = sbr.rel (0) target = $region21
    $region20: #{tpu_custom_call.1} parent=1 // pred_region
      %s61 = ssub.s32 16, 16
      %62 = vsyncadd [#allocation9], %s61
      %s64 = sshll.u32 [#allocation10], 4
      %s65 = int_to_ptr.vmem [resolvable:$true] %s64
      %67 = dma.hbm_to_vmem [thread:$0]  %s4, 16, %s65, [#allocation9]
    $region21: #{tpu_custom_call.1} parent=1 // pred_fallthru
      _
    // Predicated region
    $region22: #{tpu_custom_call.1} parent=1 // pred_check
      _
    $region23: #{tpu_custom_call.1} parent=1 // pred_check_branch
      %69 = sbr.rel (0) target = $region25
    $region24: #{tpu_custom_call.1} parent=1 // pred_region
      %70 = dma.done [#allocation3], 832
    $region25: #{tpu_custom_call.1} parent=1 // pred_fallthru
      _
    // Predicated region
    $region26: #{tpu_custom_call.1} parent=1 // pred_check
      _
    $region27: #{tpu_custom_call.1} parent=1 // pred_check_branch
      %72 = sbr.rel (0) target = $region29
    $region28: #{tpu_custom_call.1} parent=1 // pred_region
      %73 = dma.done [#allocation6], 100352
    $region29: #{tpu_custom_call.1} parent=1 // pred_fallthru
      _
    // Predicated region
    $region30: #{tpu_custom_call.1} parent=1 // pred_check
      _
    $region31: #{tpu_custom_call.1} parent=1 // pred_check_branch
      %75 = sbr.rel (0) target = $region33
    $region32: #{tpu_custom_call.1} parent=1 // pred_region
      %76 = dma.done [#allocation6], 128
    $region33: #{tpu_custom_call.1} parent=1 // pred_fallthru
      _
    // Predicated region
    $region34: #{tpu_custom_call.1} parent=1 // pred_check
      _
    $region35: #{tpu_custom_call.1} parent=1 // pred_check_branch
      %78 = sbr.rel (0) target = $region37
    $region36: #{tpu_custom_call.1} parent=1 // pred_region
      %79 = dma.done [#allocation9], 8192
    $region37: #{tpu_custom_call.1} parent=1 // pred_fallthru
      _
    // Predicated region
    $region38: #{tpu_custom_call.1} parent=1 // pred_check
      _
    $region39: #{tpu_custom_call.1} parent=1 // pred_check_branch
      %81 = sbr.rel (0) target = $region41
    $region40: #{tpu_custom_call.1} parent=1 // pred_region
      %82 = dma.done [#allocation9], 16
    $region41: #{tpu_custom_call.1} parent=1 // pred_fallthru
      _
    %v84 = vld [vmem:[#allocation2] sm:$0xff]
    %v85 = vld [vmem:[#allocation2 + $0x8] sm:$0xff]
    %v86 = vld [vmem:[#allocation2 + $0x10] sm:$0xff]
    %v87 = vld [vmem:[#allocation2 + $0x18] sm:$0xff]
    %v88 = vld [vmem:[#allocation2 + $0x20] sm:$0xff]
    %v89 = vld [vmem:[#allocation2 + $0x28] sm:$0xff]
    %v90 = vld [vmem:[#allocation2 + $0x30] sm:$0xf]
    %v91 = vld [vmem:[#allocation5] sm:$0xff]
    %v92 = vld [vmem:[#allocation5 + $0x8] sm:$0xff]
    %v93 = vld [vmem:[#allocation5 + $0x10] sm:$0xff]
    %v94 = vld [vmem:[#allocation5 + $0x18] sm:$0xff]
    %v95 = vld [vmem:[#allocation5 + $0x20] sm:$0xff]
    %v96 = vld [vmem:[#allocation5 + $0x28] sm:$0xff]
    %v97 = vld [vmem:[#allocation5 + $0x30] sm:$0xff]
    %v98 = vld [vmem:[#allocation5 + $0x38] sm:$0xff]
    %v99 = vld [vmem:[#allocation5 + $0x40] sm:$0xff]
    %v100 = vld [vmem:[#allocation5 + $0x48] sm:$0xff]
    %v101 = vld [vmem:[#allocation5 + $0x50] sm:$0xff]
    %v102 = vld [vmem:[#allocation5 + $0x58] sm:$0xff]
    %v103 = vld [vmem:[#allocation5 + $0x60] sm:$0xff]
    %v104 = vld [vmem:[#allocation5 + $0x68] sm:$0xff]
    %v105 = vld [vmem:[#allocation5 + $0x70] sm:$0xff]
    %v106 = vld [vmem:[#allocation5 + $0x78] sm:$0xff]
    %v107 = vld [vmem:[#allocation5 + $0x80] sm:$0xff]
    %v108 = vld [vmem:[#allocation5 + $0x88] sm:$0xff]
    %v109 = vld [vmem:[#allocation5 + $0x90] sm:$0xff]
    %v110 = vld [vmem:[#allocation5 + $0x98] sm:$0xff]
    %v111 = vld [vmem:[#allocation5 + $0xa0] sm:$0xff]
    %v112 = vld [vmem:[#allocation5 + $0xa8] sm:$0xff]
    %v113 = vld [vmem:[#allocation5 + $0xb0] sm:$0xff]
    %v114 = vld [vmem:[#allocation5 + $0xb8] sm:$0xff]
    %v115 = vld [vmem:[#allocation5 + $0xc0] sm:$0xff]
    %v116 = vld [vmem:[#allocation5 + $0xc8] sm:$0xff]
    %v117 = vld [vmem:[#allocation5 + $0xd0] sm:$0xff]
    %v118 = vld [vmem:[#allocation5 + $0xd8] sm:$0xff]
    %v119 = vld [vmem:[#allocation5 + $0xe0] sm:$0xff]
    %v120 = vld [vmem:[#allocation5 + $0xe8] sm:$0xff]
    %v121 = vld [vmem:[#allocation5 + $0xf0] sm:$0xff]
    %v122 = vld [vmem:[#allocation5 + $0xf8] sm:$0xff]
    %v123 = vld [vmem:[#allocation5 + $0x100] sm:$0xff]
    %v124 = vld [vmem:[#allocation5 + $0x108] sm:$0xff]
    %v125 = vld [vmem:[#allocation5 + $0x110] sm:$0xff]
    %v126 = vld [vmem:[#allocation5 + $0x118] sm:$0xff]
    %v127 = vld [vmem:[#allocation5 + $0x120] sm:$0xff]
    %v128 = vld [vmem:[#allocation5 + $0x128] sm:$0xff]
    %v129 = vld [vmem:[#allocation5 + $0x130] sm:$0xff]
    %v130 = vld [vmem:[#allocation5 + $0x138] sm:$0xff]
    %v131 = vld [vmem:[#allocation5 + $0x140] sm:$0xff]
    %v132 = vld [vmem:[#allocation5 + $0x148] sm:$0xff]
    %v133 = vld [vmem:[#allocation5 + $0x150] sm:$0xff]
    %v134 = vld [vmem:[#allocation5 + $0x158] sm:$0xff]
    %v135 = vld [vmem:[#allocation5 + $0x160] sm:$0xff]
    %v136 = vld [vmem:[#allocation5 + $0x168] sm:$0xff]
    %v137 = vld [vmem:[#allocation5 + $0x170] sm:$0xff]
    %v138 = vld [vmem:[#allocation5 + $0x178] sm:$0xff]
    %v139 = vld [vmem:[#allocation5 + $0x180] sm:$0xff]
    %v140 = vld [vmem:[#allocation5 + $0x188] sm:$0xff]
    %v141 = vld [vmem:[#allocation5 + $0x190] sm:$0xff]
    %v142 = vld [vmem:[#allocation5 + $0x198] sm:$0xff]
    %v143 = vld [vmem:[#allocation5 + $0x1a0] sm:$0xff]
    %v144 = vld [vmem:[#allocation5 + $0x1a8] sm:$0xff]
    %v145 = vld [vmem:[#allocation5 + $0x1b0] sm:$0xff]
    %v146 = vld [vmem:[#allocation5 + $0x1b8] sm:$0xff]
    %v147 = vld [vmem:[#allocation5 + $0x1c0] sm:$0xff]
    %v148 = vld [vmem:[#allocation5 + $0x1c8] sm:$0xff]
    %v149 = vld [vmem:[#allocation5 + $0x1d0] sm:$0xff]
    %v150 = vld [vmem:[#allocation5 + $0x1d8] sm:$0xff]
    %v151 = vld [vmem:[#allocation5 + $0x1e0] sm:$0xff]
    %v152 = vld [vmem:[#allocation5 + $0x1e8] sm:$0xff]
    %v153 = vld [vmem:[#allocation5 + $0x1f0] sm:$0xff]
    %v154 = vld [vmem:[#allocation5 + $0x1f8] sm:$0xff]
    %v155 = vld [vmem:[#allocation5 + $0x200] sm:$0xff]
    %v156 = vld [vmem:[#allocation5 + $0x208] sm:$0xff]
    %v157 = vld [vmem:[#allocation5 + $0x210] sm:$0xff]
    %v158 = vld [vmem:[#allocation5 + $0x218] sm:$0xff]
    %v159 = vld [vmem:[#allocation5 + $0x220] sm:$0xff]
    %v160 = vld [vmem:[#allocation5 + $0x228] sm:$0xff]
    %v161 = vld [vmem:[#allocation5 + $0x230] sm:$0xff]
    %v162 = vld [vmem:[#allocation5 + $0x238] sm:$0xff]
    %v163 = vld [vmem:[#allocation5 + $0x240] sm:$0xff]
    %v164 = vld [vmem:[#allocation5 + $0x248] sm:$0xff]
    %v165 = vld [vmem:[#allocation5 + $0x250] sm:$0xff]
    %v166 = vld [vmem:[#allocation5 + $0x258] sm:$0xff]
    %v167 = vld [vmem:[#allocation5 + $0x260] sm:$0xff]
    %v168 = vld [vmem:[#allocation5 + $0x268] sm:$0xff]
    %v169 = vld [vmem:[#allocation5 + $0x270] sm:$0xff]
    %v170 = vld [vmem:[#allocation5 + $0x278] sm:$0xff]
    %v171 = vld [vmem:[#allocation5 + $0x280] sm:$0xff]
    %v172 = vld [vmem:[#allocation5 + $0x288] sm:$0xff]
    %v173 = vld [vmem:[#allocation5 + $0x290] sm:$0xff]
    %v174 = vld [vmem:[#allocation5 + $0x298] sm:$0xff]
    %v175 = vld [vmem:[#allocation5 + $0x2a0] sm:$0xff]
    %v176 = vld [vmem:[#allocation5 + $0x2a8] sm:$0xff]
    %v177 = vld [vmem:[#allocation5 + $0x2b0] sm:$0xff]
    %v178 = vld [vmem:[#allocation5 + $0x2b8] sm:$0xff]
    %v179 = vld [vmem:[#allocation5 + $0x2c0] sm:$0xff]
    %v180 = vld [vmem:[#allocation5 + $0x2c8] sm:$0xff]
    %v181 = vld [vmem:[#allocation5 + $0x2d0] sm:$0xff]
    %v182 = vld [vmem:[#allocation5 + $0x2d8] sm:$0xff]
    %v183 = vld [vmem:[#allocation5 + $0x2e0] sm:$0xff]
    %v184 = vld [vmem:[#allocation5 + $0x2e8] sm:$0xff]
    %v185 = vld [vmem:[#allocation5 + $0x2f0] sm:$0xff]
    %v186 = vld [vmem:[#allocation5 + $0x2f8] sm:$0xff]
    %v187 = vld [vmem:[#allocation5 + $0x300] sm:$0xff]
    %v188 = vld [vmem:[#allocation5 + $0x308] sm:$0xff]
    %v189 = vld [vmem:[#allocation5 + $0x310] sm:$0xff]
    %v190 = vld [vmem:[#allocation5 + $0x318] sm:$0xff]
    %v191 = vld [vmem:[#allocation5 + $0x320] sm:$0xff]
    %v192 = vld [vmem:[#allocation5 + $0x328] sm:$0xff]
    %v193 = vld [vmem:[#allocation5 + $0x330] sm:$0xff]
    %v194 = vld [vmem:[#allocation5 + $0x338] sm:$0xff]
    %v195 = vld [vmem:[#allocation5 + $0x340] sm:$0xff]
    %v196 = vld [vmem:[#allocation5 + $0x348] sm:$0xff]
    %v197 = vld [vmem:[#allocation5 + $0x350] sm:$0xff]
    %v198 = vld [vmem:[#allocation5 + $0x358] sm:$0xff]
    %v199 = vld [vmem:[#allocation5 + $0x360] sm:$0xff]
    %v200 = vld [vmem:[#allocation5 + $0x368] sm:$0xff]
    %v201 = vld [vmem:[#allocation5 + $0x370] sm:$0xff]
    %v202 = vld [vmem:[#allocation5 + $0x378] sm:$0xff]
    %v203 = vld [vmem:[#allocation5 + $0x380] sm:$0xff]
    %v204 = vld [vmem:[#allocation5 + $0x388] sm:$0xff]
    %v205 = vld [vmem:[#allocation5 + $0x390] sm:$0xff]
    %v206 = vld [vmem:[#allocation5 + $0x398] sm:$0xff]
    %v207 = vld [vmem:[#allocation5 + $0x3a0] sm:$0xff]
    %v208 = vld [vmem:[#allocation5 + $0x3a8] sm:$0xff]
    %v209 = vld [vmem:[#allocation5 + $0x3b0] sm:$0xff]
    %v210 = vld [vmem:[#allocation5 + $0x3b8] sm:$0xff]
    %v211 = vld [vmem:[#allocation5 + $0x3c0] sm:$0xff]
    %v212 = vld [vmem:[#allocation5 + $0x3c8] sm:$0xff]
    %v213 = vld [vmem:[#allocation5 + $0x3d0] sm:$0xff]
    %v214 = vld [vmem:[#allocation5 + $0x3d8] sm:$0xff]
    %v215 = vld [vmem:[#allocation5 + $0x3e0] sm:$0xff]
    %v216 = vld [vmem:[#allocation5 + $0x3e8] sm:$0xff]
    %v217 = vld [vmem:[#allocation5 + $0x3f0] sm:$0xff]
    %v218 = vld [vmem:[#allocation5 + $0x3f8] sm:$0xff]
    %v219 = vld [vmem:[#allocation5 + $0x400] sm:$0xff]
    %v220 = vld [vmem:[#allocation5 + $0x408] sm:$0xff]
    %v221 = vld [vmem:[#allocation5 + $0x410] sm:$0xff]
    %v222 = vld [vmem:[#allocation5 + $0x418] sm:$0xff]
    %v223 = vld [vmem:[#allocation5 + $0x420] sm:$0xff]
    %v224 = vld [vmem:[#allocation5 + $0x428] sm:$0xff]
    %v225 = vld [vmem:[#allocation5 + $0x430] sm:$0xff]
    %v226 = vld [vmem:[#allocation5 + $0x438] sm:$0xff]
    %v227 = vld [vmem:[#allocation5 + $0x440] sm:$0xff]
    %v228 = vld [vmem:[#allocation5 + $0x448] sm:$0xff]
    %v229 = vld [vmem:[#allocation5 + $0x450] sm:$0xff]
    %v230 = vld [vmem:[#allocation5 + $0x458] sm:$0xff]
    %v231 = vld [vmem:[#allocation5 + $0x460] sm:$0xff]
    %v232 = vld [vmem:[#allocation5 + $0x468] sm:$0xff]
    %v233 = vld [vmem:[#allocation5 + $0x470] sm:$0xff]
    %v234 = vld [vmem:[#allocation5 + $0x478] sm:$0xff]
    %v235 = vld [vmem:[#allocation5 + $0x480] sm:$0xff]
    %v236 = vld [vmem:[#allocation5 + $0x488] sm:$0xff]
    %v237 = vld [vmem:[#allocation5 + $0x490] sm:$0xff]
    %v238 = vld [vmem:[#allocation5 + $0x498] sm:$0xff]
    %v239 = vld [vmem:[#allocation5 + $0x4a0] sm:$0xff]
    %v240 = vld [vmem:[#allocation5 + $0x4a8] sm:$0xff]
    %v241 = vld [vmem:[#allocation5 + $0x4b0] sm:$0xff]
    %v242 = vld [vmem:[#allocation5 + $0x4b8] sm:$0xff]
    %v243 = vld [vmem:[#allocation5 + $0x4c0] sm:$0xff]
    %v244 = vld [vmem:[#allocation5 + $0x4c8] sm:$0xff]
    %v245 = vld [vmem:[#allocation5 + $0x4d0] sm:$0xff]
    %v246 = vld [vmem:[#allocation5 + $0x4d8] sm:$0xff]
    %v247 = vld [vmem:[#allocation5 + $0x4e0] sm:$0xff]
    %v248 = vld [vmem:[#allocation5 + $0x4e8] sm:$0xff]
    %v249 = vld [vmem:[#allocation5 + $0x4f0] sm:$0xff]
    %v250 = vld [vmem:[#allocation5 + $0x4f8] sm:$0xff]
    %v251 = vld [vmem:[#allocation5 + $0x500] sm:$0xff]
    %v252 = vld [vmem:[#allocation5 + $0x508] sm:$0xff]
    %v253 = vld [vmem:[#allocation5 + $0x510] sm:$0xff]
    %v254 = vld [vmem:[#allocation5 + $0x518] sm:$0xff]
    %v255 = vld [vmem:[#allocation5 + $0x520] sm:$0xff]
    %v256 = vld [vmem:[#allocation5 + $0x528] sm:$0xff]
    %v257 = vld [vmem:[#allocation5 + $0x530] sm:$0xff]
    %v258 = vld [vmem:[#allocation5 + $0x538] sm:$0xff]
    %v259 = vld [vmem:[#allocation5 + $0x540] sm:$0xff]
    %v260 = vld [vmem:[#allocation5 + $0x548] sm:$0xff]
    %v261 = vld [vmem:[#allocation5 + $0x550] sm:$0xff]
    %v262 = vld [vmem:[#allocation5 + $0x558] sm:$0xff]
    %v263 = vld [vmem:[#allocation5 + $0x560] sm:$0xff]
    %v264 = vld [vmem:[#allocation5 + $0x568] sm:$0xff]
    %v265 = vld [vmem:[#allocation5 + $0x570] sm:$0xff]
    %v266 = vld [vmem:[#allocation5 + $0x578] sm:$0xff]
    %v267 = vld [vmem:[#allocation5 + $0x580] sm:$0xff]
    %v268 = vld [vmem:[#allocation5 + $0x588] sm:$0xff]
    %v269 = vld [vmem:[#allocation5 + $0x590] sm:$0xff]
    %v270 = vld [vmem:[#allocation5 + $0x598] sm:$0xff]
    %v271 = vld [vmem:[#allocation5 + $0x5a0] sm:$0xff]
    %v272 = vld [vmem:[#allocation5 + $0x5a8] sm:$0xff]
    %v273 = vld [vmem:[#allocation5 + $0x5b0] sm:$0xff]
    %v274 = vld [vmem:[#allocation5 + $0x5b8] sm:$0xff]
    %v275 = vld [vmem:[#allocation5 + $0x5c0] sm:$0xff]
    %v276 = vld [vmem:[#allocation5 + $0x5c8] sm:$0xff]
    %v277 = vld [vmem:[#allocation5 + $0x5d0] sm:$0xff]
    %v278 = vld [vmem:[#allocation5 + $0x5d8] sm:$0xff]
    %v279 = vld [vmem:[#allocation5 + $0x5e0] sm:$0xff]
    %v280 = vld [vmem:[#allocation5 + $0x5e8] sm:$0xff]
    %v281 = vld [vmem:[#allocation5 + $0x5f0] sm:$0xff]
    %v282 = vld [vmem:[#allocation5 + $0x5f8] sm:$0xff]
    %v283 = vld [vmem:[#allocation5 + $0x600] sm:$0xff]
    %v284 = vld [vmem:[#allocation5 + $0x608] sm:$0xff]
    %v285 = vld [vmem:[#allocation5 + $0x610] sm:$0xff]
    %v286 = vld [vmem:[#allocation5 + $0x618] sm:$0xff]
    %v287 = vld [vmem:[#allocation5 + $0x620] sm:$0xff]
    %v288 = vld [vmem:[#allocation5 + $0x628] sm:$0xff]
    %v289 = vld [vmem:[#allocation5 + $0x630] sm:$0xff]
    %v290 = vld [vmem:[#allocation5 + $0x638] sm:$0xff]
    %v291 = vld [vmem:[#allocation5 + $0x640] sm:$0xff]
    %v292 = vld [vmem:[#allocation5 + $0x648] sm:$0xff]
    %v293 = vld [vmem:[#allocation5 + $0x650] sm:$0xff]
    %v294 = vld [vmem:[#allocation5 + $0x658] sm:$0xff]
    %v295 = vld [vmem:[#allocation5 + $0x660] sm:$0xff]
    %v296 = vld [vmem:[#allocation5 + $0x668] sm:$0xff]
    %v297 = vld [vmem:[#allocation5 + $0x670] sm:$0xff]
    %v298 = vld [vmem:[#allocation5 + $0x678] sm:$0xff]
    %v299 = vld [vmem:[#allocation5 + $0x680] sm:$0xff]
    %v300 = vld [vmem:[#allocation5 + $0x688] sm:$0xff]
    %v301 = vld [vmem:[#allocation5 + $0x690] sm:$0xff]
    %v302 = vld [vmem:[#allocation5 + $0x698] sm:$0xff]
    %v303 = vld [vmem:[#allocation5 + $0x6a0] sm:$0xff]
    %v304 = vld [vmem:[#allocation5 + $0x6a8] sm:$0xff]
    %v305 = vld [vmem:[#allocation5 + $0x6b0] sm:$0xff]
    %v306 = vld [vmem:[#allocation5 + $0x6b8] sm:$0xff]
    %v307 = vld [vmem:[#allocation5 + $0x6c0] sm:$0xff]
    %v308 = vld [vmem:[#allocation5 + $0x6c8] sm:$0xff]
    %v309 = vld [vmem:[#allocation5 + $0x6d0] sm:$0xff]
    %v310 = vld [vmem:[#allocation5 + $0x6d8] sm:$0xff]
    %v311 = vld [vmem:[#allocation5 + $0x6e0] sm:$0xff]
    %v312 = vld [vmem:[#allocation5 + $0x6e8] sm:$0xff]
    %v313 = vld [vmem:[#allocation5 + $0x6f0] sm:$0xff]
    %v314 = vld [vmem:[#allocation5 + $0x6f8] sm:$0xff]
    %v315 = vld [vmem:[#allocation5 + $0x700] sm:$0xff]
    %v316 = vld [vmem:[#allocation5 + $0x708] sm:$0xff]
    %v317 = vld [vmem:[#allocation5 + $0x710] sm:$0xff]
    %v318 = vld [vmem:[#allocation5 + $0x718] sm:$0xff]
    %v319 = vld [vmem:[#allocation5 + $0x720] sm:$0xff]
    %v320 = vld [vmem:[#allocation5 + $0x728] sm:$0xff]
    %v321 = vld [vmem:[#allocation5 + $0x730] sm:$0xff]
    %v322 = vld [vmem:[#allocation5 + $0x738] sm:$0xff]
    %v323 = vld [vmem:[#allocation5 + $0x740] sm:$0xff]
    %v324 = vld [vmem:[#allocation5 + $0x748] sm:$0xff]
    %v325 = vld [vmem:[#allocation5 + $0x750] sm:$0xff]
    %v326 = vld [vmem:[#allocation5 + $0x758] sm:$0xff]
    %v327 = vld [vmem:[#allocation5 + $0x760] sm:$0xff]
    %v328 = vld [vmem:[#allocation5 + $0x768] sm:$0xff]
    %v329 = vld [vmem:[#allocation5 + $0x770] sm:$0xff]
    %v330 = vld [vmem:[#allocation5 + $0x778] sm:$0xff]
    %v331 = vld [vmem:[#allocation5 + $0x780] sm:$0xff]
    %v332 = vld [vmem:[#allocation5 + $0x788] sm:$0xff]
    %v333 = vld [vmem:[#allocation5 + $0x790] sm:$0xff]
    %v334 = vld [vmem:[#allocation5 + $0x798] sm:$0xff]
    %v335 = vld [vmem:[#allocation5 + $0x7a0] sm:$0xff]
    %v336 = vld [vmem:[#allocation5 + $0x7a8] sm:$0xff]
    %v337 = vld [vmem:[#allocation5 + $0x7b0] sm:$0xff]
    %v338 = vld [vmem:[#allocation5 + $0x7b8] sm:$0xff]
    %v339 = vld [vmem:[#allocation5 + $0x7c0] sm:$0xff]
    %v340 = vld [vmem:[#allocation5 + $0x7c8] sm:$0xff]
    %v341 = vld [vmem:[#allocation5 + $0x7d0] sm:$0xff]
    %v342 = vld [vmem:[#allocation5 + $0x7d8] sm:$0xff]
    %v343 = vld [vmem:[#allocation5 + $0x7e0] sm:$0xff]
    %v344 = vld [vmem:[#allocation5 + $0x7e8] sm:$0xff]
    %v345 = vld [vmem:[#allocation5 + $0x7f0] sm:$0xff]
    %v346 = vld [vmem:[#allocation5 + $0x7f8] sm:$0xff]
    %v347 = vld [vmem:[#allocation5 + $0x800] sm:$0xff]
    %v348 = vld [vmem:[#allocation5 + $0x808] sm:$0xff]
    %v349 = vld [vmem:[#allocation5 + $0x810] sm:$0xff]
    %v350 = vld [vmem:[#allocation5 + $0x818] sm:$0xff]
    %v351 = vld [vmem:[#allocation5 + $0x820] sm:$0xff]
    %v352 = vld [vmem:[#allocation5 + $0x828] sm:$0xff]
    %v353 = vld [vmem:[#allocation5 + $0x830] sm:$0xff]
    %v354 = vld [vmem:[#allocation5 + $0x838] sm:$0xff]
    %v355 = vld [vmem:[#allocation5 + $0x840] sm:$0xff]
    %v356 = vld [vmem:[#allocation5 + $0x848] sm:$0xff]
    %v357 = vld [vmem:[#allocation5 + $0x850] sm:$0xff]
    %v358 = vld [vmem:[#allocation5 + $0x858] sm:$0xff]
    %v359 = vld [vmem:[#allocation5 + $0x860] sm:$0xff]
    %v360 = vld [vmem:[#allocation5 + $0x868] sm:$0xff]
    %v361 = vld [vmem:[#allocation5 + $0x870] sm:$0xff]
    %v362 = vld [vmem:[#allocation5 + $0x878] sm:$0xff]
    %v363 = vld [vmem:[#allocation5 + $0x880] sm:$0xff]
    %v364 = vld [vmem:[#allocation5 + $0x888] sm:$0xff]
    %v365 = vld [vmem:[#allocation5 + $0x890] sm:$0xff]
    %v366 = vld [vmem:[#allocation5 + $0x898] sm:$0xff]
    %v367 = vld [vmem:[#allocation5 + $0x8a0] sm:$0xff]
    %v368 = vld [vmem:[#allocation5 + $0x8a8] sm:$0xff]
    %v369 = vld [vmem:[#allocation5 + $0x8b0] sm:$0xff]
    %v370 = vld [vmem:[#allocation5 + $0x8b8] sm:$0xff]
    %v371 = vld [vmem:[#allocation5 + $0x8c0] sm:$0xff]
    %v372 = vld [vmem:[#allocation5 + $0x8c8] sm:$0xff]
    %v373 = vld [vmem:[#allocation5 + $0x8d0] sm:$0xff]
    %v374 = vld [vmem:[#allocation5 + $0x8d8] sm:$0xff]
    %v375 = vld [vmem:[#allocation5 + $0x8e0] sm:$0xff]
    %v376 = vld [vmem:[#allocation5 + $0x8e8] sm:$0xff]
    %v377 = vld [vmem:[#allocation5 + $0x8f0] sm:$0xff]
    %v378 = vld [vmem:[#allocation5 + $0x8f8] sm:$0xff]
    %v379 = vld [vmem:[#allocation5 + $0x900] sm:$0xff]
    %v380 = vld [vmem:[#allocation5 + $0x908] sm:$0xff]
    %v381 = vld [vmem:[#allocation5 + $0x910] sm:$0xff]
    %v382 = vld [vmem:[#allocation5 + $0x918] sm:$0xff]
    %v383 = vld [vmem:[#allocation5 + $0x920] sm:$0xff]
    %v384 = vld [vmem:[#allocation5 + $0x928] sm:$0xff]
    %v385 = vld [vmem:[#allocation5 + $0x930] sm:$0xff]
    %v386 = vld [vmem:[#allocation5 + $0x938] sm:$0xff]
    %v387 = vld [vmem:[#allocation5 + $0x940] sm:$0xff]
    %v388 = vld [vmem:[#allocation5 + $0x948] sm:$0xff]
    %v389 = vld [vmem:[#allocation5 + $0x950] sm:$0xff]
    %v390 = vld [vmem:[#allocation5 + $0x958] sm:$0xff]
    %v391 = vld [vmem:[#allocation5 + $0x960] sm:$0xff]
    %v392 = vld [vmem:[#allocation5 + $0x968] sm:$0xff]
    %v393 = vld [vmem:[#allocation5 + $0x970] sm:$0xff]
    %v394 = vld [vmem:[#allocation5 + $0x978] sm:$0xff]
    %v395 = vld [vmem:[#allocation5 + $0x980] sm:$0xff]
    %v396 = vld [vmem:[#allocation5 + $0x988] sm:$0xff]
    %v397 = vld [vmem:[#allocation5 + $0x990] sm:$0xff]
    %v398 = vld [vmem:[#allocation5 + $0x998] sm:$0xff]
    %v399 = vld [vmem:[#allocation5 + $0x9a0] sm:$0xff]
    %v400 = vld [vmem:[#allocation5 + $0x9a8] sm:$0xff]
    %v401 = vld [vmem:[#allocation5 + $0x9b0] sm:$0xff]
    %v402 = vld [vmem:[#allocation5 + $0x9b8] sm:$0xff]
    %v403 = vld [vmem:[#allocation5 + $0x9c0] sm:$0xff]
    %v404 = vld [vmem:[#allocation5 + $0x9c8] sm:$0xff]
    %v405 = vld [vmem:[#allocation5 + $0x9d0] sm:$0xff]
    %v406 = vld [vmem:[#allocation5 + $0x9d8] sm:$0xff]
    %v407 = vld [vmem:[#allocation5 + $0x9e0] sm:$0xff]
    %v408 = vld [vmem:[#allocation5 + $0x9e8] sm:$0xff]
    %v409 = vld [vmem:[#allocation5 + $0x9f0] sm:$0xff]
    %v410 = vld [vmem:[#allocation5 + $0x9f8] sm:$0xff]
    %v411 = vld [vmem:[#allocation5 + $0xa00] sm:$0xff]
    %v412 = vld [vmem:[#allocation5 + $0xa08] sm:$0xff]
    %v413 = vld [vmem:[#allocation5 + $0xa10] sm:$0xff]
    %v414 = vld [vmem:[#allocation5 + $0xa18] sm:$0xff]
    %v415 = vld [vmem:[#allocation5 + $0xa20] sm:$0xff]
    %v416 = vld [vmem:[#allocation5 + $0xa28] sm:$0xff]
    %v417 = vld [vmem:[#allocation5 + $0xa30] sm:$0xff]
    %v418 = vld [vmem:[#allocation5 + $0xa38] sm:$0xff]
    %v419 = vld [vmem:[#allocation5 + $0xa40] sm:$0xff]
    %v420 = vld [vmem:[#allocation5 + $0xa48] sm:$0xff]
    %v421 = vld [vmem:[#allocation5 + $0xa50] sm:$0xff]
    %v422 = vld [vmem:[#allocation5 + $0xa58] sm:$0xff]
    %v423 = vld [vmem:[#allocation5 + $0xa60] sm:$0xff]
    %v424 = vld [vmem:[#allocation5 + $0xa68] sm:$0xff]
    %v425 = vld [vmem:[#allocation5 + $0xa70] sm:$0xff]
    %v426 = vld [vmem:[#allocation5 + $0xa78] sm:$0xff]
    %v427 = vld [vmem:[#allocation5 + $0xa80] sm:$0xff]
    %v428 = vld [vmem:[#allocation5 + $0xa88] sm:$0xff]
    %v429 = vld [vmem:[#allocation5 + $0xa90] sm:$0xff]
    %v430 = vld [vmem:[#allocation5 + $0xa98] sm:$0xff]
    %v431 = vld [vmem:[#allocation5 + $0xaa0] sm:$0xff]
    %v432 = vld [vmem:[#allocation5 + $0xaa8] sm:$0xff]
    %v433 = vld [vmem:[#allocation5 + $0xab0] sm:$0xff]
    %v434 = vld [vmem:[#allocation5 + $0xab8] sm:$0xff]
    %v435 = vld [vmem:[#allocation5 + $0xac0] sm:$0xff]
    %v436 = vld [vmem:[#allocation5 + $0xac8] sm:$0xff]
    %v437 = vld [vmem:[#allocation5 + $0xad0] sm:$0xff]
    %v438 = vld [vmem:[#allocation5 + $0xad8] sm:$0xff]
    %v439 = vld [vmem:[#allocation5 + $0xae0] sm:$0xff]
    %v440 = vld [vmem:[#allocation5 + $0xae8] sm:$0xff]
    %v441 = vld [vmem:[#allocation5 + $0xaf0] sm:$0xff]
    %v442 = vld [vmem:[#allocation5 + $0xaf8] sm:$0xff]
    %v443 = vld [vmem:[#allocation5 + $0xb00] sm:$0xff]
    %v444 = vld [vmem:[#allocation5 + $0xb08] sm:$0xff]
    %v445 = vld [vmem:[#allocation5 + $0xb10] sm:$0xff]
    %v446 = vld [vmem:[#allocation5 + $0xb18] sm:$0xff]
    %v447 = vld [vmem:[#allocation5 + $0xb20] sm:$0xff]
    %v448 = vld [vmem:[#allocation5 + $0xb28] sm:$0xff]
    %v449 = vld [vmem:[#allocation5 + $0xb30] sm:$0xff]
    %v450 = vld [vmem:[#allocation5 + $0xb38] sm:$0xff]
    %v451 = vld [vmem:[#allocation5 + $0xb40] sm:$0xff]
    %v452 = vld [vmem:[#allocation5 + $0xb48] sm:$0xff]
    %v453 = vld [vmem:[#allocation5 + $0xb50] sm:$0xff]
    %v454 = vld [vmem:[#allocation5 + $0xb58] sm:$0xff]
    %v455 = vld [vmem:[#allocation5 + $0xb60] sm:$0xff]
    %v456 = vld [vmem:[#allocation5 + $0xb68] sm:$0xff]
    %v457 = vld [vmem:[#allocation5 + $0xb70] sm:$0xff]
    %v458 = vld [vmem:[#allocation5 + $0xb78] sm:$0xff]
    %v459 = vld [vmem:[#allocation5 + $0xb80] sm:$0xff]
    %v460 = vld [vmem:[#allocation5 + $0xb88] sm:$0xff]
    %v461 = vld [vmem:[#allocation5 + $0xb90] sm:$0xff]
    %v462 = vld [vmem:[#allocation5 + $0xb98] sm:$0xff]
    %v463 = vld [vmem:[#allocation5 + $0xba0] sm:$0xff]
    %v464 = vld [vmem:[#allocation5 + $0xba8] sm:$0xff]
    %v465 = vld [vmem:[#allocation5 + $0xbb0] sm:$0xff]
    %v466 = vld [vmem:[#allocation5 + $0xbb8] sm:$0xff]
    %v467 = vld [vmem:[#allocation5 + $0xbc0] sm:$0xff]
    %v468 = vld [vmem:[#allocation5 + $0xbc8] sm:$0xff]
    %v469 = vld [vmem:[#allocation5 + $0xbd0] sm:$0xff]
    %v470 = vld [vmem:[#allocation5 + $0xbd8] sm:$0xff]
    %v471 = vld [vmem:[#allocation5 + $0xbe0] sm:$0xff]
    %v472 = vld [vmem:[#allocation5 + $0xbe8] sm:$0xff]
    %v473 = vld [vmem:[#allocation5 + $0xbf0] sm:$0xff]
    %v474 = vld [vmem:[#allocation5 + $0xbf8] sm:$0xff]
    %v475 = vld [vmem:[#allocation5 + $0xc00] sm:$0xff]
    %v476 = vld [vmem:[#allocation5 + $0xc08] sm:$0xff]
    %v477 = vld [vmem:[#allocation5 + $0xc10] sm:$0xff]
    %v478 = vld [vmem:[#allocation5 + $0xc18] sm:$0xff]
    %v479 = vld [vmem:[#allocation5 + $0xc20] sm:$0xff]
    %v480 = vld [vmem:[#allocation5 + $0xc28] sm:$0xff]
    %v481 = vld [vmem:[#allocation5 + $0xc30] sm:$0xff]
    %v482 = vld [vmem:[#allocation5 + $0xc38] sm:$0xff]
    %v483 = vld [vmem:[#allocation5 + $0xc40] sm:$0xff]
    %v484 = vld [vmem:[#allocation5 + $0xc48] sm:$0xff]
    %v485 = vld [vmem:[#allocation5 + $0xc50] sm:$0xff]
    %v486 = vld [vmem:[#allocation5 + $0xc58] sm:$0xff]
    %v487 = vld [vmem:[#allocation5 + $0xc60] sm:$0xff]
    %v488 = vld [vmem:[#allocation5 + $0xc68] sm:$0xff]
    %v489 = vld [vmem:[#allocation5 + $0xc70] sm:$0xff]
    %v490 = vld [vmem:[#allocation5 + $0xc78] sm:$0xff]
    %v491 = vld [vmem:[#allocation5 + $0xc80] sm:$0xff]
    %v492 = vld [vmem:[#allocation5 + $0xc88] sm:$0xff]
    %v493 = vld [vmem:[#allocation5 + $0xc90] sm:$0xff]
    %v494 = vld [vmem:[#allocation5 + $0xc98] sm:$0xff]
    %v495 = vld [vmem:[#allocation5 + $0xca0] sm:$0xff]
    %v496 = vld [vmem:[#allocation5 + $0xca8] sm:$0xff]
    %v497 = vld [vmem:[#allocation5 + $0xcb0] sm:$0xff]
    %v498 = vld [vmem:[#allocation5 + $0xcb8] sm:$0xff]
    %v499 = vld [vmem:[#allocation5 + $0xcc0] sm:$0xff]
    %v500 = vld [vmem:[#allocation5 + $0xcc8] sm:$0xff]
    %v501 = vld [vmem:[#allocation5 + $0xcd0] sm:$0xff]
    %v502 = vld [vmem:[#allocation5 + $0xcd8] sm:$0xff]
    %v503 = vld [vmem:[#allocation5 + $0xce0] sm:$0xff]
    %v504 = vld [vmem:[#allocation5 + $0xce8] sm:$0xff]
    %v505 = vld [vmem:[#allocation5 + $0xcf0] sm:$0xff]
    %v506 = vld [vmem:[#allocation5 + $0xcf8] sm:$0xff]
    %v507 = vld [vmem:[#allocation5 + $0xd00] sm:$0xff]
    %v508 = vld [vmem:[#allocation5 + $0xd08] sm:$0xff]
    %v509 = vld [vmem:[#allocation5 + $0xd10] sm:$0xff]
    %v510 = vld [vmem:[#allocation5 + $0xd18] sm:$0xff]
    %v511 = vld [vmem:[#allocation5 + $0xd20] sm:$0xff]
    %v512 = vld [vmem:[#allocation5 + $0xd28] sm:$0xff]
    %v513 = vld [vmem:[#allocation5 + $0xd30] sm:$0xff]
    %v514 = vld [vmem:[#allocation5 + $0xd38] sm:$0xff]
    %v515 = vld [vmem:[#allocation5 + $0xd40] sm:$0xff]
    %v516 = vld [vmem:[#allocation5 + $0xd48] sm:$0xff]
    %v517 = vld [vmem:[#allocation5 + $0xd50] sm:$0xff]
    %v518 = vld [vmem:[#allocation5 + $0xd58] sm:$0xff]
    %v519 = vld [vmem:[#allocation5 + $0xd60] sm:$0xff]
    %v520 = vld [vmem:[#allocation5 + $0xd68] sm:$0xff]
    %v521 = vld [vmem:[#allocation5 + $0xd70] sm:$0xff]
    %v522 = vld [vmem:[#allocation5 + $0xd78] sm:$0xff]
    %v523 = vld [vmem:[#allocation5 + $0xd80] sm:$0xff]
    %v524 = vld [vmem:[#allocation5 + $0xd88] sm:$0xff]
    %v525 = vld [vmem:[#allocation5 + $0xd90] sm:$0xff]
    %v526 = vld [vmem:[#allocation5 + $0xd98] sm:$0xff]
    %v527 = vld [vmem:[#allocation5 + $0xda0] sm:$0xff]
    %v528 = vld [vmem:[#allocation5 + $0xda8] sm:$0xff]
    %v529 = vld [vmem:[#allocation5 + $0xdb0] sm:$0xff]
    %v530 = vld [vmem:[#allocation5 + $0xdb8] sm:$0xff]
    %v531 = vld [vmem:[#allocation5 + $0xdc0] sm:$0xff]
    %v532 = vld [vmem:[#allocation5 + $0xdc8] sm:$0xff]
    %v533 = vld [vmem:[#allocation5 + $0xdd0] sm:$0xff]
    %v534 = vld [vmem:[#allocation5 + $0xdd8] sm:$0xff]
    %v535 = vld [vmem:[#allocation5 + $0xde0] sm:$0xff]
    %v536 = vld [vmem:[#allocation5 + $0xde8] sm:$0xff]
    %v537 = vld [vmem:[#allocation5 + $0xdf0] sm:$0xff]
    %v538 = vld [vmem:[#allocation5 + $0xdf8] sm:$0xff]
    %v539 = vld [vmem:[#allocation5 + $0xe00] sm:$0xff]
    %v540 = vld [vmem:[#allocation5 + $0xe08] sm:$0xff]
    %v541 = vld [vmem:[#allocation5 + $0xe10] sm:$0xff]
    %v542 = vld [vmem:[#allocation5 + $0xe18] sm:$0xff]
    %v543 = vld [vmem:[#allocation5 + $0xe20] sm:$0xff]
    %v544 = vld [vmem:[#allocation5 + $0xe28] sm:$0xff]
    %v545 = vld [vmem:[#allocation5 + $0xe30] sm:$0xff]
    %v546 = vld [vmem:[#allocation5 + $0xe38] sm:$0xff]
    %v547 = vld [vmem:[#allocation5 + $0xe40] sm:$0xff]
    %v548 = vld [vmem:[#allocation5 + $0xe48] sm:$0xff]
    %v549 = vld [vmem:[#allocation5 + $0xe50] sm:$0xff]
    %v550 = vld [vmem:[#allocation5 + $0xe58] sm:$0xff]
    %v551 = vld [vmem:[#allocation5 + $0xe60] sm:$0xff]
    %v552 = vld [vmem:[#allocation5 + $0xe68] sm:$0xff]
    %v553 = vld [vmem:[#allocation5 + $0xe70] sm:$0xff]
    %v554 = vld [vmem:[#allocation5 + $0xe78] sm:$0xff]
    %v555 = vld [vmem:[#allocation5 + $0xe80] sm:$0xff]
    %v556 = vld [vmem:[#allocation5 + $0xe88] sm:$0xff]
    %v557 = vld [vmem:[#allocation5 + $0xe90] sm:$0xff]
    %v558 = vld [vmem:[#allocation5 + $0xe98] sm:$0xff]
    %v559 = vld [vmem:[#allocation5 + $0xea0] sm:$0xff]
    %v560 = vld [vmem:[#allocation5 + $0xea8] sm:$0xff]
    %v561 = vld [vmem:[#allocation5 + $0xeb0] sm:$0xff]
    %v562 = vld [vmem:[#allocation5 + $0xeb8] sm:$0xff]
    %v563 = vld [vmem:[#allocation5 + $0xec0] sm:$0xff]
    %v564 = vld [vmem:[#allocation5 + $0xec8] sm:$0xff]
    %v565 = vld [vmem:[#allocation5 + $0xed0] sm:$0xff]
    %v566 = vld [vmem:[#allocation5 + $0xed8] sm:$0xff]
    %v567 = vld [vmem:[#allocation5 + $0xee0] sm:$0xff]
    %v568 = vld [vmem:[#allocation5 + $0xee8] sm:$0xff]
    %v569 = vld [vmem:[#allocation5 + $0xef0] sm:$0xff]
    %v570 = vld [vmem:[#allocation5 + $0xef8] sm:$0xff]
    %v571 = vld [vmem:[#allocation5 + $0xf00] sm:$0xff]
    %v572 = vld [vmem:[#allocation5 + $0xf08] sm:$0xff]
    %v573 = vld [vmem:[#allocation5 + $0xf10] sm:$0xff]
    %v574 = vld [vmem:[#allocation5 + $0xf18] sm:$0xff]
    %v575 = vld [vmem:[#allocation5 + $0xf20] sm:$0xff]
    %v576 = vld [vmem:[#allocation5 + $0xf28] sm:$0xff]
    %v577 = vld [vmem:[#allocation5 + $0xf30] sm:$0xff]
    %v578 = vld [vmem:[#allocation5 + $0xf38] sm:$0xff]
    %v579 = vld [vmem:[#allocation5 + $0xf40] sm:$0xff]
    %v580 = vld [vmem:[#allocation5 + $0xf48] sm:$0xff]
    %v581 = vld [vmem:[#allocation5 + $0xf50] sm:$0xff]
    %v582 = vld [vmem:[#allocation5 + $0xf58] sm:$0xff]
    %v583 = vld [vmem:[#allocation5 + $0xf60] sm:$0xff]
    %v584 = vld [vmem:[#allocation5 + $0xf68] sm:$0xff]
    %v585 = vld [vmem:[#allocation5 + $0xf70] sm:$0xff]
    %v586 = vld [vmem:[#allocation5 + $0xf78] sm:$0xff]
    %v587 = vld [vmem:[#allocation5 + $0xf80] sm:$0xff]
    %v588 = vld [vmem:[#allocation5 + $0xf88] sm:$0xff]
    %v589 = vld [vmem:[#allocation5 + $0xf90] sm:$0xff]
    %v590 = vld [vmem:[#allocation5 + $0xf98] sm:$0xff]
    %v591 = vld [vmem:[#allocation5 + $0xfa0] sm:$0xff]
    %v592 = vld [vmem:[#allocation5 + $0xfa8] sm:$0xff]
    %v593 = vld [vmem:[#allocation5 + $0xfb0] sm:$0xff]
    %v594 = vld [vmem:[#allocation5 + $0xfb8] sm:$0xff]
    %v595 = vld [vmem:[#allocation5 + $0xfc0] sm:$0xff]
    %v596 = vld [vmem:[#allocation5 + $0xfc8] sm:$0xff]
    %v597 = vld [vmem:[#allocation5 + $0xfd0] sm:$0xff]
    %v598 = vld [vmem:[#allocation5 + $0xfd8] sm:$0xff]
    %v599 = vld [vmem:[#allocation5 + $0xfe0] sm:$0xff]
    %v600 = vld [vmem:[#allocation5 + $0xfe8] sm:$0xff]
    %v601 = vld [vmem:[#allocation5 + $0xff0] sm:$0xff]
    %v602 = vld [vmem:[#allocation5 + $0xff8] sm:$0xff]
    %v603 = vld [vmem:[#allocation5 + $0x1000] sm:$0xff]
    %v604 = vld [vmem:[#allocation5 + $0x1008] sm:$0xff]
    %v605 = vld [vmem:[#allocation5 + $0x1010] sm:$0xff]
    %v606 = vld [vmem:[#allocation5 + $0x1018] sm:$0xff]
    %v607 = vld [vmem:[#allocation5 + $0x1020] sm:$0xff]
    %v608 = vld [vmem:[#allocation5 + $0x1028] sm:$0xff]
    %v609 = vld [vmem:[#allocation5 + $0x1030] sm:$0xff]
    %v610 = vld [vmem:[#allocation5 + $0x1038] sm:$0xff]
    %v611 = vld [vmem:[#allocation5 + $0x1040] sm:$0xff]
    %v612 = vld [vmem:[#allocation5 + $0x1048] sm:$0xff]
    %v613 = vld [vmem:[#allocation5 + $0x1050] sm:$0xff]
    %v614 = vld [vmem:[#allocation5 + $0x1058] sm:$0xff]
    %v615 = vld [vmem:[#allocation5 + $0x1060] sm:$0xff]
    %v616 = vld [vmem:[#allocation5 + $0x1068] sm:$0xff]
    %v617 = vld [vmem:[#allocation5 + $0x1070] sm:$0xff]
    %v618 = vld [vmem:[#allocation5 + $0x1078] sm:$0xff]
    %v619 = vld [vmem:[#allocation5 + $0x1080] sm:$0xff]
    %v620 = vld [vmem:[#allocation5 + $0x1088] sm:$0xff]
    %v621 = vld [vmem:[#allocation5 + $0x1090] sm:$0xff]
    %v622 = vld [vmem:[#allocation5 + $0x1098] sm:$0xff]
    %v623 = vld [vmem:[#allocation5 + $0x10a0] sm:$0xff]
    %v624 = vld [vmem:[#allocation5 + $0x10a8] sm:$0xff]
    %v625 = vld [vmem:[#allocation5 + $0x10b0] sm:$0xff]
    %v626 = vld [vmem:[#allocation5 + $0x10b8] sm:$0xff]
    %v627 = vld [vmem:[#allocation5 + $0x10c0] sm:$0xff]
    %v628 = vld [vmem:[#allocation5 + $0x10c8] sm:$0xff]
    %v629 = vld [vmem:[#allocation5 + $0x10d0] sm:$0xff]
    %v630 = vld [vmem:[#allocation5 + $0x10d8] sm:$0xff]
    %v631 = vld [vmem:[#allocation5 + $0x10e0] sm:$0xff]
    %v632 = vld [vmem:[#allocation5 + $0x10e8] sm:$0xff]
    %v633 = vld [vmem:[#allocation5 + $0x10f0] sm:$0xff]
    %v634 = vld [vmem:[#allocation5 + $0x10f8] sm:$0xff]
    %v635 = vld [vmem:[#allocation5 + $0x1100] sm:$0xff]
    %v636 = vld [vmem:[#allocation5 + $0x1108] sm:$0xff]
    %v637 = vld [vmem:[#allocation5 + $0x1110] sm:$0xff]
    %v638 = vld [vmem:[#allocation5 + $0x1118] sm:$0xff]
    %v639 = vld [vmem:[#allocation5 + $0x1120] sm:$0xff]
    %v640 = vld [vmem:[#allocation5 + $0x1128] sm:$0xff]
    %v641 = vld [vmem:[#allocation5 + $0x1130] sm:$0xff]
    %v642 = vld [vmem:[#allocation5 + $0x1138] sm:$0xff]
    %v643 = vld [vmem:[#allocation5 + $0x1140] sm:$0xff]
    %v644 = vld [vmem:[#allocation5 + $0x1148] sm:$0xff]
    %v645 = vld [vmem:[#allocation5 + $0x1150] sm:$0xff]
    %v646 = vld [vmem:[#allocation5 + $0x1158] sm:$0xff]
    %v647 = vld [vmem:[#allocation5 + $0x1160] sm:$0xff]
    %v648 = vld [vmem:[#allocation5 + $0x1168] sm:$0xff]
    %v649 = vld [vmem:[#allocation5 + $0x1170] sm:$0xff]
    %v650 = vld [vmem:[#allocation5 + $0x1178] sm:$0xff]
    %v651 = vld [vmem:[#allocation5 + $0x1180] sm:$0xff]
    %v652 = vld [vmem:[#allocation5 + $0x1188] sm:$0xff]
    %v653 = vld [vmem:[#allocation5 + $0x1190] sm:$0xff]
    %v654 = vld [vmem:[#allocation5 + $0x1198] sm:$0xff]
    %v655 = vld [vmem:[#allocation5 + $0x11a0] sm:$0xff]
    %v656 = vld [vmem:[#allocation5 + $0x11a8] sm:$0xff]
    %v657 = vld [vmem:[#allocation5 + $0x11b0] sm:$0xff]
    %v658 = vld [vmem:[#allocation5 + $0x11b8] sm:$0xff]
    %v659 = vld [vmem:[#allocation5 + $0x11c0] sm:$0xff]
    %v660 = vld [vmem:[#allocation5 + $0x11c8] sm:$0xff]
    %v661 = vld [vmem:[#allocation5 + $0x11d0] sm:$0xff]
    %v662 = vld [vmem:[#allocation5 + $0x11d8] sm:$0xff]
    %v663 = vld [vmem:[#allocation5 + $0x11e0] sm:$0xff]
    %v664 = vld [vmem:[#allocation5 + $0x11e8] sm:$0xff]
    %v665 = vld [vmem:[#allocation5 + $0x11f0] sm:$0xff]
    %v666 = vld [vmem:[#allocation5 + $0x11f8] sm:$0xff]
    %v667 = vld [vmem:[#allocation5 + $0x1200] sm:$0xff]
    %v668 = vld [vmem:[#allocation5 + $0x1208] sm:$0xff]
    %v669 = vld [vmem:[#allocation5 + $0x1210] sm:$0xff]
    %v670 = vld [vmem:[#allocation5 + $0x1218] sm:$0xff]
    %v671 = vld [vmem:[#allocation5 + $0x1220] sm:$0xff]
    %v672 = vld [vmem:[#allocation5 + $0x1228] sm:$0xff]
    %v673 = vld [vmem:[#allocation5 + $0x1230] sm:$0xff]
    %v674 = vld [vmem:[#allocation5 + $0x1238] sm:$0xff]
    %v675 = vld [vmem:[#allocation5 + $0x1240] sm:$0xff]
    %v676 = vld [vmem:[#allocation5 + $0x1248] sm:$0xff]
    %v677 = vld [vmem:[#allocation5 + $0x1250] sm:$0xff]
    %v678 = vld [vmem:[#allocation5 + $0x1258] sm:$0xff]
    %v679 = vld [vmem:[#allocation5 + $0x1260] sm:$0xff]
    %v680 = vld [vmem:[#allocation5 + $0x1268] sm:$0xff]
    %v681 = vld [vmem:[#allocation5 + $0x1270] sm:$0xff]
    %v682 = vld [vmem:[#allocation5 + $0x1278] sm:$0xff]
    %v683 = vld [vmem:[#allocation5 + $0x1280] sm:$0xff]
    %v684 = vld [vmem:[#allocation5 + $0x1288] sm:$0xff]
    %v685 = vld [vmem:[#allocation5 + $0x1290] sm:$0xff]
    %v686 = vld [vmem:[#allocation5 + $0x1298] sm:$0xff]
    %v687 = vld [vmem:[#allocation5 + $0x12a0] sm:$0xff]
    %v688 = vld [vmem:[#allocation5 + $0x12a8] sm:$0xff]
    %v689 = vld [vmem:[#allocation5 + $0x12b0] sm:$0xff]
    %v690 = vld [vmem:[#allocation5 + $0x12b8] sm:$0xff]
    %v691 = vld [vmem:[#allocation5 + $0x12c0] sm:$0xff]
    %v692 = vld [vmem:[#allocation5 + $0x12c8] sm:$0xff]
    %v693 = vld [vmem:[#allocation5 + $0x12d0] sm:$0xff]
    %v694 = vld [vmem:[#allocation5 + $0x12d8] sm:$0xff]
    %v695 = vld [vmem:[#allocation5 + $0x12e0] sm:$0xff]
    %v696 = vld [vmem:[#allocation5 + $0x12e8] sm:$0xff]
    %v697 = vld [vmem:[#allocation5 + $0x12f0] sm:$0xff]
    %v698 = vld [vmem:[#allocation5 + $0x12f8] sm:$0xff]
    %v699 = vld [vmem:[#allocation5 + $0x1300] sm:$0xff]
    %v700 = vld [vmem:[#allocation5 + $0x1308] sm:$0xff]
    %v701 = vld [vmem:[#allocation5 + $0x1310] sm:$0xff]
    %v702 = vld [vmem:[#allocation5 + $0x1318] sm:$0xff]
    %v703 = vld [vmem:[#allocation5 + $0x1320] sm:$0xff]
    %v704 = vld [vmem:[#allocation5 + $0x1328] sm:$0xff]
    %v705 = vld [vmem:[#allocation5 + $0x1330] sm:$0xff]
    %v706 = vld [vmem:[#allocation5 + $0x1338] sm:$0xff]
    %v707 = vld [vmem:[#allocation5 + $0x1340] sm:$0xff]
    %v708 = vld [vmem:[#allocation5 + $0x1348] sm:$0xff]
    %v709 = vld [vmem:[#allocation5 + $0x1350] sm:$0xff]
    %v710 = vld [vmem:[#allocation5 + $0x1358] sm:$0xff]
    %v711 = vld [vmem:[#allocation5 + $0x1360] sm:$0xff]
    %v712 = vld [vmem:[#allocation5 + $0x1368] sm:$0xff]
    %v713 = vld [vmem:[#allocation5 + $0x1370] sm:$0xff]
    %v714 = vld [vmem:[#allocation5 + $0x1378] sm:$0xff]
    %v715 = vld [vmem:[#allocation5 + $0x1380] sm:$0xff]
    %v716 = vld [vmem:[#allocation5 + $0x1388] sm:$0xff]
    %v717 = vld [vmem:[#allocation5 + $0x1390] sm:$0xff]
    %v718 = vld [vmem:[#allocation5 + $0x1398] sm:$0xff]
    %v719 = vld [vmem:[#allocation5 + $0x13a0] sm:$0xff]
    %v720 = vld [vmem:[#allocation5 + $0x13a8] sm:$0xff]
    %v721 = vld [vmem:[#allocation5 + $0x13b0] sm:$0xff]
    %v722 = vld [vmem:[#allocation5 + $0x13b8] sm:$0xff]
    %v723 = vld [vmem:[#allocation5 + $0x13c0] sm:$0xff]
    %v724 = vld [vmem:[#allocation5 + $0x13c8] sm:$0xff]
    %v725 = vld [vmem:[#allocation5 + $0x13d0] sm:$0xff]
    %v726 = vld [vmem:[#allocation5 + $0x13d8] sm:$0xff]
    %v727 = vld [vmem:[#allocation5 + $0x13e0] sm:$0xff]
    %v728 = vld [vmem:[#allocation5 + $0x13e8] sm:$0xff]
    %v729 = vld [vmem:[#allocation5 + $0x13f0] sm:$0xff]
    %v730 = vld [vmem:[#allocation5 + $0x13f8] sm:$0xff]
    %v731 = vld [vmem:[#allocation5 + $0x1400] sm:$0xff]
    %v732 = vld [vmem:[#allocation5 + $0x1408] sm:$0xff]
    %v733 = vld [vmem:[#allocation5 + $0x1410] sm:$0xff]
    %v734 = vld [vmem:[#allocation5 + $0x1418] sm:$0xff]
    %v735 = vld [vmem:[#allocation5 + $0x1420] sm:$0xff]
    %v736 = vld [vmem:[#allocation5 + $0x1428] sm:$0xff]
    %v737 = vld [vmem:[#allocation5 + $0x1430] sm:$0xff]
    %v738 = vld [vmem:[#allocation5 + $0x1438] sm:$0xff]
    %v739 = vld [vmem:[#allocation5 + $0x1440] sm:$0xff]
    %v740 = vld [vmem:[#allocation5 + $0x1448] sm:$0xff]
    %v741 = vld [vmem:[#allocation5 + $0x1450] sm:$0xff]
    %v742 = vld [vmem:[#allocation5 + $0x1458] sm:$0xff]
    %v743 = vld [vmem:[#allocation5 + $0x1460] sm:$0xff]
    %v744 = vld [vmem:[#allocation5 + $0x1468] sm:$0xff]
    %v745 = vld [vmem:[#allocation5 + $0x1470] sm:$0xff]
    %v746 = vld [vmem:[#allocation5 + $0x1478] sm:$0xff]
    %v747 = vld [vmem:[#allocation5 + $0x1480] sm:$0xff]
    %v748 = vld [vmem:[#allocation5 + $0x1488] sm:$0xff]
    %v749 = vld [vmem:[#allocation5 + $0x1490] sm:$0xff]
    %v750 = vld [vmem:[#allocation5 + $0x1498] sm:$0xff]
    %v751 = vld [vmem:[#allocation5 + $0x14a0] sm:$0xff]
    %v752 = vld [vmem:[#allocation5 + $0x14a8] sm:$0xff]
    %v753 = vld [vmem:[#allocation5 + $0x14b0] sm:$0xff]
    %v754 = vld [vmem:[#allocation5 + $0x14b8] sm:$0xff]
    %v755 = vld [vmem:[#allocation5 + $0x14c0] sm:$0xff]
    %v756 = vld [vmem:[#allocation5 + $0x14c8] sm:$0xff]
    %v757 = vld [vmem:[#allocation5 + $0x14d0] sm:$0xff]
    %v758 = vld [vmem:[#allocation5 + $0x14d8] sm:$0xff]
    %v759 = vld [vmem:[#allocation5 + $0x14e0] sm:$0xff]
    %v760 = vld [vmem:[#allocation5 + $0x14e8] sm:$0xff]
    %v761 = vld [vmem:[#allocation5 + $0x14f0] sm:$0xff]
    %v762 = vld [vmem:[#allocation5 + $0x14f8] sm:$0xff]
    %v763 = vld [vmem:[#allocation5 + $0x1500] sm:$0xff]
    %v764 = vld [vmem:[#allocation5 + $0x1508] sm:$0xff]
    %v765 = vld [vmem:[#allocation5 + $0x1510] sm:$0xff]
    %v766 = vld [vmem:[#allocation5 + $0x1518] sm:$0xff]
    %v767 = vld [vmem:[#allocation5 + $0x1520] sm:$0xff]
    %v768 = vld [vmem:[#allocation5 + $0x1528] sm:$0xff]
    %v769 = vld [vmem:[#allocation5 + $0x1530] sm:$0xff]
    %v770 = vld [vmem:[#allocation5 + $0x1538] sm:$0xff]
    %v771 = vld [vmem:[#allocation5 + $0x1540] sm:$0xff]
    %v772 = vld [vmem:[#allocation5 + $0x1548] sm:$0xff]
    %v773 = vld [vmem:[#allocation5 + $0x1550] sm:$0xff]
    %v774 = vld [vmem:[#allocation5 + $0x1558] sm:$0xff]
    %v775 = vld [vmem:[#allocation5 + $0x1560] sm:$0xff]
    %v776 = vld [vmem:[#allocation5 + $0x1568] sm:$0xff]
    %v777 = vld [vmem:[#allocation5 + $0x1570] sm:$0xff]
    %v778 = vld [vmem:[#allocation5 + $0x1578] sm:$0xff]
    %v779 = vld [vmem:[#allocation5 + $0x1580] sm:$0xff]
    %v780 = vld [vmem:[#allocation5 + $0x1588] sm:$0xff]
    %v781 = vld [vmem:[#allocation5 + $0x1590] sm:$0xff]
    %v782 = vld [vmem:[#allocation5 + $0x1598] sm:$0xff]
    %v783 = vld [vmem:[#allocation5 + $0x15a0] sm:$0xff]
    %v784 = vld [vmem:[#allocation5 + $0x15a8] sm:$0xff]
    %v785 = vld [vmem:[#allocation5 + $0x15b0] sm:$0xff]
    %v786 = vld [vmem:[#allocation5 + $0x15b8] sm:$0xff]
    %v787 = vld [vmem:[#allocation5 + $0x15c0] sm:$0xff]
    %v788 = vld [vmem:[#allocation5 + $0x15c8] sm:$0xff]
    %v789 = vld [vmem:[#allocation5 + $0x15d0] sm:$0xff]
    %v790 = vld [vmem:[#allocation5 + $0x15d8] sm:$0xff]
    %v791 = vld [vmem:[#allocation5 + $0x15e0] sm:$0xff]
    %v792 = vld [vmem:[#allocation5 + $0x15e8] sm:$0xff]
    %v793 = vld [vmem:[#allocation5 + $0x15f0] sm:$0xff]
    %v794 = vld [vmem:[#allocation5 + $0x15f8] sm:$0xff]
    %v795 = vld [vmem:[#allocation5 + $0x1600] sm:$0xff]
    %v796 = vld [vmem:[#allocation5 + $0x1608] sm:$0xff]
    %v797 = vld [vmem:[#allocation5 + $0x1610] sm:$0xff]
    %v798 = vld [vmem:[#allocation5 + $0x1618] sm:$0xff]
    %v799 = vld [vmem:[#allocation5 + $0x1620] sm:$0xff]
    %v800 = vld [vmem:[#allocation5 + $0x1628] sm:$0xff]
    %v801 = vld [vmem:[#allocation5 + $0x1630] sm:$0xff]
    %v802 = vld [vmem:[#allocation5 + $0x1638] sm:$0xff]
    %v803 = vld [vmem:[#allocation5 + $0x1640] sm:$0xff]
    %v804 = vld [vmem:[#allocation5 + $0x1648] sm:$0xff]
    %v805 = vld [vmem:[#allocation5 + $0x1650] sm:$0xff]
    %v806 = vld [vmem:[#allocation5 + $0x1658] sm:$0xff]
    %v807 = vld [vmem:[#allocation5 + $0x1660] sm:$0xff]
    %v808 = vld [vmem:[#allocation5 + $0x1668] sm:$0xff]
    %v809 = vld [vmem:[#allocation5 + $0x1670] sm:$0xff]
    %v810 = vld [vmem:[#allocation5 + $0x1678] sm:$0xff]
    %v811 = vld [vmem:[#allocation5 + $0x1680] sm:$0xff]
    %v812 = vld [vmem:[#allocation5 + $0x1688] sm:$0xff]
    %v813 = vld [vmem:[#allocation5 + $0x1690] sm:$0xff]
    %v814 = vld [vmem:[#allocation5 + $0x1698] sm:$0xff]
    %v815 = vld [vmem:[#allocation5 + $0x16a0] sm:$0xff]
    %v816 = vld [vmem:[#allocation5 + $0x16a8] sm:$0xff]
    %v817 = vld [vmem:[#allocation5 + $0x16b0] sm:$0xff]
    %v818 = vld [vmem:[#allocation5 + $0x16b8] sm:$0xff]
    %v819 = vld [vmem:[#allocation5 + $0x16c0] sm:$0xff]
    %v820 = vld [vmem:[#allocation5 + $0x16c8] sm:$0xff]
    %v821 = vld [vmem:[#allocation5 + $0x16d0] sm:$0xff]
    %v822 = vld [vmem:[#allocation5 + $0x16d8] sm:$0xff]
    %v823 = vld [vmem:[#allocation5 + $0x16e0] sm:$0xff]
    %v824 = vld [vmem:[#allocation5 + $0x16e8] sm:$0xff]
    %v825 = vld [vmem:[#allocation5 + $0x16f0] sm:$0xff]
    %v826 = vld [vmem:[#allocation5 + $0x16f8] sm:$0xff]
    %v827 = vld [vmem:[#allocation5 + $0x1700] sm:$0xff]
    %v828 = vld [vmem:[#allocation5 + $0x1708] sm:$0xff]
    %v829 = vld [vmem:[#allocation5 + $0x1710] sm:$0xff]
    %v830 = vld [vmem:[#allocation5 + $0x1718] sm:$0xff]
    %v831 = vld [vmem:[#allocation5 + $0x1720] sm:$0xff]
    %v832 = vld [vmem:[#allocation5 + $0x1728] sm:$0xff]
    %v833 = vld [vmem:[#allocation5 + $0x1730] sm:$0xff]
    %v834 = vld [vmem:[#allocation5 + $0x1738] sm:$0xff]
    %v835 = vld [vmem:[#allocation5 + $0x1740] sm:$0xff]
    %v836 = vld [vmem:[#allocation5 + $0x1748] sm:$0xff]
    %v837 = vld [vmem:[#allocation5 + $0x1750] sm:$0xff]
    %v838 = vld [vmem:[#allocation5 + $0x1758] sm:$0xff]
    %v839 = vld [vmem:[#allocation5 + $0x1760] sm:$0xff]
    %v840 = vld [vmem:[#allocation5 + $0x1768] sm:$0xff]
    %v841 = vld [vmem:[#allocation5 + $0x1770] sm:$0xff]
    %v842 = vld [vmem:[#allocation5 + $0x1778] sm:$0xff]
    %v843 = vld [vmem:[#allocation5 + $0x1780] sm:$0xff]
    %v844 = vld [vmem:[#allocation5 + $0x1788] sm:$0xff]
    %v845 = vld [vmem:[#allocation5 + $0x1790] sm:$0xff]
    %v846 = vld [vmem:[#allocation5 + $0x1798] sm:$0xff]
    %v847 = vld [vmem:[#allocation5 + $0x17a0] sm:$0xff]
    %v848 = vld [vmem:[#allocation5 + $0x17a8] sm:$0xff]
    %v849 = vld [vmem:[#allocation5 + $0x17b0] sm:$0xff]
    %v850 = vld [vmem:[#allocation5 + $0x17b8] sm:$0xff]
    %v851 = vld [vmem:[#allocation5 + $0x17c0] sm:$0xff]
    %v852 = vld [vmem:[#allocation5 + $0x17c8] sm:$0xff]
    %v853 = vld [vmem:[#allocation5 + $0x17d0] sm:$0xff]
    %v854 = vld [vmem:[#allocation5 + $0x17d8] sm:$0xff]
    %v855 = vld [vmem:[#allocation5 + $0x17e0] sm:$0xff]
    %v856 = vld [vmem:[#allocation5 + $0x17e8] sm:$0xff]
    %v857 = vld [vmem:[#allocation5 + $0x17f0] sm:$0xff]
    %v858 = vld [vmem:[#allocation5 + $0x17f8] sm:$0xff]
    %v859 = vld [vmem:[#allocation5 + $0x1800] sm:$0xff]
    %v860 = vld [vmem:[#allocation5 + $0x1808] sm:$0xff]
    %v861 = vld [vmem:[#allocation5 + $0x1810] sm:$0xff]
    %v862 = vld [vmem:[#allocation5 + $0x1818] sm:$0xff]
    %v863 = vld [vmem:[#allocation5 + $0x1820] sm:$0xff]
    %v864 = vld [vmem:[#allocation5 + $0x1828] sm:$0xff]
    %v865 = vld [vmem:[#allocation5 + $0x1830] sm:$0xff]
    %v866 = vld [vmem:[#allocation5 + $0x1838] sm:$0xff]
    %v867 = vld [vmem:[#allocation5 + $0x1840] sm:$0xff]
    %v868 = vld [vmem:[#allocation5 + $0x1848] sm:$0xff]
    %v869 = vld [vmem:[#allocation5 + $0x1850] sm:$0xff]
    %v870 = vld [vmem:[#allocation5 + $0x1858] sm:$0xff]
    %v871 = vld [vmem:[#allocation5 + $0x1860] sm:$0xff]
    %v872 = vld [vmem:[#allocation5 + $0x1868] sm:$0xff]
    %v873 = vld [vmem:[#allocation5 + $0x1870] sm:$0xff]
    %v874 = vld [vmem:[#allocation5 + $0x1878] sm:$0xff]
    %v875 = vld [vmem:[#allocation7] sm:$0xff]
    %v877 = vlaneseq
    %v878 = vshrl.u32 %v877, 7
    %v879 = vsub.s32 0, %v878
    %v880 = vrot.slane %v875, %v879
    %v881 = vlaneseq
    %v882 = vshrl.u32 %v881, 7
    %v883 = vsub.s32 1, %v882
    %v884 = vrot.slane %v875, %v883
    %v885 = vlaneseq
    %v886 = vshrl.u32 %v885, 7
    %v887 = vsub.s32 2, %v886
    %v888 = vrot.slane %v875, %v887
    %v889 = vlaneseq
    %v890 = vshrl.u32 %v889, 7
    %v891 = vsub.s32 3, %v890
    %v892 = vrot.slane %v875, %v891
    %v893 = vlaneseq
    %v894 = vshrl.u32 %v893, 7
    %v895 = vsub.s32 4, %v894
    %v896 = vrot.slane %v875, %v895
    %v897 = vlaneseq
    %v898 = vshrl.u32 %v897, 7
    %v899 = vsub.s32 5, %v898
    %v900 = vrot.slane %v875, %v899
    %v901 = vlaneseq
    %v902 = vshrl.u32 %v901, 7
    %v903 = vsub.s32 6, %v902
    %v904 = vrot.slane %v875, %v903
    %v905 = vlaneseq
    %v906 = vshrl.u32 %v905, 7
    %v907 = vsub.s32 7, %v906
    %v908 = vrot.slane %v875, %v907
    %v924 = vunpack.c.l.b16 %v84
    %v925 = vunpack.c.h.b16 %v84
    %v926 = vunpack.c.l.b16 %v85
    %v927 = vunpack.c.h.b16 %v85
    %v928 = vunpack.c.l.b16 %v86
    %v929 = vunpack.c.h.b16 %v86
    %v930 = vunpack.c.l.b16 %v87
    %v931 = vunpack.c.h.b16 %v87
    %v932 = vunpack.c.l.b16 %v88
    %v933 = vunpack.c.h.b16 %v88
    %v934 = vunpack.c.l.b16 %v89
    %v935 = vunpack.c.h.b16 %v89
    %v936 = vunpack.c.l.b16 %v90
    %v937 = vpack.c.b16 %v924, %v924
    %v938 = vpack.c.b16 %v925, %v925
    %v939 = vpack.c.b16 %v926, %v926
    %v940 = vpack.c.b16 %v927, %v927
    %v941 = vpack.c.b16 %v928, %v928
    %v942 = vpack.c.b16 %v929, %v929
    %v943 = vpack.c.b16 %v930, %v930
    %v944 = vpack.c.b16 %v931, %v931
    %v945 = vpack.c.b16 %v932, %v932
    %v946 = vpack.c.b16 %v933, %v933
    %v947 = vpack.c.b16 %v934, %v934
    %v948 = vpack.c.b16 %v935, %v935
    %v949 = vpack.c.b16 %v936, %v936
    %v1746 = vunpack.c.l.b16 %v91
    %v1747 = vunpack.c.h.b16 %v91
    %v1748 = vunpack.c.l.b16 %v92
    %v1749 = vunpack.c.h.b16 %v92
    %v1750 = vunpack.c.l.b16 %v93
    %v1751 = vunpack.c.h.b16 %v93
    %v1752 = vunpack.c.l.b16 %v94
    %v1753 = vunpack.c.h.b16 %v94
    %v1754 = vunpack.c.l.b16 %v95
    %v1755 = vunpack.c.h.b16 %v95
    %v1756 = vunpack.c.l.b16 %v96
    %v1757 = vunpack.c.h.b16 %v96
    %v1758 = vunpack.c.l.b16 %v97
    %v1759 = vunpack.c.h.b16 %v97
    %v1760 = vunpack.c.l.b16 %v98
    %v1761 = vunpack.c.h.b16 %v98
    %v1762 = vunpack.c.l.b16 %v99
    %v1763 = vunpack.c.h.b16 %v99
    %v1764 = vunpack.c.l.b16 %v100
    %v1765 = vunpack.c.h.b16 %v100
    %v1766 = vunpack.c.l.b16 %v101
    %v1767 = vunpack.c.h.b16 %v101
    %v1768 = vunpack.c.l.b16 %v102
    %v1769 = vunpack.c.h.b16 %v102
    %v1770 = vunpack.c.l.b16 %v103
    %v1771 = vunpack.c.h.b16 %v103
    %v1772 = vunpack.c.l.b16 %v104
    %v1773 = vunpack.c.h.b16 %v104
    %v1774 = vunpack.c.l.b16 %v105
    %v1775 = vunpack.c.h.b16 %v105
    %v1776 = vunpack.c.l.b16 %v106
    %v1777 = vunpack.c.h.b16 %v106
    %v1778 = vunpack.c.l.b16 %v107
    %v1779 = vunpack.c.h.b16 %v107
    %v1780 = vunpack.c.l.b16 %v108
    %v1781 = vunpack.c.h.b16 %v108
    %v1782 = vunpack.c.l.b16 %v109
    %v1783 = vunpack.c.h.b16 %v109
    %v1784 = vunpack.c.l.b16 %v110
    %v1785 = vunpack.c.h.b16 %v110
    %v1786 = vunpack.c.l.b16 %v111
    %v1787 = vunpack.c.h.b16 %v111
    %v1788 = vunpack.c.l.b16 %v112
    %v1789 = vunpack.c.h.b16 %v112
    %v1790 = vunpack.c.l.b16 %v113
    %v1791 = vunpack.c.h.b16 %v113
    %v1792 = vunpack.c.l.b16 %v114
    %v1793 = vunpack.c.h.b16 %v114
    %v1794 = vunpack.c.l.b16 %v115
    %v1795 = vunpack.c.h.b16 %v115
    %v1796 = vunpack.c.l.b16 %v116
    %v1797 = vunpack.c.h.b16 %v116
    %v1798 = vunpack.c.l.b16 %v117
    %v1799 = vunpack.c.h.b16 %v117
    %v1800 = vunpack.c.l.b16 %v118
    %v1801 = vunpack.c.h.b16 %v118
    %v1802 = vunpack.c.l.b16 %v119
    %v1803 = vunpack.c.h.b16 %v119
    %v1804 = vunpack.c.l.b16 %v120
    %v1805 = vunpack.c.h.b16 %v120
    %v1806 = vunpack.c.l.b16 %v121
    %v1807 = vunpack.c.h.b16 %v121
    %v1808 = vunpack.c.l.b16 %v122
    %v1809 = vunpack.c.h.b16 %v122
    %v1810 = vunpack.c.l.b16 %v123
    %v1811 = vunpack.c.h.b16 %v123
    %v1812 = vunpack.c.l.b16 %v124
    %v1813 = vunpack.c.h.b16 %v124
    %v1814 = vunpack.c.l.b16 %v125
    %v1815 = vunpack.c.h.b16 %v125
    %v1816 = vunpack.c.l.b16 %v126
    %v1817 = vunpack.c.h.b16 %v126
    %v1818 = vunpack.c.l.b16 %v127
    %v1819 = vunpack.c.h.b16 %v127
    %v1820 = vunpack.c.l.b16 %v128
    %v1821 = vunpack.c.h.b16 %v128
    %v1822 = vunpack.c.l.b16 %v129
    %v1823 = vunpack.c.h.b16 %v129
    %v1824 = vunpack.c.l.b16 %v130
    %v1825 = vunpack.c.h.b16 %v130
    %v1826 = vunpack.c.l.b16 %v131
    %v1827 = vunpack.c.h.b16 %v131
    %v1828 = vunpack.c.l.b16 %v132
    %v1829 = vunpack.c.h.b16 %v132
    %v1830 = vunpack.c.l.b16 %v133
    %v1831 = vunpack.c.h.b16 %v133
    %v1832 = vunpack.c.l.b16 %v134
    %v1833 = vunpack.c.h.b16 %v134
    %v1834 = vunpack.c.l.b16 %v135
    %v1835 = vunpack.c.h.b16 %v135
    %v1836 = vunpack.c.l.b16 %v136
    %v1837 = vunpack.c.h.b16 %v136
    %v1838 = vunpack.c.l.b16 %v137
    %v1839 = vunpack.c.h.b16 %v137
    %v1840 = vunpack.c.l.b16 %v138
    %v1841 = vunpack.c.h.b16 %v138
    %v1842 = vunpack.c.l.b16 %v139
    %v1843 = vunpack.c.h.b16 %v139
    %v1844 = vunpack.c.l.b16 %v140
    %v1845 = vunpack.c.h.b16 %v140
    %v1846 = vunpack.c.l.b16 %v141
    %v1847 = vunpack.c.h.b16 %v141
    %v1848 = vunpack.c.l.b16 %v142
    %v1849 = vunpack.c.h.b16 %v142
    %v1850 = vunpack.c.l.b16 %v143
    %v1851 = vunpack.c.h.b16 %v143
    %v1852 = vunpack.c.l.b16 %v144
    %v1853 = vunpack.c.h.b16 %v144
    %v1854 = vunpack.c.l.b16 %v145
    %v1855 = vunpack.c.h.b16 %v145
    %v1856 = vunpack.c.l.b16 %v146
    %v1857 = vunpack.c.h.b16 %v146
    %v1858 = vunpack.c.l.b16 %v147
    %v1859 = vunpack.c.h.b16 %v147
    %v1860 = vunpack.c.l.b16 %v148
    %v1861 = vunpack.c.h.b16 %v148
    %v1862 = vunpack.c.l.b16 %v149
    %v1863 = vunpack.c.h.b16 %v149
    %v1864 = vunpack.c.l.b16 %v150
    %v1865 = vunpack.c.h.b16 %v150
    %v1866 = vunpack.c.l.b16 %v151
    %v1867 = vunpack.c.h.b16 %v151
    %v1868 = vunpack.c.l.b16 %v152
    %v1869 = vunpack.c.h.b16 %v152
    %v1870 = vunpack.c.l.b16 %v153
    %v1871 = vunpack.c.h.b16 %v153
    %v1872 = vunpack.c.l.b16 %v154
    %v1873 = vunpack.c.h.b16 %v154
    %v1874 = vunpack.c.l.b16 %v155
    %v1875 = vunpack.c.h.b16 %v155
    %v1876 = vunpack.c.l.b16 %v156
    %v1877 = vunpack.c.h.b16 %v156
    %v1878 = vunpack.c.l.b16 %v157
    %v1879 = vunpack.c.h.b16 %v157
    %v1880 = vunpack.c.l.b16 %v158
    %v1881 = vunpack.c.h.b16 %v158
    %v1882 = vunpack.c.l.b16 %v159
    %v1883 = vunpack.c.h.b16 %v159
    %v1884 = vunpack.c.l.b16 %v160
    %v1885 = vunpack.c.h.b16 %v160
    %v1886 = vunpack.c.l.b16 %v161
    %v1887 = vunpack.c.h.b16 %v161
    %v1888 = vunpack.c.l.b16 %v162
    %v1889 = vunpack.c.h.b16 %v162
    %v1890 = vunpack.c.l.b16 %v163
    %v1891 = vunpack.c.h.b16 %v163
    %v1892 = vunpack.c.l.b16 %v164
    %v1893 = vunpack.c.h.b16 %v164
    %v1894 = vunpack.c.l.b16 %v165
    %v1895 = vunpack.c.h.b16 %v165
    %v1896 = vunpack.c.l.b16 %v166
    %v1897 = vunpack.c.h.b16 %v166
    %v1898 = vunpack.c.l.b16 %v167
    %v1899 = vunpack.c.h.b16 %v167
    %v1900 = vunpack.c.l.b16 %v168
    %v1901 = vunpack.c.h.b16 %v168
    %v1902 = vunpack.c.l.b16 %v169
    %v1903 = vunpack.c.h.b16 %v169
    %v1904 = vunpack.c.l.b16 %v170
    %v1905 = vunpack.c.h.b16 %v170
    %v1906 = vunpack.c.l.b16 %v171
    %v1907 = vunpack.c.h.b16 %v171
    %v1908 = vunpack.c.l.b16 %v172
    %v1909 = vunpack.c.h.b16 %v172
    %v1910 = vunpack.c.l.b16 %v173
    %v1911 = vunpack.c.h.b16 %v173
    %v1912 = vunpack.c.l.b16 %v174
    %v1913 = vunpack.c.h.b16 %v174
    %v1914 = vunpack.c.l.b16 %v175
    %v1915 = vunpack.c.h.b16 %v175
    %v1916 = vunpack.c.l.b16 %v176
    %v1917 = vunpack.c.h.b16 %v176
    %v1918 = vunpack.c.l.b16 %v177
    %v1919 = vunpack.c.h.b16 %v177
    %v1920 = vunpack.c.l.b16 %v178
    %v1921 = vunpack.c.h.b16 %v178
    %v1922 = vunpack.c.l.b16 %v179
    %v1923 = vunpack.c.h.b16 %v179
    %v1924 = vunpack.c.l.b16 %v180
    %v1925 = vunpack.c.h.b16 %v180
    %v1926 = vunpack.c.l.b16 %v181
    %v1927 = vunpack.c.h.b16 %v181
    %v1928 = vunpack.c.l.b16 %v182
    %v1929 = vunpack.c.h.b16 %v182
    %v1930 = vunpack.c.l.b16 %v183
    %v1931 = vunpack.c.h.b16 %v183
    %v1932 = vunpack.c.l.b16 %v184
    %v1933 = vunpack.c.h.b16 %v184
    %v1934 = vunpack.c.l.b16 %v185
    %v1935 = vunpack.c.h.b16 %v185
    %v1936 = vunpack.c.l.b16 %v186
    %v1937 = vunpack.c.h.b16 %v186
    %v1938 = vunpack.c.l.b16 %v187
    %v1939 = vunpack.c.h.b16 %v187
    %v1940 = vunpack.c.l.b16 %v188
    %v1941 = vunpack.c.h.b16 %v188
    %v1942 = vunpack.c.l.b16 %v189
    %v1943 = vunpack.c.h.b16 %v189
    %v1944 = vunpack.c.l.b16 %v190
    %v1945 = vunpack.c.h.b16 %v190
    %v1946 = vunpack.c.l.b16 %v191
    %v1947 = vunpack.c.h.b16 %v191
    %v1948 = vunpack.c.l.b16 %v192
    %v1949 = vunpack.c.h.b16 %v192
    %v1950 = vunpack.c.l.b16 %v193
    %v1951 = vunpack.c.h.b16 %v193
    %v1952 = vunpack.c.l.b16 %v194
    %v1953 = vunpack.c.h.b16 %v194
    %v1954 = vunpack.c.l.b16 %v195
    %v1955 = vunpack.c.h.b16 %v195
    %v1956 = vunpack.c.l.b16 %v196
    %v1957 = vunpack.c.h.b16 %v196
    %v1958 = vunpack.c.l.b16 %v197
    %v1959 = vunpack.c.h.b16 %v197
    %v1960 = vunpack.c.l.b16 %v198
    %v1961 = vunpack.c.h.b16 %v198
    %v1962 = vunpack.c.l.b16 %v199
    %v1963 = vunpack.c.h.b16 %v199
    %v1964 = vunpack.c.l.b16 %v200
    %v1965 = vunpack.c.h.b16 %v200
    %v1966 = vunpack.c.l.b16 %v201
    %v1967 = vunpack.c.h.b16 %v201
    %v1968 = vunpack.c.l.b16 %v202
    %v1969 = vunpack.c.h.b16 %v202
    %v1970 = vunpack.c.l.b16 %v203
    %v1971 = vunpack.c.h.b16 %v203
    %v1972 = vunpack.c.l.b16 %v204
    %v1973 = vunpack.c.h.b16 %v204
    %v1974 = vunpack.c.l.b16 %v205
    %v1975 = vunpack.c.h.b16 %v205
    %v1976 = vunpack.c.l.b16 %v206
    %v1977 = vunpack.c.h.b16 %v206
    %v1978 = vunpack.c.l.b16 %v207
    %v1979 = vunpack.c.h.b16 %v207
    %v1980 = vunpack.c.l.b16 %v208
    %v1981 = vunpack.c.h.b16 %v208
    %v1982 = vunpack.c.l.b16 %v209
    %v1983 = vunpack.c.h.b16 %v209
    %v1984 = vunpack.c.l.b16 %v210
    %v1985 = vunpack.c.h.b16 %v210
    %v1986 = vunpack.c.l.b16 %v211
    %v1987 = vunpack.c.h.b16 %v211
    %v1988 = vunpack.c.l.b16 %v212
    %v1989 = vunpack.c.h.b16 %v212
    %v1990 = vunpack.c.l.b16 %v213
    %v1991 = vunpack.c.h.b16 %v213
    %v1992 = vunpack.c.l.b16 %v214
    %v1993 = vunpack.c.h.b16 %v214
    %v1994 = vunpack.c.l.b16 %v215
    %v1995 = vunpack.c.h.b16 %v215
    %v1996 = vunpack.c.l.b16 %v216
    %v1997 = vunpack.c.h.b16 %v216
    %v1998 = vunpack.c.l.b16 %v217
    %v1999 = vunpack.c.h.b16 %v217
    %v2000 = vunpack.c.l.b16 %v218
    %v2001 = vunpack.c.h.b16 %v218
    %v2002 = vunpack.c.l.b16 %v219
    %v2003 = vunpack.c.h.b16 %v219
    %v2004 = vunpack.c.l.b16 %v220
    %v2005 = vunpack.c.h.b16 %v220
    %v2006 = vunpack.c.l.b16 %v221
    %v2007 = vunpack.c.h.b16 %v221
    %v2008 = vunpack.c.l.b16 %v222
    %v2009 = vunpack.c.h.b16 %v222
    %v2010 = vunpack.c.l.b16 %v223
    %v2011 = vunpack.c.h.b16 %v223
    %v2012 = vunpack.c.l.b16 %v224
    %v2013 = vunpack.c.h.b16 %v224
    %v2014 = vunpack.c.l.b16 %v225
    %v2015 = vunpack.c.h.b16 %v225
    %v2016 = vunpack.c.l.b16 %v226
    %v2017 = vunpack.c.h.b16 %v226
    %v2018 = vunpack.c.l.b16 %v227
    %v2019 = vunpack.c.h.b16 %v227
    %v2020 = vunpack.c.l.b16 %v228
    %v2021 = vunpack.c.h.b16 %v228
    %v2022 = vunpack.c.l.b16 %v229
    %v2023 = vunpack.c.h.b16 %v229
    %v2024 = vunpack.c.l.b16 %v230
    %v2025 = vunpack.c.h.b16 %v230
    %v2026 = vunpack.c.l.b16 %v231
    %v2027 = vunpack.c.h.b16 %v231
    %v2028 = vunpack.c.l.b16 %v232
    %v2029 = vunpack.c.h.b16 %v232
    %v2030 = vunpack.c.l.b16 %v233
    %v2031 = vunpack.c.h.b16 %v233
    %v2032 = vunpack.c.l.b16 %v234
    %v2033 = vunpack.c.h.b16 %v234
    %v2034 = vunpack.c.l.b16 %v235
    %v2035 = vunpack.c.h.b16 %v235
    %v2036 = vunpack.c.l.b16 %v236
    %v2037 = vunpack.c.h.b16 %v236
    %v2038 = vunpack.c.l.b16 %v237
    %v2039 = vunpack.c.h.b16 %v237
    %v2040 = vunpack.c.l.b16 %v238
    %v2041 = vunpack.c.h.b16 %v238
    %v2042 = vunpack.c.l.b16 %v239
    %v2043 = vunpack.c.h.b16 %v239
    %v2044 = vunpack.c.l.b16 %v240
    %v2045 = vunpack.c.h.b16 %v240
    %v2046 = vunpack.c.l.b16 %v241
    %v2047 = vunpack.c.h.b16 %v241
    %v2048 = vunpack.c.l.b16 %v242
    %v2049 = vunpack.c.h.b16 %v242
    %v2050 = vunpack.c.l.b16 %v243
    %v2051 = vunpack.c.h.b16 %v243
    %v2052 = vunpack.c.l.b16 %v244
    %v2053 = vunpack.c.h.b16 %v244
    %v2054 = vunpack.c.l.b16 %v245
    %v2055 = vunpack.c.h.b16 %v245
    %v2056 = vunpack.c.l.b16 %v246
    %v2057 = vunpack.c.h.b16 %v246
    %v2058 = vunpack.c.l.b16 %v247
    %v2059 = vunpack.c.h.b16 %v247
    %v2060 = vunpack.c.l.b16 %v248
    %v2061 = vunpack.c.h.b16 %v248
    %v2062 = vunpack.c.l.b16 %v249
    %v2063 = vunpack.c.h.b16 %v249
    %v2064 = vunpack.c.l.b16 %v250
    %v2065 = vunpack.c.h.b16 %v250
    %v2066 = vunpack.c.l.b16 %v251
    %v2067 = vunpack.c.h.b16 %v251
    %v2068 = vunpack.c.l.b16 %v252
    %v2069 = vunpack.c.h.b16 %v252
    %v2070 = vunpack.c.l.b16 %v253
    %v2071 = vunpack.c.h.b16 %v253
    %v2072 = vunpack.c.l.b16 %v254
    %v2073 = vunpack.c.h.b16 %v254
    %v2074 = vunpack.c.l.b16 %v255
    %v2075 = vunpack.c.h.b16 %v255
    %v2076 = vunpack.c.l.b16 %v256
    %v2077 = vunpack.c.h.b16 %v256
    %v2078 = vunpack.c.l.b16 %v257
    %v2079 = vunpack.c.h.b16 %v257
    %v2080 = vunpack.c.l.b16 %v258
    %v2081 = vunpack.c.h.b16 %v258
    %v2082 = vunpack.c.l.b16 %v259
    %v2083 = vunpack.c.h.b16 %v259
    %v2084 = vunpack.c.l.b16 %v260
    %v2085 = vunpack.c.h.b16 %v260
    %v2086 = vunpack.c.l.b16 %v261
    %v2087 = vunpack.c.h.b16 %v261
    %v2088 = vunpack.c.l.b16 %v262
    %v2089 = vunpack.c.h.b16 %v262
    %v2090 = vunpack.c.l.b16 %v263
    %v2091 = vunpack.c.h.b16 %v263
    %v2092 = vunpack.c.l.b16 %v264
    %v2093 = vunpack.c.h.b16 %v264
    %v2094 = vunpack.c.l.b16 %v265
    %v2095 = vunpack.c.h.b16 %v265
    %v2096 = vunpack.c.l.b16 %v266
    %v2097 = vunpack.c.h.b16 %v266
    %v2098 = vunpack.c.l.b16 %v267
    %v2099 = vunpack.c.h.b16 %v267
    %v2100 = vunpack.c.l.b16 %v268
    %v2101 = vunpack.c.h.b16 %v268
    %v2102 = vunpack.c.l.b16 %v269
    %v2103 = vunpack.c.h.b16 %v269
    %v2104 = vunpack.c.l.b16 %v270
    %v2105 = vunpack.c.h.b16 %v270
    %v2106 = vunpack.c.l.b16 %v271
    %v2107 = vunpack.c.h.b16 %v271
    %v2108 = vunpack.c.l.b16 %v272
    %v2109 = vunpack.c.h.b16 %v272
    %v2110 = vunpack.c.l.b16 %v273
    %v2111 = vunpack.c.h.b16 %v273
    %v2112 = vunpack.c.l.b16 %v274
    %v2113 = vunpack.c.h.b16 %v274
    %v2114 = vunpack.c.l.b16 %v275
    %v2115 = vunpack.c.h.b16 %v275
    %v2116 = vunpack.c.l.b16 %v276
    %v2117 = vunpack.c.h.b16 %v276
    %v2118 = vunpack.c.l.b16 %v277
    %v2119 = vunpack.c.h.b16 %v277
    %v2120 = vunpack.c.l.b16 %v278
    %v2121 = vunpack.c.h.b16 %v278
    %v2122 = vunpack.c.l.b16 %v279
    %v2123 = vunpack.c.h.b16 %v279
    %v2124 = vunpack.c.l.b16 %v280
    %v2125 = vunpack.c.h.b16 %v280
    %v2126 = vunpack.c.l.b16 %v281
    %v2127 = vunpack.c.h.b16 %v281
    %v2128 = vunpack.c.l.b16 %v282
    %v2129 = vunpack.c.h.b16 %v282
    %v2130 = vunpack.c.l.b16 %v283
    %v2131 = vunpack.c.h.b16 %v283
    %v2132 = vunpack.c.l.b16 %v284
    %v2133 = vunpack.c.h.b16 %v284
    %v2134 = vunpack.c.l.b16 %v285
    %v2135 = vunpack.c.h.b16 %v285
    %v2136 = vunpack.c.l.b16 %v286
    %v2137 = vunpack.c.h.b16 %v286
    %v2138 = vunpack.c.l.b16 %v287
    %v2139 = vunpack.c.h.b16 %v287
    %v2140 = vunpack.c.l.b16 %v288
    %v2141 = vunpack.c.h.b16 %v288
    %v2142 = vunpack.c.l.b16 %v289
    %v2143 = vunpack.c.h.b16 %v289
    %v2144 = vunpack.c.l.b16 %v290
    %v2145 = vunpack.c.h.b16 %v290
    %v2146 = vunpack.c.l.b16 %v291
    %v2147 = vunpack.c.h.b16 %v291
    %v2148 = vunpack.c.l.b16 %v292
    %v2149 = vunpack.c.h.b16 %v292
    %v2150 = vunpack.c.l.b16 %v293
    %v2151 = vunpack.c.h.b16 %v293
    %v2152 = vunpack.c.l.b16 %v294
    %v2153 = vunpack.c.h.b16 %v294
    %v2154 = vunpack.c.l.b16 %v295
    %v2155 = vunpack.c.h.b16 %v295
    %v2156 = vunpack.c.l.b16 %v296
    %v2157 = vunpack.c.h.b16 %v296
    %v2158 = vunpack.c.l.b16 %v297
    %v2159 = vunpack.c.h.b16 %v297
    %v2160 = vunpack.c.l.b16 %v298
    %v2161 = vunpack.c.h.b16 %v298
    %v2162 = vunpack.c.l.b16 %v299
    %v2163 = vunpack.c.h.b16 %v299
    %v2164 = vunpack.c.l.b16 %v300
    %v2165 = vunpack.c.h.b16 %v300
    %v2166 = vunpack.c.l.b16 %v301
    %v2167 = vunpack.c.h.b16 %v301
    %v2168 = vunpack.c.l.b16 %v302
    %v2169 = vunpack.c.h.b16 %v302
    %v2170 = vunpack.c.l.b16 %v303
    %v2171 = vunpack.c.h.b16 %v303
    %v2172 = vunpack.c.l.b16 %v304
    %v2173 = vunpack.c.h.b16 %v304
    %v2174 = vunpack.c.l.b16 %v305
    %v2175 = vunpack.c.h.b16 %v305
    %v2176 = vunpack.c.l.b16 %v306
    %v2177 = vunpack.c.h.b16 %v306
    %v2178 = vunpack.c.l.b16 %v307
    %v2179 = vunpack.c.h.b16 %v307
    %v2180 = vunpack.c.l.b16 %v308
    %v2181 = vunpack.c.h.b16 %v308
    %v2182 = vunpack.c.l.b16 %v309
    %v2183 = vunpack.c.h.b16 %v309
    %v2184 = vunpack.c.l.b16 %v310
    %v2185 = vunpack.c.h.b16 %v310
    %v2186 = vunpack.c.l.b16 %v311
    %v2187 = vunpack.c.h.b16 %v311
    %v2188 = vunpack.c.l.b16 %v312
    %v2189 = vunpack.c.h.b16 %v312
    %v2190 = vunpack.c.l.b16 %v313
    %v2191 = vunpack.c.h.b16 %v313
    %v2192 = vunpack.c.l.b16 %v314
    %v2193 = vunpack.c.h.b16 %v314
    %v2194 = vunpack.c.l.b16 %v315
    %v2195 = vunpack.c.h.b16 %v315
    %v2196 = vunpack.c.l.b16 %v316
    %v2197 = vunpack.c.h.b16 %v316
    %v2198 = vunpack.c.l.b16 %v317
    %v2199 = vunpack.c.h.b16 %v317
    %v2200 = vunpack.c.l.b16 %v318
    %v2201 = vunpack.c.h.b16 %v318
    %v2202 = vunpack.c.l.b16 %v319
    %v2203 = vunpack.c.h.b16 %v319
    %v2204 = vunpack.c.l.b16 %v320
    %v2205 = vunpack.c.h.b16 %v320
    %v2206 = vunpack.c.l.b16 %v321
    %v2207 = vunpack.c.h.b16 %v321
    %v2208 = vunpack.c.l.b16 %v322
    %v2209 = vunpack.c.h.b16 %v322
    %v2210 = vunpack.c.l.b16 %v323
    %v2211 = vunpack.c.h.b16 %v323
    %v2212 = vunpack.c.l.b16 %v324
    %v2213 = vunpack.c.h.b16 %v324
    %v2214 = vunpack.c.l.b16 %v325
    %v2215 = vunpack.c.h.b16 %v325
    %v2216 = vunpack.c.l.b16 %v326
    %v2217 = vunpack.c.h.b16 %v326
    %v2218 = vunpack.c.l.b16 %v327
    %v2219 = vunpack.c.h.b16 %v327
    %v2220 = vunpack.c.l.b16 %v328
    %v2221 = vunpack.c.h.b16 %v328
    %v2222 = vunpack.c.l.b16 %v329
    %v2223 = vunpack.c.h.b16 %v329
    %v2224 = vunpack.c.l.b16 %v330
    %v2225 = vunpack.c.h.b16 %v330
    %v2226 = vunpack.c.l.b16 %v331
    %v2227 = vunpack.c.h.b16 %v331
    %v2228 = vunpack.c.l.b16 %v332
    %v2229 = vunpack.c.h.b16 %v332
    %v2230 = vunpack.c.l.b16 %v333
    %v2231 = vunpack.c.h.b16 %v333
    %v2232 = vunpack.c.l.b16 %v334
    %v2233 = vunpack.c.h.b16 %v334
    %v2234 = vunpack.c.l.b16 %v335
    %v2235 = vunpack.c.h.b16 %v335
    %v2236 = vunpack.c.l.b16 %v336
    %v2237 = vunpack.c.h.b16 %v336
    %v2238 = vunpack.c.l.b16 %v337
    %v2239 = vunpack.c.h.b16 %v337
    %v2240 = vunpack.c.l.b16 %v338
    %v2241 = vunpack.c.h.b16 %v338
    %v2242 = vunpack.c.l.b16 %v339
    %v2243 = vunpack.c.h.b16 %v339
    %v2244 = vunpack.c.l.b16 %v340
    %v2245 = vunpack.c.h.b16 %v340
    %v2246 = vunpack.c.l.b16 %v341
    %v2247 = vunpack.c.h.b16 %v341
    %v2248 = vunpack.c.l.b16 %v342
    %v2249 = vunpack.c.h.b16 %v342
    %v2250 = vunpack.c.l.b16 %v343
    %v2251 = vunpack.c.h.b16 %v343
    %v2252 = vunpack.c.l.b16 %v344
    %v2253 = vunpack.c.h.b16 %v344
    %v2254 = vunpack.c.l.b16 %v345
    %v2255 = vunpack.c.h.b16 %v345
    %v2256 = vunpack.c.l.b16 %v346
    %v2257 = vunpack.c.h.b16 %v346
    %v2258 = vunpack.c.l.b16 %v347
    %v2259 = vunpack.c.h.b16 %v347
    %v2260 = vunpack.c.l.b16 %v348
    %v2261 = vunpack.c.h.b16 %v348
    %v2262 = vunpack.c.l.b16 %v349
    %v2263 = vunpack.c.h.b16 %v349
    %v2264 = vunpack.c.l.b16 %v350
    %v2265 = vunpack.c.h.b16 %v350
    %v2266 = vunpack.c.l.b16 %v351
    %v2267 = vunpack.c.h.b16 %v351
    %v2268 = vunpack.c.l.b16 %v352
    %v2269 = vunpack.c.h.b16 %v352
    %v2270 = vunpack.c.l.b16 %v353
    %v2271 = vunpack.c.h.b16 %v353
    %v2272 = vunpack.c.l.b16 %v354
    %v2273 = vunpack.c.h.b16 %v354
    %v2274 = vunpack.c.l.b16 %v355
    %v2275 = vunpack.c.h.b16 %v355
    %v2276 = vunpack.c.l.b16 %v356
    %v2277 = vunpack.c.h.b16 %v356
    %v2278 = vunpack.c.l.b16 %v357
    %v2279 = vunpack.c.h.b16 %v357
    %v2280 = vunpack.c.l.b16 %v358
    %v2281 = vunpack.c.h.b16 %v358
    %v2282 = vunpack.c.l.b16 %v359
    %v2283 = vunpack.c.h.b16 %v359
    %v2284 = vunpack.c.l.b16 %v360
    %v2285 = vunpack.c.h.b16 %v360
    %v2286 = vunpack.c.l.b16 %v361
    %v2287 = vunpack.c.h.b16 %v361
    %v2288 = vunpack.c.l.b16 %v362
    %v2289 = vunpack.c.h.b16 %v362
    %v2290 = vunpack.c.l.b16 %v363
    %v2291 = vunpack.c.h.b16 %v363
    %v2292 = vunpack.c.l.b16 %v364
    %v2293 = vunpack.c.h.b16 %v364
    %v2294 = vunpack.c.l.b16 %v365
    %v2295 = vunpack.c.h.b16 %v365
    %v2296 = vunpack.c.l.b16 %v366
    %v2297 = vunpack.c.h.b16 %v366
    %v2298 = vunpack.c.l.b16 %v367
    %v2299 = vunpack.c.h.b16 %v367
    %v2300 = vunpack.c.l.b16 %v368
    %v2301 = vunpack.c.h.b16 %v368
    %v2302 = vunpack.c.l.b16 %v369
    %v2303 = vunpack.c.h.b16 %v369
    %v2304 = vunpack.c.l.b16 %v370
    %v2305 = vunpack.c.h.b16 %v370
    %v2306 = vunpack.c.l.b16 %v371
    %v2307 = vunpack.c.h.b16 %v371
    %v2308 = vunpack.c.l.b16 %v372
    %v2309 = vunpack.c.h.b16 %v372
    %v2310 = vunpack.c.l.b16 %v373
    %v2311 = vunpack.c.h.b16 %v373
    %v2312 = vunpack.c.l.b16 %v374
    %v2313 = vunpack.c.h.b16 %v374
    %v2314 = vunpack.c.l.b16 %v375
    %v2315 = vunpack.c.h.b16 %v375
    %v2316 = vunpack.c.l.b16 %v376
    %v2317 = vunpack.c.h.b16 %v376
    %v2318 = vunpack.c.l.b16 %v377
    %v2319 = vunpack.c.h.b16 %v377
    %v2320 = vunpack.c.l.b16 %v378
    %v2321 = vunpack.c.h.b16 %v378
    %v2322 = vunpack.c.l.b16 %v379
    %v2323 = vunpack.c.h.b16 %v379
    %v2324 = vunpack.c.l.b16 %v380
    %v2325 = vunpack.c.h.b16 %v380
    %v2326 = vunpack.c.l.b16 %v381
    %v2327 = vunpack.c.h.b16 %v381
    %v2328 = vunpack.c.l.b16 %v382
    %v2329 = vunpack.c.h.b16 %v382
    %v2330 = vunpack.c.l.b16 %v383
    %v2331 = vunpack.c.h.b16 %v383
    %v2332 = vunpack.c.l.b16 %v384
    %v2333 = vunpack.c.h.b16 %v384
    %v2334 = vunpack.c.l.b16 %v385
    %v2335 = vunpack.c.h.b16 %v385
    %v2336 = vunpack.c.l.b16 %v386
    %v2337 = vunpack.c.h.b16 %v386
    %v2338 = vunpack.c.l.b16 %v387
    %v2339 = vunpack.c.h.b16 %v387
    %v2340 = vunpack.c.l.b16 %v388
    %v2341 = vunpack.c.h.b16 %v388
    %v2342 = vunpack.c.l.b16 %v389
    %v2343 = vunpack.c.h.b16 %v389
    %v2344 = vunpack.c.l.b16 %v390
    %v2345 = vunpack.c.h.b16 %v390
    %v2346 = vunpack.c.l.b16 %v391
    %v2347 = vunpack.c.h.b16 %v391
    %v2348 = vunpack.c.l.b16 %v392
    %v2349 = vunpack.c.h.b16 %v392
    %v2350 = vunpack.c.l.b16 %v393
    %v2351 = vunpack.c.h.b16 %v393
    %v2352 = vunpack.c.l.b16 %v394
    %v2353 = vunpack.c.h.b16 %v394
    %v2354 = vunpack.c.l.b16 %v395
    %v2355 = vunpack.c.h.b16 %v395
    %v2356 = vunpack.c.l.b16 %v396
    %v2357 = vunpack.c.h.b16 %v396
    %v2358 = vunpack.c.l.b16 %v397
    %v2359 = vunpack.c.h.b16 %v397
    %v2360 = vunpack.c.l.b16 %v398
    %v2361 = vunpack.c.h.b16 %v398
    %v2362 = vunpack.c.l.b16 %v399
    %v2363 = vunpack.c.h.b16 %v399
    %v2364 = vunpack.c.l.b16 %v400
    %v2365 = vunpack.c.h.b16 %v400
    %v2366 = vunpack.c.l.b16 %v401
    %v2367 = vunpack.c.h.b16 %v401
    %v2368 = vunpack.c.l.b16 %v402
    %v2369 = vunpack.c.h.b16 %v402
    %v2370 = vunpack.c.l.b16 %v403
    %v2371 = vunpack.c.h.b16 %v403
    %v2372 = vunpack.c.l.b16 %v404
    %v2373 = vunpack.c.h.b16 %v404
    %v2374 = vunpack.c.l.b16 %v405
    %v2375 = vunpack.c.h.b16 %v405
    %v2376 = vunpack.c.l.b16 %v406
    %v2377 = vunpack.c.h.b16 %v406
    %v2378 = vunpack.c.l.b16 %v407
    %v2379 = vunpack.c.h.b16 %v407
    %v2380 = vunpack.c.l.b16 %v408
    %v2381 = vunpack.c.h.b16 %v408
    %v2382 = vunpack.c.l.b16 %v409
    %v2383 = vunpack.c.h.b16 %v409
    %v2384 = vunpack.c.l.b16 %v410
    %v2385 = vunpack.c.h.b16 %v410
    %v2386 = vunpack.c.l.b16 %v411
    %v2387 = vunpack.c.h.b16 %v411
    %v2388 = vunpack.c.l.b16 %v412
    %v2389 = vunpack.c.h.b16 %v412
    %v2390 = vunpack.c.l.b16 %v413
    %v2391 = vunpack.c.h.b16 %v413
    %v2392 = vunpack.c.l.b16 %v414
    %v2393 = vunpack.c.h.b16 %v414
    %v2394 = vunpack.c.l.b16 %v415
    %v2395 = vunpack.c.h.b16 %v415
    %v2396 = vunpack.c.l.b16 %v416
    %v2397 = vunpack.c.h.b16 %v416
    %v2398 = vunpack.c.l.b16 %v417
    %v2399 = vunpack.c.h.b16 %v417
    %v2400 = vunpack.c.l.b16 %v418
    %v2401 = vunpack.c.h.b16 %v418
    %v2402 = vunpack.c.l.b16 %v419
    %v2403 = vunpack.c.h.b16 %v419
    %v2404 = vunpack.c.l.b16 %v420
    %v2405 = vunpack.c.h.b16 %v420
    %v2406 = vunpack.c.l.b16 %v421
    %v2407 = vunpack.c.h.b16 %v421
    %v2408 = vunpack.c.l.b16 %v422
    %v2409 = vunpack.c.h.b16 %v422
    %v2410 = vunpack.c.l.b16 %v423
    %v2411 = vunpack.c.h.b16 %v423
    %v2412 = vunpack.c.l.b16 %v424
    %v2413 = vunpack.c.h.b16 %v424
    %v2414 = vunpack.c.l.b16 %v425
    %v2415 = vunpack.c.h.b16 %v425
    %v2416 = vunpack.c.l.b16 %v426
    %v2417 = vunpack.c.h.b16 %v426
    %v2418 = vunpack.c.l.b16 %v427
    %v2419 = vunpack.c.h.b16 %v427
    %v2420 = vunpack.c.l.b16 %v428
    %v2421 = vunpack.c.h.b16 %v428
    %v2422 = vunpack.c.l.b16 %v429
    %v2423 = vunpack.c.h.b16 %v429
    %v2424 = vunpack.c.l.b16 %v430
    %v2425 = vunpack.c.h.b16 %v430
    %v2426 = vunpack.c.l.b16 %v431
    %v2427 = vunpack.c.h.b16 %v431
    %v2428 = vunpack.c.l.b16 %v432
    %v2429 = vunpack.c.h.b16 %v432
    %v2430 = vunpack.c.l.b16 %v433
    %v2431 = vunpack.c.h.b16 %v433
    %v2432 = vunpack.c.l.b16 %v434
    %v2433 = vunpack.c.h.b16 %v434
    %v2434 = vunpack.c.l.b16 %v435
    %v2435 = vunpack.c.h.b16 %v435
    %v2436 = vunpack.c.l.b16 %v436
    %v2437 = vunpack.c.h.b16 %v436
    %v2438 = vunpack.c.l.b16 %v437
    %v2439 = vunpack.c.h.b16 %v437
    %v2440 = vunpack.c.l.b16 %v438
    %v2441 = vunpack.c.h.b16 %v438
    %v2442 = vunpack.c.l.b16 %v439
    %v2443 = vunpack.c.h.b16 %v439
    %v2444 = vunpack.c.l.b16 %v440
    %v2445 = vunpack.c.h.b16 %v440
    %v2446 = vunpack.c.l.b16 %v441
    %v2447 = vunpack.c.h.b16 %v441
    %v2448 = vunpack.c.l.b16 %v442
    %v2449 = vunpack.c.h.b16 %v442
    %v2450 = vunpack.c.l.b16 %v443
    %v2451 = vunpack.c.h.b16 %v443
    %v2452 = vunpack.c.l.b16 %v444
    %v2453 = vunpack.c.h.b16 %v444
    %v2454 = vunpack.c.l.b16 %v445
    %v2455 = vunpack.c.h.b16 %v445
    %v2456 = vunpack.c.l.b16 %v446
    %v2457 = vunpack.c.h.b16 %v446
    %v2458 = vunpack.c.l.b16 %v447
    %v2459 = vunpack.c.h.b16 %v447
    %v2460 = vunpack.c.l.b16 %v448
    %v2461 = vunpack.c.h.b16 %v448
    %v2462 = vunpack.c.l.b16 %v449
    %v2463 = vunpack.c.h.b16 %v449
    %v2464 = vunpack.c.l.b16 %v450
    %v2465 = vunpack.c.h.b16 %v450
    %v2466 = vunpack.c.l.b16 %v451
    %v2467 = vunpack.c.h.b16 %v451
    %v2468 = vunpack.c.l.b16 %v452
    %v2469 = vunpack.c.h.b16 %v452
    %v2470 = vunpack.c.l.b16 %v453
    %v2471 = vunpack.c.h.b16 %v453
    %v2472 = vunpack.c.l.b16 %v454
    %v2473 = vunpack.c.h.b16 %v454
    %v2474 = vunpack.c.l.b16 %v455
    %v2475 = vunpack.c.h.b16 %v455
    %v2476 = vunpack.c.l.b16 %v456
    %v2477 = vunpack.c.h.b16 %v456
    %v2478 = vunpack.c.l.b16 %v457
    %v2479 = vunpack.c.h.b16 %v457
    %v2480 = vunpack.c.l.b16 %v458
    %v2481 = vunpack.c.h.b16 %v458
    %v2482 = vunpack.c.l.b16 %v459
    %v2483 = vunpack.c.h.b16 %v459
    %v2484 = vunpack.c.l.b16 %v460
    %v2485 = vunpack.c.h.b16 %v460
    %v2486 = vunpack.c.l.b16 %v461
    %v2487 = vunpack.c.h.b16 %v461
    %v2488 = vunpack.c.l.b16 %v462
    %v2489 = vunpack.c.h.b16 %v462
    %v2490 = vunpack.c.l.b16 %v463
    %v2491 = vunpack.c.h.b16 %v463
    %v2492 = vunpack.c.l.b16 %v464
    %v2493 = vunpack.c.h.b16 %v464
    %v2494 = vunpack.c.l.b16 %v465
    %v2495 = vunpack.c.h.b16 %v465
    %v2496 = vunpack.c.l.b16 %v466
    %v2497 = vunpack.c.h.b16 %v466
    %v2498 = vunpack.c.l.b16 %v467
    %v2499 = vunpack.c.h.b16 %v467
    %v2500 = vunpack.c.l.b16 %v468
    %v2501 = vunpack.c.h.b16 %v468
    %v2502 = vunpack.c.l.b16 %v469
    %v2503 = vunpack.c.h.b16 %v469
    %v2504 = vunpack.c.l.b16 %v470
    %v2505 = vunpack.c.h.b16 %v470
    %v2506 = vunpack.c.l.b16 %v471
    %v2507 = vunpack.c.h.b16 %v471
    %v2508 = vunpack.c.l.b16 %v472
    %v2509 = vunpack.c.h.b16 %v472
    %v2510 = vunpack.c.l.b16 %v473
    %v2511 = vunpack.c.h.b16 %v473
    %v2512 = vunpack.c.l.b16 %v474
    %v2513 = vunpack.c.h.b16 %v474
    %v2514 = vunpack.c.l.b16 %v475
    %v2515 = vunpack.c.h.b16 %v475
    %v2516 = vunpack.c.l.b16 %v476
    %v2517 = vunpack.c.h.b16 %v476
    %v2518 = vunpack.c.l.b16 %v477
    %v2519 = vunpack.c.h.b16 %v477
    %v2520 = vunpack.c.l.b16 %v478
    %v2521 = vunpack.c.h.b16 %v478
    %v2522 = vunpack.c.l.b16 %v479
    %v2523 = vunpack.c.h.b16 %v479
    %v2524 = vunpack.c.l.b16 %v480
    %v2525 = vunpack.c.h.b16 %v480
    %v2526 = vunpack.c.l.b16 %v481
    %v2527 = vunpack.c.h.b16 %v481
    %v2528 = vunpack.c.l.b16 %v482
    %v2529 = vunpack.c.h.b16 %v482
    %v2530 = vunpack.c.l.b16 %v483
    %v2531 = vunpack.c.h.b16 %v483
    %v2532 = vunpack.c.l.b16 %v484
    %v2533 = vunpack.c.h.b16 %v484
    %v2534 = vunpack.c.l.b16 %v485
    %v2535 = vunpack.c.h.b16 %v485
    %v2536 = vunpack.c.l.b16 %v486
    %v2537 = vunpack.c.h.b16 %v486
    %v2538 = vunpack.c.l.b16 %v487
    %v2539 = vunpack.c.h.b16 %v487
    %v2540 = vunpack.c.l.b16 %v488
    %v2541 = vunpack.c.h.b16 %v488
    %v2542 = vunpack.c.l.b16 %v489
    %v2543 = vunpack.c.h.b16 %v489
    %v2544 = vunpack.c.l.b16 %v490
    %v2545 = vunpack.c.h.b16 %v490
    %v2546 = vunpack.c.l.b16 %v491
    %v2547 = vunpack.c.h.b16 %v491
    %v2548 = vunpack.c.l.b16 %v492
    %v2549 = vunpack.c.h.b16 %v492
    %v2550 = vunpack.c.l.b16 %v493
    %v2551 = vunpack.c.h.b16 %v493
    %v2552 = vunpack.c.l.b16 %v494
    %v2553 = vunpack.c.h.b16 %v494
    %v2554 = vunpack.c.l.b16 %v495
    %v2555 = vunpack.c.h.b16 %v495
    %v2556 = vunpack.c.l.b16 %v496
    %v2557 = vunpack.c.h.b16 %v496
    %v2558 = vunpack.c.l.b16 %v497
    %v2559 = vunpack.c.h.b16 %v497
    %v2560 = vunpack.c.l.b16 %v498
    %v2561 = vunpack.c.h.b16 %v498
    %v2562 = vunpack.c.l.b16 %v499
    %v2563 = vunpack.c.h.b16 %v499
    %v2564 = vunpack.c.l.b16 %v500
    %v2565 = vunpack.c.h.b16 %v500
    %v2566 = vunpack.c.l.b16 %v501
    %v2567 = vunpack.c.h.b16 %v501
    %v2568 = vunpack.c.l.b16 %v502
    %v2569 = vunpack.c.h.b16 %v502
    %v2570 = vunpack.c.l.b16 %v503
    %v2571 = vunpack.c.h.b16 %v503
    %v2572 = vunpack.c.l.b16 %v504
    %v2573 = vunpack.c.h.b16 %v504
    %v2574 = vunpack.c.l.b16 %v505
    %v2575 = vunpack.c.h.b16 %v505
    %v2576 = vunpack.c.l.b16 %v506
    %v2577 = vunpack.c.h.b16 %v506
    %v2578 = vunpack.c.l.b16 %v507
    %v2579 = vunpack.c.h.b16 %v507
    %v2580 = vunpack.c.l.b16 %v508
    %v2581 = vunpack.c.h.b16 %v508
    %v2582 = vunpack.c.l.b16 %v509
    %v2583 = vunpack.c.h.b16 %v509
    %v2584 = vunpack.c.l.b16 %v510
    %v2585 = vunpack.c.h.b16 %v510
    %v2586 = vunpack.c.l.b16 %v511
    %v2587 = vunpack.c.h.b16 %v511
    %v2588 = vunpack.c.l.b16 %v512
    %v2589 = vunpack.c.h.b16 %v512
    %v2590 = vunpack.c.l.b16 %v513
    %v2591 = vunpack.c.h.b16 %v513
    %v2592 = vunpack.c.l.b16 %v514
    %v2593 = vunpack.c.h.b16 %v514
    %v2594 = vunpack.c.l.b16 %v515
    %v2595 = vunpack.c.h.b16 %v515
    %v2596 = vunpack.c.l.b16 %v516
    %v2597 = vunpack.c.h.b16 %v516
    %v2598 = vunpack.c.l.b16 %v517
    %v2599 = vunpack.c.h.b16 %v517
    %v2600 = vunpack.c.l.b16 %v518
    %v2601 = vunpack.c.h.b16 %v518
    %v2602 = vunpack.c.l.b16 %v519
    %v2603 = vunpack.c.h.b16 %v519
    %v2604 = vunpack.c.l.b16 %v520
    %v2605 = vunpack.c.h.b16 %v520
    %v2606 = vunpack.c.l.b16 %v521
    %v2607 = vunpack.c.h.b16 %v521
    %v2608 = vunpack.c.l.b16 %v522
    %v2609 = vunpack.c.h.b16 %v522
    %v2610 = vunpack.c.l.b16 %v523
    %v2611 = vunpack.c.h.b16 %v523
    %v2612 = vunpack.c.l.b16 %v524
    %v2613 = vunpack.c.h.b16 %v524
    %v2614 = vunpack.c.l.b16 %v525
    %v2615 = vunpack.c.h.b16 %v525
    %v2616 = vunpack.c.l.b16 %v526
    %v2617 = vunpack.c.h.b16 %v526
    %v2618 = vunpack.c.l.b16 %v527
    %v2619 = vunpack.c.h.b16 %v527
    %v2620 = vunpack.c.l.b16 %v528
    %v2621 = vunpack.c.h.b16 %v528
    %v2622 = vunpack.c.l.b16 %v529
    %v2623 = vunpack.c.h.b16 %v529
    %v2624 = vunpack.c.l.b16 %v530
    %v2625 = vunpack.c.h.b16 %v530
    %v2626 = vunpack.c.l.b16 %v531
    %v2627 = vunpack.c.h.b16 %v531
    %v2628 = vunpack.c.l.b16 %v532
    %v2629 = vunpack.c.h.b16 %v532
    %v2630 = vunpack.c.l.b16 %v533
    %v2631 = vunpack.c.h.b16 %v533
    %v2632 = vunpack.c.l.b16 %v534
    %v2633 = vunpack.c.h.b16 %v534
    %v2634 = vunpack.c.l.b16 %v535
    %v2635 = vunpack.c.h.b16 %v535
    %v2636 = vunpack.c.l.b16 %v536
    %v2637 = vunpack.c.h.b16 %v536
    %v2638 = vunpack.c.l.b16 %v537
    %v2639 = vunpack.c.h.b16 %v537
    %v2640 = vunpack.c.l.b16 %v538
    %v2641 = vunpack.c.h.b16 %v538
    %v2642 = vunpack.c.l.b16 %v539
    %v2643 = vunpack.c.h.b16 %v539
    %v2644 = vunpack.c.l.b16 %v540
    %v2645 = vunpack.c.h.b16 %v540
    %v2646 = vunpack.c.l.b16 %v541
    %v2647 = vunpack.c.h.b16 %v541
    %v2648 = vunpack.c.l.b16 %v542
    %v2649 = vunpack.c.h.b16 %v542
    %v2650 = vunpack.c.l.b16 %v543
    %v2651 = vunpack.c.h.b16 %v543
    %v2652 = vunpack.c.l.b16 %v544
    %v2653 = vunpack.c.h.b16 %v544
    %v2654 = vunpack.c.l.b16 %v545
    %v2655 = vunpack.c.h.b16 %v545
    %v2656 = vunpack.c.l.b16 %v546
    %v2657 = vunpack.c.h.b16 %v546
    %v2658 = vunpack.c.l.b16 %v547
    %v2659 = vunpack.c.h.b16 %v547
    %v2660 = vunpack.c.l.b16 %v548
    %v2661 = vunpack.c.h.b16 %v548
    %v2662 = vunpack.c.l.b16 %v549
    %v2663 = vunpack.c.h.b16 %v549
    %v2664 = vunpack.c.l.b16 %v550
    %v2665 = vunpack.c.h.b16 %v550
    %v2666 = vunpack.c.l.b16 %v551
    %v2667 = vunpack.c.h.b16 %v551
    %v2668 = vunpack.c.l.b16 %v552
    %v2669 = vunpack.c.h.b16 %v552
    %v2670 = vunpack.c.l.b16 %v553
    %v2671 = vunpack.c.h.b16 %v553
    %v2672 = vunpack.c.l.b16 %v554
    %v2673 = vunpack.c.h.b16 %v554
    %v2674 = vunpack.c.l.b16 %v555
    %v2675 = vunpack.c.h.b16 %v555
    %v2676 = vunpack.c.l.b16 %v556
    %v2677 = vunpack.c.h.b16 %v556
    %v2678 = vunpack.c.l.b16 %v557
    %v2679 = vunpack.c.h.b16 %v557
    %v2680 = vunpack.c.l.b16 %v558
    %v2681 = vunpack.c.h.b16 %v558
    %v2682 = vunpack.c.l.b16 %v559
    %v2683 = vunpack.c.h.b16 %v559
    %v2684 = vunpack.c.l.b16 %v560
    %v2685 = vunpack.c.h.b16 %v560
    %v2686 = vunpack.c.l.b16 %v561
    %v2687 = vunpack.c.h.b16 %v561
    %v2688 = vunpack.c.l.b16 %v562
    %v2689 = vunpack.c.h.b16 %v562
    %v2690 = vunpack.c.l.b16 %v563
    %v2691 = vunpack.c.h.b16 %v563
    %v2692 = vunpack.c.l.b16 %v564
    %v2693 = vunpack.c.h.b16 %v564
    %v2694 = vunpack.c.l.b16 %v565
    %v2695 = vunpack.c.h.b16 %v565
    %v2696 = vunpack.c.l.b16 %v566
    %v2697 = vunpack.c.h.b16 %v566
    %v2698 = vunpack.c.l.b16 %v567
    %v2699 = vunpack.c.h.b16 %v567
    %v2700 = vunpack.c.l.b16 %v568
    %v2701 = vunpack.c.h.b16 %v568
    %v2702 = vunpack.c.l.b16 %v569
    %v2703 = vunpack.c.h.b16 %v569
    %v2704 = vunpack.c.l.b16 %v570
    %v2705 = vunpack.c.h.b16 %v570
    %v2706 = vunpack.c.l.b16 %v571
    %v2707 = vunpack.c.h.b16 %v571
    %v2708 = vunpack.c.l.b16 %v572
    %v2709 = vunpack.c.h.b16 %v572
    %v2710 = vunpack.c.l.b16 %v573
    %v2711 = vunpack.c.h.b16 %v573
    %v2712 = vunpack.c.l.b16 %v574
    %v2713 = vunpack.c.h.b16 %v574
    %v2714 = vunpack.c.l.b16 %v575
    %v2715 = vunpack.c.h.b16 %v575
    %v2716 = vunpack.c.l.b16 %v576
    %v2717 = vunpack.c.h.b16 %v576
    %v2718 = vunpack.c.l.b16 %v577
    %v2719 = vunpack.c.h.b16 %v577
    %v2720 = vunpack.c.l.b16 %v578
    %v2721 = vunpack.c.h.b16 %v578
    %v2722 = vunpack.c.l.b16 %v579
    %v2723 = vunpack.c.h.b16 %v579
    %v2724 = vunpack.c.l.b16 %v580
    %v2725 = vunpack.c.h.b16 %v580
    %v2726 = vunpack.c.l.b16 %v581
    %v2727 = vunpack.c.h.b16 %v581
    %v2728 = vunpack.c.l.b16 %v582
    %v2729 = vunpack.c.h.b16 %v582
    %v2730 = vunpack.c.l.b16 %v583
    %v2731 = vunpack.c.h.b16 %v583
    %v2732 = vunpack.c.l.b16 %v584
    %v2733 = vunpack.c.h.b16 %v584
    %v2734 = vunpack.c.l.b16 %v585
    %v2735 = vunpack.c.h.b16 %v585
    %v2736 = vunpack.c.l.b16 %v586
    %v2737 = vunpack.c.h.b16 %v586
    %v2738 = vunpack.c.l.b16 %v587
    %v2739 = vunpack.c.h.b16 %v587
    %v2740 = vunpack.c.l.b16 %v588
    %v2741 = vunpack.c.h.b16 %v588
    %v2742 = vunpack.c.l.b16 %v589
    %v2743 = vunpack.c.h.b16 %v589
    %v2744 = vunpack.c.l.b16 %v590
    %v2745 = vunpack.c.h.b16 %v590
    %v2746 = vunpack.c.l.b16 %v591
    %v2747 = vunpack.c.h.b16 %v591
    %v2748 = vunpack.c.l.b16 %v592
    %v2749 = vunpack.c.h.b16 %v592
    %v2750 = vunpack.c.l.b16 %v593
    %v2751 = vunpack.c.h.b16 %v593
    %v2752 = vunpack.c.l.b16 %v594
    %v2753 = vunpack.c.h.b16 %v594
    %v2754 = vunpack.c.l.b16 %v595
    %v2755 = vunpack.c.h.b16 %v595
    %v2756 = vunpack.c.l.b16 %v596
    %v2757 = vunpack.c.h.b16 %v596
    %v2758 = vunpack.c.l.b16 %v597
    %v2759 = vunpack.c.h.b16 %v597
    %v2760 = vunpack.c.l.b16 %v598
    %v2761 = vunpack.c.h.b16 %v598
    %v2762 = vunpack.c.l.b16 %v599
    %v2763 = vunpack.c.h.b16 %v599
    %v2764 = vunpack.c.l.b16 %v600
    %v2765 = vunpack.c.h.b16 %v600
    %v2766 = vunpack.c.l.b16 %v601
    %v2767 = vunpack.c.h.b16 %v601
    %v2768 = vunpack.c.l.b16 %v602
    %v2769 = vunpack.c.h.b16 %v602
    %v2770 = vunpack.c.l.b16 %v603
    %v2771 = vunpack.c.h.b16 %v603
    %v2772 = vunpack.c.l.b16 %v604
    %v2773 = vunpack.c.h.b16 %v604
    %v2774 = vunpack.c.l.b16 %v605
    %v2775 = vunpack.c.h.b16 %v605
    %v2776 = vunpack.c.l.b16 %v606
    %v2777 = vunpack.c.h.b16 %v606
    %v2778 = vunpack.c.l.b16 %v607
    %v2779 = vunpack.c.h.b16 %v607
    %v2780 = vunpack.c.l.b16 %v608
    %v2781 = vunpack.c.h.b16 %v608
    %v2782 = vunpack.c.l.b16 %v609
    %v2783 = vunpack.c.h.b16 %v609
    %v2784 = vunpack.c.l.b16 %v610
    %v2785 = vunpack.c.h.b16 %v610
    %v2786 = vunpack.c.l.b16 %v611
    %v2787 = vunpack.c.h.b16 %v611
    %v2788 = vunpack.c.l.b16 %v612
    %v2789 = vunpack.c.h.b16 %v612
    %v2790 = vunpack.c.l.b16 %v613
    %v2791 = vunpack.c.h.b16 %v613
    %v2792 = vunpack.c.l.b16 %v614
    %v2793 = vunpack.c.h.b16 %v614
    %v2794 = vunpack.c.l.b16 %v615
    %v2795 = vunpack.c.h.b16 %v615
    %v2796 = vunpack.c.l.b16 %v616
    %v2797 = vunpack.c.h.b16 %v616
    %v2798 = vunpack.c.l.b16 %v617
    %v2799 = vunpack.c.h.b16 %v617
    %v2800 = vunpack.c.l.b16 %v618
    %v2801 = vunpack.c.h.b16 %v618
    %v2802 = vunpack.c.l.b16 %v619
    %v2803 = vunpack.c.h.b16 %v619
    %v2804 = vunpack.c.l.b16 %v620
    %v2805 = vunpack.c.h.b16 %v620
    %v2806 = vunpack.c.l.b16 %v621
    %v2807 = vunpack.c.h.b16 %v621
    %v2808 = vunpack.c.l.b16 %v622
    %v2809 = vunpack.c.h.b16 %v622
    %v2810 = vunpack.c.l.b16 %v623
    %v2811 = vunpack.c.h.b16 %v623
    %v2812 = vunpack.c.l.b16 %v624
    %v2813 = vunpack.c.h.b16 %v624
    %v2814 = vunpack.c.l.b16 %v625
    %v2815 = vunpack.c.h.b16 %v625
    %v2816 = vunpack.c.l.b16 %v626
    %v2817 = vunpack.c.h.b16 %v626
    %v2818 = vunpack.c.l.b16 %v627
    %v2819 = vunpack.c.h.b16 %v627
    %v2820 = vunpack.c.l.b16 %v628
    %v2821 = vunpack.c.h.b16 %v628
    %v2822 = vunpack.c.l.b16 %v629
    %v2823 = vunpack.c.h.b16 %v629
    %v2824 = vunpack.c.l.b16 %v630
    %v2825 = vunpack.c.h.b16 %v630
    %v2826 = vunpack.c.l.b16 %v631
    %v2827 = vunpack.c.h.b16 %v631
    %v2828 = vunpack.c.l.b16 %v632
    %v2829 = vunpack.c.h.b16 %v632
    %v2830 = vunpack.c.l.b16 %v633
    %v2831 = vunpack.c.h.b16 %v633
    %v2832 = vunpack.c.l.b16 %v634
    %v2833 = vunpack.c.h.b16 %v634
    %v2834 = vunpack.c.l.b16 %v635
    %v2835 = vunpack.c.h.b16 %v635
    %v2836 = vunpack.c.l.b16 %v636
    %v2837 = vunpack.c.h.b16 %v636
    %v2838 = vunpack.c.l.b16 %v637
    %v2839 = vunpack.c.h.b16 %v637
    %v2840 = vunpack.c.l.b16 %v638
    %v2841 = vunpack.c.h.b16 %v638
    %v2842 = vunpack.c.l.b16 %v639
    %v2843 = vunpack.c.h.b16 %v639
    %v2844 = vunpack.c.l.b16 %v640
    %v2845 = vunpack.c.h.b16 %v640
    %v2846 = vunpack.c.l.b16 %v641
    %v2847 = vunpack.c.h.b16 %v641
    %v2848 = vunpack.c.l.b16 %v642
    %v2849 = vunpack.c.h.b16 %v642
    %v2850 = vunpack.c.l.b16 %v643
    %v2851 = vunpack.c.h.b16 %v643
    %v2852 = vunpack.c.l.b16 %v644
    %v2853 = vunpack.c.h.b16 %v644
    %v2854 = vunpack.c.l.b16 %v645
    %v2855 = vunpack.c.h.b16 %v645
    %v2856 = vunpack.c.l.b16 %v646
    %v2857 = vunpack.c.h.b16 %v646
    %v2858 = vunpack.c.l.b16 %v647
    %v2859 = vunpack.c.h.b16 %v647
    %v2860 = vunpack.c.l.b16 %v648
    %v2861 = vunpack.c.h.b16 %v648
    %v2862 = vunpack.c.l.b16 %v649
    %v2863 = vunpack.c.h.b16 %v649
    %v2864 = vunpack.c.l.b16 %v650
    %v2865 = vunpack.c.h.b16 %v650
    %v2866 = vunpack.c.l.b16 %v651
    %v2867 = vunpack.c.h.b16 %v651
    %v2868 = vunpack.c.l.b16 %v652
    %v2869 = vunpack.c.h.b16 %v652
    %v2870 = vunpack.c.l.b16 %v653
    %v2871 = vunpack.c.h.b16 %v653
    %v2872 = vunpack.c.l.b16 %v654
    %v2873 = vunpack.c.h.b16 %v654
    %v2874 = vunpack.c.l.b16 %v655
    %v2875 = vunpack.c.h.b16 %v655
    %v2876 = vunpack.c.l.b16 %v656
    %v2877 = vunpack.c.h.b16 %v656
    %v2878 = vunpack.c.l.b16 %v657
    %v2879 = vunpack.c.h.b16 %v657
    %v2880 = vunpack.c.l.b16 %v658
    %v2881 = vunpack.c.h.b16 %v658
    %v2882 = vunpack.c.l.b16 %v659
    %v2883 = vunpack.c.h.b16 %v659
    %v2884 = vunpack.c.l.b16 %v660
    %v2885 = vunpack.c.h.b16 %v660
    %v2886 = vunpack.c.l.b16 %v661
    %v2887 = vunpack.c.h.b16 %v661
    %v2888 = vunpack.c.l.b16 %v662
    %v2889 = vunpack.c.h.b16 %v662
    %v2890 = vunpack.c.l.b16 %v663
    %v2891 = vunpack.c.h.b16 %v663
    %v2892 = vunpack.c.l.b16 %v664
    %v2893 = vunpack.c.h.b16 %v664
    %v2894 = vunpack.c.l.b16 %v665
    %v2895 = vunpack.c.h.b16 %v665
    %v2896 = vunpack.c.l.b16 %v666
    %v2897 = vunpack.c.h.b16 %v666
    %v2898 = vunpack.c.l.b16 %v667
    %v2899 = vunpack.c.h.b16 %v667
    %v2900 = vunpack.c.l.b16 %v668
    %v2901 = vunpack.c.h.b16 %v668
    %v2902 = vunpack.c.l.b16 %v669
    %v2903 = vunpack.c.h.b16 %v669
    %v2904 = vunpack.c.l.b16 %v670
    %v2905 = vunpack.c.h.b16 %v670
    %v2906 = vunpack.c.l.b16 %v671
    %v2907 = vunpack.c.h.b16 %v671
    %v2908 = vunpack.c.l.b16 %v672
    %v2909 = vunpack.c.h.b16 %v672
    %v2910 = vunpack.c.l.b16 %v673
    %v2911 = vunpack.c.h.b16 %v673
    %v2912 = vunpack.c.l.b16 %v674
    %v2913 = vunpack.c.h.b16 %v674
    %v2914 = vunpack.c.l.b16 %v675
    %v2915 = vunpack.c.h.b16 %v675
    %v2916 = vunpack.c.l.b16 %v676
    %v2917 = vunpack.c.h.b16 %v676
    %v2918 = vunpack.c.l.b16 %v677
    %v2919 = vunpack.c.h.b16 %v677
    %v2920 = vunpack.c.l.b16 %v678
    %v2921 = vunpack.c.h.b16 %v678
    %v2922 = vunpack.c.l.b16 %v679
    %v2923 = vunpack.c.h.b16 %v679
    %v2924 = vunpack.c.l.b16 %v680
    %v2925 = vunpack.c.h.b16 %v680
    %v2926 = vunpack.c.l.b16 %v681
    %v2927 = vunpack.c.h.b16 %v681
    %v2928 = vunpack.c.l.b16 %v682
    %v2929 = vunpack.c.h.b16 %v682
    %v2930 = vunpack.c.l.b16 %v683
    %v2931 = vunpack.c.h.b16 %v683
    %v2932 = vunpack.c.l.b16 %v684
    %v2933 = vunpack.c.h.b16 %v684
    %v2934 = vunpack.c.l.b16 %v685
    %v2935 = vunpack.c.h.b16 %v685
    %v2936 = vunpack.c.l.b16 %v686
    %v2937 = vunpack.c.h.b16 %v686
    %v2938 = vunpack.c.l.b16 %v687
    %v2939 = vunpack.c.h.b16 %v687
    %v2940 = vunpack.c.l.b16 %v688
    %v2941 = vunpack.c.h.b16 %v688
    %v2942 = vunpack.c.l.b16 %v689
    %v2943 = vunpack.c.h.b16 %v689
    %v2944 = vunpack.c.l.b16 %v690
    %v2945 = vunpack.c.h.b16 %v690
    %v2946 = vunpack.c.l.b16 %v691
    %v2947 = vunpack.c.h.b16 %v691
    %v2948 = vunpack.c.l.b16 %v692
    %v2949 = vunpack.c.h.b16 %v692
    %v2950 = vunpack.c.l.b16 %v693
    %v2951 = vunpack.c.h.b16 %v693
    %v2952 = vunpack.c.l.b16 %v694
    %v2953 = vunpack.c.h.b16 %v694
    %v2954 = vunpack.c.l.b16 %v695
    %v2955 = vunpack.c.h.b16 %v695
    %v2956 = vunpack.c.l.b16 %v696
    %v2957 = vunpack.c.h.b16 %v696
    %v2958 = vunpack.c.l.b16 %v697
    %v2959 = vunpack.c.h.b16 %v697
    %v2960 = vunpack.c.l.b16 %v698
    %v2961 = vunpack.c.h.b16 %v698
    %v2962 = vunpack.c.l.b16 %v699
    %v2963 = vunpack.c.h.b16 %v699
    %v2964 = vunpack.c.l.b16 %v700
    %v2965 = vunpack.c.h.b16 %v700
    %v2966 = vunpack.c.l.b16 %v701
    %v2967 = vunpack.c.h.b16 %v701
    %v2968 = vunpack.c.l.b16 %v702
    %v2969 = vunpack.c.h.b16 %v702
    %v2970 = vunpack.c.l.b16 %v703
    %v2971 = vunpack.c.h.b16 %v703
    %v2972 = vunpack.c.l.b16 %v704
    %v2973 = vunpack.c.h.b16 %v704
    %v2974 = vunpack.c.l.b16 %v705
    %v2975 = vunpack.c.h.b16 %v705
    %v2976 = vunpack.c.l.b16 %v706
    %v2977 = vunpack.c.h.b16 %v706
    %v2978 = vunpack.c.l.b16 %v707
    %v2979 = vunpack.c.h.b16 %v707
    %v2980 = vunpack.c.l.b16 %v708
    %v2981 = vunpack.c.h.b16 %v708
    %v2982 = vunpack.c.l.b16 %v709
    %v2983 = vunpack.c.h.b16 %v709
    %v2984 = vunpack.c.l.b16 %v710
    %v2985 = vunpack.c.h.b16 %v710
    %v2986 = vunpack.c.l.b16 %v711
    %v2987 = vunpack.c.h.b16 %v711
    %v2988 = vunpack.c.l.b16 %v712
    %v2989 = vunpack.c.h.b16 %v712
    %v2990 = vunpack.c.l.b16 %v713
    %v2991 = vunpack.c.h.b16 %v713
    %v2992 = vunpack.c.l.b16 %v714
    %v2993 = vunpack.c.h.b16 %v714
    %v2994 = vunpack.c.l.b16 %v715
    %v2995 = vunpack.c.h.b16 %v715
    %v2996 = vunpack.c.l.b16 %v716
    %v2997 = vunpack.c.h.b16 %v716
    %v2998 = vunpack.c.l.b16 %v717
    %v2999 = vunpack.c.h.b16 %v717
    %v3000 = vunpack.c.l.b16 %v718
    %v3001 = vunpack.c.h.b16 %v718
    %v3002 = vunpack.c.l.b16 %v719
    %v3003 = vunpack.c.h.b16 %v719
    %v3004 = vunpack.c.l.b16 %v720
    %v3005 = vunpack.c.h.b16 %v720
    %v3006 = vunpack.c.l.b16 %v721
    %v3007 = vunpack.c.h.b16 %v721
    %v3008 = vunpack.c.l.b16 %v722
    %v3009 = vunpack.c.h.b16 %v722
    %v3010 = vunpack.c.l.b16 %v723
    %v3011 = vunpack.c.h.b16 %v723
    %v3012 = vunpack.c.l.b16 %v724
    %v3013 = vunpack.c.h.b16 %v724
    %v3014 = vunpack.c.l.b16 %v725
    %v3015 = vunpack.c.h.b16 %v725
    %v3016 = vunpack.c.l.b16 %v726
    %v3017 = vunpack.c.h.b16 %v726
    %v3018 = vunpack.c.l.b16 %v727
    %v3019 = vunpack.c.h.b16 %v727
    %v3020 = vunpack.c.l.b16 %v728
    %v3021 = vunpack.c.h.b16 %v728
    %v3022 = vunpack.c.l.b16 %v729
    %v3023 = vunpack.c.h.b16 %v729
    %v3024 = vunpack.c.l.b16 %v730
    %v3025 = vunpack.c.h.b16 %v730
    %v3026 = vunpack.c.l.b16 %v731
    %v3027 = vunpack.c.h.b16 %v731
    %v3028 = vunpack.c.l.b16 %v732
    %v3029 = vunpack.c.h.b16 %v732
    %v3030 = vunpack.c.l.b16 %v733
    %v3031 = vunpack.c.h.b16 %v733
    %v3032 = vunpack.c.l.b16 %v734
    %v3033 = vunpack.c.h.b16 %v734
    %v3034 = vunpack.c.l.b16 %v735
    %v3035 = vunpack.c.h.b16 %v735
    %v3036 = vunpack.c.l.b16 %v736
    %v3037 = vunpack.c.h.b16 %v736
    %v3038 = vunpack.c.l.b16 %v737
    %v3039 = vunpack.c.h.b16 %v737
    %v3040 = vunpack.c.l.b16 %v738
    %v3041 = vunpack.c.h.b16 %v738
    %v3042 = vunpack.c.l.b16 %v739
    %v3043 = vunpack.c.h.b16 %v739
    %v3044 = vunpack.c.l.b16 %v740
    %v3045 = vunpack.c.h.b16 %v740
    %v3046 = vunpack.c.l.b16 %v741
    %v3047 = vunpack.c.h.b16 %v741
    %v3048 = vunpack.c.l.b16 %v742
    %v3049 = vunpack.c.h.b16 %v742
    %v3050 = vunpack.c.l.b16 %v743
    %v3051 = vunpack.c.h.b16 %v743
    %v3052 = vunpack.c.l.b16 %v744
    %v3053 = vunpack.c.h.b16 %v744
    %v3054 = vunpack.c.l.b16 %v745
    %v3055 = vunpack.c.h.b16 %v745
    %v3056 = vunpack.c.l.b16 %v746
    %v3057 = vunpack.c.h.b16 %v746
    %v3058 = vunpack.c.l.b16 %v747
    %v3059 = vunpack.c.h.b16 %v747
    %v3060 = vunpack.c.l.b16 %v748
    %v3061 = vunpack.c.h.b16 %v748
    %v3062 = vunpack.c.l.b16 %v749
    %v3063 = vunpack.c.h.b16 %v749
    %v3064 = vunpack.c.l.b16 %v750
    %v3065 = vunpack.c.h.b16 %v750
    %v3066 = vunpack.c.l.b16 %v751
    %v3067 = vunpack.c.h.b16 %v751
    %v3068 = vunpack.c.l.b16 %v752
    %v3069 = vunpack.c.h.b16 %v752
    %v3070 = vunpack.c.l.b16 %v753
    %v3071 = vunpack.c.h.b16 %v753
    %v3072 = vunpack.c.l.b16 %v754
    %v3073 = vunpack.c.h.b16 %v754
    %v3074 = vunpack.c.l.b16 %v755
    %v3075 = vunpack.c.h.b16 %v755
    %v3076 = vunpack.c.l.b16 %v756
    %v3077 = vunpack.c.h.b16 %v756
    %v3078 = vunpack.c.l.b16 %v757
    %v3079 = vunpack.c.h.b16 %v757
    %v3080 = vunpack.c.l.b16 %v758
    %v3081 = vunpack.c.h.b16 %v758
    %v3082 = vunpack.c.l.b16 %v759
    %v3083 = vunpack.c.h.b16 %v759
    %v3084 = vunpack.c.l.b16 %v760
    %v3085 = vunpack.c.h.b16 %v760
    %v3086 = vunpack.c.l.b16 %v761
    %v3087 = vunpack.c.h.b16 %v761
    %v3088 = vunpack.c.l.b16 %v762
    %v3089 = vunpack.c.h.b16 %v762
    %v3090 = vunpack.c.l.b16 %v763
    %v3091 = vunpack.c.h.b16 %v763
    %v3092 = vunpack.c.l.b16 %v764
    %v3093 = vunpack.c.h.b16 %v764
    %v3094 = vunpack.c.l.b16 %v765
    %v3095 = vunpack.c.h.b16 %v765
    %v3096 = vunpack.c.l.b16 %v766
    %v3097 = vunpack.c.h.b16 %v766
    %v3098 = vunpack.c.l.b16 %v767
    %v3099 = vunpack.c.h.b16 %v767
    %v3100 = vunpack.c.l.b16 %v768
    %v3101 = vunpack.c.h.b16 %v768
    %v3102 = vunpack.c.l.b16 %v769
    %v3103 = vunpack.c.h.b16 %v769
    %v3104 = vunpack.c.l.b16 %v770
    %v3105 = vunpack.c.h.b16 %v770
    %v3106 = vunpack.c.l.b16 %v771
    %v3107 = vunpack.c.h.b16 %v771
    %v3108 = vunpack.c.l.b16 %v772
    %v3109 = vunpack.c.h.b16 %v772
    %v3110 = vunpack.c.l.b16 %v773
    %v3111 = vunpack.c.h.b16 %v773
    %v3112 = vunpack.c.l.b16 %v774
    %v3113 = vunpack.c.h.b16 %v774
    %v3114 = vunpack.c.l.b16 %v775
    %v3115 = vunpack.c.h.b16 %v775
    %v3116 = vunpack.c.l.b16 %v776
    %v3117 = vunpack.c.h.b16 %v776
    %v3118 = vunpack.c.l.b16 %v777
    %v3119 = vunpack.c.h.b16 %v777
    %v3120 = vunpack.c.l.b16 %v778
    %v3121 = vunpack.c.h.b16 %v778
    %v3122 = vunpack.c.l.b16 %v779
    %v3123 = vunpack.c.h.b16 %v779
    %v3124 = vunpack.c.l.b16 %v780
    %v3125 = vunpack.c.h.b16 %v780
    %v3126 = vunpack.c.l.b16 %v781
    %v3127 = vunpack.c.h.b16 %v781
    %v3128 = vunpack.c.l.b16 %v782
    %v3129 = vunpack.c.h.b16 %v782
    %v3130 = vunpack.c.l.b16 %v783
    %v3131 = vunpack.c.h.b16 %v783
    %v3132 = vunpack.c.l.b16 %v784
    %v3133 = vunpack.c.h.b16 %v784
    %v3134 = vunpack.c.l.b16 %v785
    %v3135 = vunpack.c.h.b16 %v785
    %v3136 = vunpack.c.l.b16 %v786
    %v3137 = vunpack.c.h.b16 %v786
    %v3138 = vunpack.c.l.b16 %v787
    %v3139 = vunpack.c.h.b16 %v787
    %v3140 = vunpack.c.l.b16 %v788
    %v3141 = vunpack.c.h.b16 %v788
    %v3142 = vunpack.c.l.b16 %v789
    %v3143 = vunpack.c.h.b16 %v789
    %v3144 = vunpack.c.l.b16 %v790
    %v3145 = vunpack.c.h.b16 %v790
    %v3146 = vunpack.c.l.b16 %v791
    %v3147 = vunpack.c.h.b16 %v791
    %v3148 = vunpack.c.l.b16 %v792
    %v3149 = vunpack.c.h.b16 %v792
    %v3150 = vunpack.c.l.b16 %v793
    %v3151 = vunpack.c.h.b16 %v793
    %v3152 = vunpack.c.l.b16 %v794
    %v3153 = vunpack.c.h.b16 %v794
    %v3154 = vunpack.c.l.b16 %v795
    %v3155 = vunpack.c.h.b16 %v795
    %v3156 = vunpack.c.l.b16 %v796
    %v3157 = vunpack.c.h.b16 %v796
    %v3158 = vunpack.c.l.b16 %v797
    %v3159 = vunpack.c.h.b16 %v797
    %v3160 = vunpack.c.l.b16 %v798
    %v3161 = vunpack.c.h.b16 %v798
    %v3162 = vunpack.c.l.b16 %v799
    %v3163 = vunpack.c.h.b16 %v799
    %v3164 = vunpack.c.l.b16 %v800
    %v3165 = vunpack.c.h.b16 %v800
    %v3166 = vunpack.c.l.b16 %v801
    %v3167 = vunpack.c.h.b16 %v801
    %v3168 = vunpack.c.l.b16 %v802
    %v3169 = vunpack.c.h.b16 %v802
    %v3170 = vunpack.c.l.b16 %v803
    %v3171 = vunpack.c.h.b16 %v803
    %v3172 = vunpack.c.l.b16 %v804
    %v3173 = vunpack.c.h.b16 %v804
    %v3174 = vunpack.c.l.b16 %v805
    %v3175 = vunpack.c.h.b16 %v805
    %v3176 = vunpack.c.l.b16 %v806
    %v3177 = vunpack.c.h.b16 %v806
    %v3178 = vunpack.c.l.b16 %v807
    %v3179 = vunpack.c.h.b16 %v807
    %v3180 = vunpack.c.l.b16 %v808
    %v3181 = vunpack.c.h.b16 %v808
    %v3182 = vunpack.c.l.b16 %v809
    %v3183 = vunpack.c.h.b16 %v809
    %v3184 = vunpack.c.l.b16 %v810
    %v3185 = vunpack.c.h.b16 %v810
    %v3186 = vunpack.c.l.b16 %v811
    %v3187 = vunpack.c.h.b16 %v811
    %v3188 = vunpack.c.l.b16 %v812
    %v3189 = vunpack.c.h.b16 %v812
    %v3190 = vunpack.c.l.b16 %v813
    %v3191 = vunpack.c.h.b16 %v813
    %v3192 = vunpack.c.l.b16 %v814
    %v3193 = vunpack.c.h.b16 %v814
    %v3194 = vunpack.c.l.b16 %v815
    %v3195 = vunpack.c.h.b16 %v815
    %v3196 = vunpack.c.l.b16 %v816
    %v3197 = vunpack.c.h.b16 %v816
    %v3198 = vunpack.c.l.b16 %v817
    %v3199 = vunpack.c.h.b16 %v817
    %v3200 = vunpack.c.l.b16 %v818
    %v3201 = vunpack.c.h.b16 %v818
    %v3202 = vunpack.c.l.b16 %v819
    %v3203 = vunpack.c.h.b16 %v819
    %v3204 = vunpack.c.l.b16 %v820
    %v3205 = vunpack.c.h.b16 %v820
    %v3206 = vunpack.c.l.b16 %v821
    %v3207 = vunpack.c.h.b16 %v821
    %v3208 = vunpack.c.l.b16 %v822
    %v3209 = vunpack.c.h.b16 %v822
    %v3210 = vunpack.c.l.b16 %v823
    %v3211 = vunpack.c.h.b16 %v823
    %v3212 = vunpack.c.l.b16 %v824
    %v3213 = vunpack.c.h.b16 %v824
    %v3214 = vunpack.c.l.b16 %v825
    %v3215 = vunpack.c.h.b16 %v825
    %v3216 = vunpack.c.l.b16 %v826
    %v3217 = vunpack.c.h.b16 %v826
    %v3218 = vunpack.c.l.b16 %v827
    %v3219 = vunpack.c.h.b16 %v827
    %v3220 = vunpack.c.l.b16 %v828
    %v3221 = vunpack.c.h.b16 %v828
    %v3222 = vunpack.c.l.b16 %v829
    %v3223 = vunpack.c.h.b16 %v829
    %v3224 = vunpack.c.l.b16 %v830
    %v3225 = vunpack.c.h.b16 %v830
    %v3226 = vunpack.c.l.b16 %v831
    %v3227 = vunpack.c.h.b16 %v831
    %v3228 = vunpack.c.l.b16 %v832
    %v3229 = vunpack.c.h.b16 %v832
    %v3230 = vunpack.c.l.b16 %v833
    %v3231 = vunpack.c.h.b16 %v833
    %v3232 = vunpack.c.l.b16 %v834
    %v3233 = vunpack.c.h.b16 %v834
    %v3234 = vunpack.c.l.b16 %v835
    %v3235 = vunpack.c.h.b16 %v835
    %v3236 = vunpack.c.l.b16 %v836
    %v3237 = vunpack.c.h.b16 %v836
    %v3238 = vunpack.c.l.b16 %v837
    %v3239 = vunpack.c.h.b16 %v837
    %v3240 = vunpack.c.l.b16 %v838
    %v3241 = vunpack.c.h.b16 %v838
    %v3242 = vunpack.c.l.b16 %v839
    %v3243 = vunpack.c.h.b16 %v839
    %v3244 = vunpack.c.l.b16 %v840
    %v3245 = vunpack.c.h.b16 %v840
    %v3246 = vunpack.c.l.b16 %v841
    %v3247 = vunpack.c.h.b16 %v841
    %v3248 = vunpack.c.l.b16 %v842
    %v3249 = vunpack.c.h.b16 %v842
    %v3250 = vunpack.c.l.b16 %v843
    %v3251 = vunpack.c.h.b16 %v843
    %v3252 = vunpack.c.l.b16 %v844
    %v3253 = vunpack.c.h.b16 %v844
    %v3254 = vunpack.c.l.b16 %v845
    %v3255 = vunpack.c.h.b16 %v845
    %v3256 = vunpack.c.l.b16 %v846
    %v3257 = vunpack.c.h.b16 %v846
    %v3258 = vunpack.c.l.b16 %v847
    %v3259 = vunpack.c.h.b16 %v847
    %v3260 = vunpack.c.l.b16 %v848
    %v3261 = vunpack.c.h.b16 %v848
    %v3262 = vunpack.c.l.b16 %v849
    %v3263 = vunpack.c.h.b16 %v849
    %v3264 = vunpack.c.l.b16 %v850
    %v3265 = vunpack.c.h.b16 %v850
    %v3266 = vunpack.c.l.b16 %v851
    %v3267 = vunpack.c.h.b16 %v851
    %v3268 = vunpack.c.l.b16 %v852
    %v3269 = vunpack.c.h.b16 %v852
    %v3270 = vunpack.c.l.b16 %v853
    %v3271 = vunpack.c.h.b16 %v853
    %v3272 = vunpack.c.l.b16 %v854
    %v3273 = vunpack.c.h.b16 %v854
    %v3274 = vunpack.c.l.b16 %v855
    %v3275 = vunpack.c.h.b16 %v855
    %v3276 = vunpack.c.l.b16 %v856
    %v3277 = vunpack.c.h.b16 %v856
    %v3278 = vunpack.c.l.b16 %v857
    %v3279 = vunpack.c.h.b16 %v857
    %v3280 = vunpack.c.l.b16 %v858
    %v3281 = vunpack.c.h.b16 %v858
    %v3282 = vunpack.c.l.b16 %v859
    %v3283 = vunpack.c.h.b16 %v859
    %v3284 = vunpack.c.l.b16 %v860
    %v3285 = vunpack.c.h.b16 %v860
    %v3286 = vunpack.c.l.b16 %v861
    %v3287 = vunpack.c.h.b16 %v861
    %v3288 = vunpack.c.l.b16 %v862
    %v3289 = vunpack.c.h.b16 %v862
    %v3290 = vunpack.c.l.b16 %v863
    %v3291 = vunpack.c.h.b16 %v863
    %v3292 = vunpack.c.l.b16 %v864
    %v3293 = vunpack.c.h.b16 %v864
    %v3294 = vunpack.c.l.b16 %v865
    %v3295 = vunpack.c.h.b16 %v865
    %v3296 = vunpack.c.l.b16 %v866
    %v3297 = vunpack.c.h.b16 %v866
    %v3298 = vunpack.c.l.b16 %v867
    %v3299 = vunpack.c.h.b16 %v867
    %v3300 = vunpack.c.l.b16 %v868
    %v3301 = vunpack.c.h.b16 %v868
    %v3302 = vunpack.c.l.b16 %v869
    %v3303 = vunpack.c.h.b16 %v869
    %v3304 = vunpack.c.l.b16 %v870
    %v3305 = vunpack.c.h.b16 %v870
    %v3306 = vunpack.c.l.b16 %v871
    %v3307 = vunpack.c.h.b16 %v871
    %v3308 = vunpack.c.l.b16 %v872
    %v3309 = vunpack.c.h.b16 %v872
    %v3310 = vunpack.c.l.b16 %v873
    %v3311 = vunpack.c.h.b16 %v873
    %v3312 = vunpack.c.l.b16 %v874
    %v3313 = vunpack.c.h.b16 %v874
    %v3314 = vpack.c.b16 %v1754, %v1746
    %v3315 = vpack.c.b16 %v1755, %v1747
    %v3316 = vpack.c.b16 %v1756, %v1748
    %v3317 = vpack.c.b16 %v1757, %v1749
    %v3318 = vpack.c.b16 %v1758, %v1750
    %v3319 = vpack.c.b16 %v1759, %v1751
    %v3320 = vpack.c.b16 %v1760, %v1752
    %v3321 = vpack.c.b16 %v1761, %v1753
    %v3322 = vpack.c.b16 %v1770, %v1762
    %v3323 = vpack.c.b16 %v1771, %v1763
    %v3324 = vpack.c.b16 %v1772, %v1764
    %v3325 = vpack.c.b16 %v1773, %v1765
    %v3326 = vpack.c.b16 %v1774, %v1766
    %v3327 = vpack.c.b16 %v1775, %v1767
    %v3328 = vpack.c.b16 %v1776, %v1768
    %v3329 = vpack.c.b16 %v1777, %v1769
    %v3330 = vpack.c.b16 %v1786, %v1778
    %v3331 = vpack.c.b16 %v1787, %v1779
    %v3332 = vpack.c.b16 %v1788, %v1780
    %v3333 = vpack.c.b16 %v1789, %v1781
    %v3334 = vpack.c.b16 %v1790, %v1782
    %v3335 = vpack.c.b16 %v1791, %v1783
    %v3336 = vpack.c.b16 %v1792, %v1784
    %v3337 = vpack.c.b16 %v1793, %v1785
    %v3338 = vpack.c.b16 %v1802, %v1794
    %v3339 = vpack.c.b16 %v1803, %v1795
    %v3340 = vpack.c.b16 %v1804, %v1796
    %v3341 = vpack.c.b16 %v1805, %v1797
    %v3342 = vpack.c.b16 %v1806, %v1798
    %v3343 = vpack.c.b16 %v1807, %v1799
    %v3344 = vpack.c.b16 %v1808, %v1800
    %v3345 = vpack.c.b16 %v1809, %v1801
    %v3346 = vpack.c.b16 %v1818, %v1810
    %v3347 = vpack.c.b16 %v1819, %v1811
    %v3348 = vpack.c.b16 %v1820, %v1812
    %v3349 = vpack.c.b16 %v1821, %v1813
    %v3350 = vpack.c.b16 %v1822, %v1814
    %v3351 = vpack.c.b16 %v1823, %v1815
    %v3352 = vpack.c.b16 %v1824, %v1816
    %v3353 = vpack.c.b16 %v1825, %v1817
    %v3354 = vpack.c.b16 %v1834, %v1826
    %v3355 = vpack.c.b16 %v1835, %v1827
    %v3356 = vpack.c.b16 %v1836, %v1828
    %v3357 = vpack.c.b16 %v1837, %v1829
    %v3358 = vpack.c.b16 %v1838, %v1830
    %v3359 = vpack.c.b16 %v1839, %v1831
    %v3360 = vpack.c.b16 %v1840, %v1832
    %v3361 = vpack.c.b16 %v1841, %v1833
    %v3362 = vpack.c.b16 %v1850, %v1842
    %v3363 = vpack.c.b16 %v1851, %v1843
    %v3364 = vpack.c.b16 %v1852, %v1844
    %v3365 = vpack.c.b16 %v1853, %v1845
    %v3366 = vpack.c.b16 %v1854, %v1846
    %v3367 = vpack.c.b16 %v1855, %v1847
    %v3368 = vpack.c.b16 %v1856, %v1848
    %v3369 = vpack.c.b16 %v1857, %v1849
    %v3370 = vpack.c.b16 %v1866, %v1858
    %v3371 = vpack.c.b16 %v1867, %v1859
    %v3372 = vpack.c.b16 %v1868, %v1860
    %v3373 = vpack.c.b16 %v1869, %v1861
    %v3374 = vpack.c.b16 %v1870, %v1862
    %v3375 = vpack.c.b16 %v1871, %v1863
    %v3376 = vpack.c.b16 %v1872, %v1864
    %v3377 = vpack.c.b16 %v1873, %v1865
    %v3378 = vpack.c.b16 %v1882, %v1874
    %v3379 = vpack.c.b16 %v1883, %v1875
    %v3380 = vpack.c.b16 %v1884, %v1876
    %v3381 = vpack.c.b16 %v1885, %v1877
    %v3382 = vpack.c.b16 %v1886, %v1878
    %v3383 = vpack.c.b16 %v1887, %v1879
    %v3384 = vpack.c.b16 %v1888, %v1880
    %v3385 = vpack.c.b16 %v1889, %v1881
    %v3386 = vpack.c.b16 %v1898, %v1890
    %v3387 = vpack.c.b16 %v1899, %v1891
    %v3388 = vpack.c.b16 %v1900, %v1892
    %v3389 = vpack.c.b16 %v1901, %v1893
    %v3390 = vpack.c.b16 %v1902, %v1894
    %v3391 = vpack.c.b16 %v1903, %v1895
    %v3392 = vpack.c.b16 %v1904, %v1896
    %v3393 = vpack.c.b16 %v1905, %v1897
    %v3394 = vpack.c.b16 %v1914, %v1906
    %v3395 = vpack.c.b16 %v1915, %v1907
    %v3396 = vpack.c.b16 %v1916, %v1908
    %v3397 = vpack.c.b16 %v1917, %v1909
    %v3398 = vpack.c.b16 %v1918, %v1910
    %v3399 = vpack.c.b16 %v1919, %v1911
    %v3400 = vpack.c.b16 %v1920, %v1912
    %v3401 = vpack.c.b16 %v1921, %v1913
    %v3402 = vpack.c.b16 %v1930, %v1922
    %v3403 = vpack.c.b16 %v1931, %v1923
    %v3404 = vpack.c.b16 %v1932, %v1924
    %v3405 = vpack.c.b16 %v1933, %v1925
    %v3406 = vpack.c.b16 %v1934, %v1926
    %v3407 = vpack.c.b16 %v1935, %v1927
    %v3408 = vpack.c.b16 %v1936, %v1928
    %v3409 = vpack.c.b16 %v1937, %v1929
    %v3410 = vpack.c.b16 %v1946, %v1938
    %v3411 = vpack.c.b16 %v1947, %v1939
    %v3412 = vpack.c.b16 %v1948, %v1940
    %v3413 = vpack.c.b16 %v1949, %v1941
    %v3414 = vpack.c.b16 %v1950, %v1942
    %v3415 = vpack.c.b16 %v1951, %v1943
    %v3416 = vpack.c.b16 %v1952, %v1944
    %v3417 = vpack.c.b16 %v1953, %v1945
    %v3418 = vpack.c.b16 %v1962, %v1954
    %v3419 = vpack.c.b16 %v1963, %v1955
    %v3420 = vpack.c.b16 %v1964, %v1956
    %v3421 = vpack.c.b16 %v1965, %v1957
    %v3422 = vpack.c.b16 %v1966, %v1958
    %v3423 = vpack.c.b16 %v1967, %v1959
    %v3424 = vpack.c.b16 %v1968, %v1960
    %v3425 = vpack.c.b16 %v1969, %v1961
    %v3426 = vpack.c.b16 %v1978, %v1970
    %v3427 = vpack.c.b16 %v1979, %v1971
    %v3428 = vpack.c.b16 %v1980, %v1972
    %v3429 = vpack.c.b16 %v1981, %v1973
    %v3430 = vpack.c.b16 %v1982, %v1974
    %v3431 = vpack.c.b16 %v1983, %v1975
    %v3432 = vpack.c.b16 %v1984, %v1976
    %v3433 = vpack.c.b16 %v1985, %v1977
    %v3434 = vpack.c.b16 %v1994, %v1986
    %v3435 = vpack.c.b16 %v1995, %v1987
    %v3436 = vpack.c.b16 %v1996, %v1988
    %v3437 = vpack.c.b16 %v1997, %v1989
    %v3438 = vpack.c.b16 %v1998, %v1990
    %v3439 = vpack.c.b16 %v1999, %v1991
    %v3440 = vpack.c.b16 %v2000, %v1992
    %v3441 = vpack.c.b16 %v2001, %v1993
    %v3442 = vpack.c.b16 %v2010, %v2002
    %v3443 = vpack.c.b16 %v2011, %v2003
    %v3444 = vpack.c.b16 %v2012, %v2004
    %v3445 = vpack.c.b16 %v2013, %v2005
    %v3446 = vpack.c.b16 %v2014, %v2006
    %v3447 = vpack.c.b16 %v2015, %v2007
    %v3448 = vpack.c.b16 %v2016, %v2008
    %v3449 = vpack.c.b16 %v2017, %v2009
    %v3450 = vpack.c.b16 %v2026, %v2018
    %v3451 = vpack.c.b16 %v2027, %v2019
    %v3452 = vpack.c.b16 %v2028, %v2020
    %v3453 = vpack.c.b16 %v2029, %v2021
    %v3454 = vpack.c.b16 %v2030, %v2022
    %v3455 = vpack.c.b16 %v2031, %v2023
    %v3456 = vpack.c.b16 %v2032, %v2024
    %v3457 = vpack.c.b16 %v2033, %v2025
    %v3458 = vpack.c.b16 %v2042, %v2034
    %v3459 = vpack.c.b16 %v2043, %v2035
    %v3460 = vpack.c.b16 %v2044, %v2036
    %v3461 = vpack.c.b16 %v2045, %v2037
    %v3462 = vpack.c.b16 %v2046, %v2038
    %v3463 = vpack.c.b16 %v2047, %v2039
    %v3464 = vpack.c.b16 %v2048, %v2040
    %v3465 = vpack.c.b16 %v2049, %v2041
    %v3466 = vpack.c.b16 %v2058, %v2050
    %v3467 = vpack.c.b16 %v2059, %v2051
    %v3468 = vpack.c.b16 %v2060, %v2052
    %v3469 = vpack.c.b16 %v2061, %v2053
    %v3470 = vpack.c.b16 %v2062, %v2054
    %v3471 = vpack.c.b16 %v2063, %v2055
    %v3472 = vpack.c.b16 %v2064, %v2056
    %v3473 = vpack.c.b16 %v2065, %v2057
    %v3474 = vpack.c.b16 %v2074, %v2066
    %v3475 = vpack.c.b16 %v2075, %v2067
    %v3476 = vpack.c.b16 %v2076, %v2068
    %v3477 = vpack.c.b16 %v2077, %v2069
    %v3478 = vpack.c.b16 %v2078, %v2070
    %v3479 = vpack.c.b16 %v2079, %v2071
    %v3480 = vpack.c.b16 %v2080, %v2072
    %v3481 = vpack.c.b16 %v2081, %v2073
    %v3482 = vpack.c.b16 %v2090, %v2082
    %v3483 = vpack.c.b16 %v2091, %v2083
    %v3484 = vpack.c.b16 %v2092, %v2084
    %v3485 = vpack.c.b16 %v2093, %v2085
    %v3486 = vpack.c.b16 %v2094, %v2086
    %v3487 = vpack.c.b16 %v2095, %v2087
    %v3488 = vpack.c.b16 %v2096, %v2088
    %v3489 = vpack.c.b16 %v2097, %v2089
    %v3490 = vpack.c.b16 %v2106, %v2098
    %v3491 = vpack.c.b16 %v2107, %v2099
    %v3492 = vpack.c.b16 %v2108, %v2100
    %v3493 = vpack.c.b16 %v2109, %v2101
    %v3494 = vpack.c.b16 %v2110, %v2102
    %v3495 = vpack.c.b16 %v2111, %v2103
    %v3496 = vpack.c.b16 %v2112, %v2104
    %v3497 = vpack.c.b16 %v2113, %v2105
    %v3498 = vpack.c.b16 %v2122, %v2114
    %v3499 = vpack.c.b16 %v2123, %v2115
    %v3500 = vpack.c.b16 %v2124, %v2116
    %v3501 = vpack.c.b16 %v2125, %v2117
    %v3502 = vpack.c.b16 %v2126, %v2118
    %v3503 = vpack.c.b16 %v2127, %v2119
    %v3504 = vpack.c.b16 %v2128, %v2120
    %v3505 = vpack.c.b16 %v2129, %v2121
    %v3506 = vpack.c.b16 %v2138, %v2130
    %v3507 = vpack.c.b16 %v2139, %v2131
    %v3508 = vpack.c.b16 %v2140, %v2132
    %v3509 = vpack.c.b16 %v2141, %v2133
    %v3510 = vpack.c.b16 %v2142, %v2134
    %v3511 = vpack.c.b16 %v2143, %v2135
    %v3512 = vpack.c.b16 %v2144, %v2136
    %v3513 = vpack.c.b16 %v2145, %v2137
    %v3514 = vpack.c.b16 %v2154, %v2146
    %v3515 = vpack.c.b16 %v2155, %v2147
    %v3516 = vpack.c.b16 %v2156, %v2148
    %v3517 = vpack.c.b16 %v2157, %v2149
    %v3518 = vpack.c.b16 %v2158, %v2150
    %v3519 = vpack.c.b16 %v2159, %v2151
    %v3520 = vpack.c.b16 %v2160, %v2152
    %v3521 = vpack.c.b16 %v2161, %v2153
    %v3522 = vpack.c.b16 %v2170, %v2162
    %v3523 = vpack.c.b16 %v2171, %v2163
    %v3524 = vpack.c.b16 %v2172, %v2164
    %v3525 = vpack.c.b16 %v2173, %v2165
    %v3526 = vpack.c.b16 %v2174, %v2166
    %v3527 = vpack.c.b16 %v2175, %v2167
    %v3528 = vpack.c.b16 %v2176, %v2168
    %v3529 = vpack.c.b16 %v2177, %v2169
    %v3530 = vpack.c.b16 %v2186, %v2178
    %v3531 = vpack.c.b16 %v2187, %v2179
    %v3532 = vpack.c.b16 %v2188, %v2180
    %v3533 = vpack.c.b16 %v2189, %v2181
    %v3534 = vpack.c.b16 %v2190, %v2182
    %v3535 = vpack.c.b16 %v2191, %v2183
    %v3536 = vpack.c.b16 %v2192, %v2184
    %v3537 = vpack.c.b16 %v2193, %v2185
    %v3538 = vpack.c.b16 %v2202, %v2194
    %v3539 = vpack.c.b16 %v2203, %v2195
    %v3540 = vpack.c.b16 %v2204, %v2196
    %v3541 = vpack.c.b16 %v2205, %v2197
    %v3542 = vpack.c.b16 %v2206, %v2198
    %v3543 = vpack.c.b16 %v2207, %v2199
    %v3544 = vpack.c.b16 %v2208, %v2200
    %v3545 = vpack.c.b16 %v2209, %v2201
    %v3546 = vpack.c.b16 %v2218, %v2210
    %v3547 = vpack.c.b16 %v2219, %v2211
    %v3548 = vpack.c.b16 %v2220, %v2212
    %v3549 = vpack.c.b16 %v2221, %v2213
    %v3550 = vpack.c.b16 %v2222, %v2214
    %v3551 = vpack.c.b16 %v2223, %v2215
    %v3552 = vpack.c.b16 %v2224, %v2216
    %v3553 = vpack.c.b16 %v2225, %v2217
    %v3554 = vpack.c.b16 %v2234, %v2226
    %v3555 = vpack.c.b16 %v2235, %v2227
    %v3556 = vpack.c.b16 %v2236, %v2228
    %v3557 = vpack.c.b16 %v2237, %v2229
    %v3558 = vpack.c.b16 %v2238, %v2230
    %v3559 = vpack.c.b16 %v2239, %v2231
    %v3560 = vpack.c.b16 %v2240, %v2232
    %v3561 = vpack.c.b16 %v2241, %v2233
    %v3562 = vpack.c.b16 %v2250, %v2242
    %v3563 = vpack.c.b16 %v2251, %v2243
    %v3564 = vpack.c.b16 %v2252, %v2244
    %v3565 = vpack.c.b16 %v2253, %v2245
    %v3566 = vpack.c.b16 %v2254, %v2246
    %v3567 = vpack.c.b16 %v2255, %v2247
    %v3568 = vpack.c.b16 %v2256, %v2248
    %v3569 = vpack.c.b16 %v2257, %v2249
    %v3570 = vpack.c.b16 %v2266, %v2258
    %v3571 = vpack.c.b16 %v2267, %v2259
    %v3572 = vpack.c.b16 %v2268, %v2260
    %v3573 = vpack.c.b16 %v2269, %v2261
    %v3574 = vpack.c.b16 %v2270, %v2262
    %v3575 = vpack.c.b16 %v2271, %v2263
    %v3576 = vpack.c.b16 %v2272, %v2264
    %v3577 = vpack.c.b16 %v2273, %v2265
    %v3578 = vpack.c.b16 %v2282, %v2274
    %v3579 = vpack.c.b16 %v2283, %v2275
    %v3580 = vpack.c.b16 %v2284, %v2276
    %v3581 = vpack.c.b16 %v2285, %v2277
    %v3582 = vpack.c.b16 %v2286, %v2278
    %v3583 = vpack.c.b16 %v2287, %v2279
    %v3584 = vpack.c.b16 %v2288, %v2280
    %v3585 = vpack.c.b16 %v2289, %v2281
    %v3586 = vpack.c.b16 %v2298, %v2290
    %v3587 = vpack.c.b16 %v2299, %v2291
    %v3588 = vpack.c.b16 %v2300, %v2292
    %v3589 = vpack.c.b16 %v2301, %v2293
    %v3590 = vpack.c.b16 %v2302, %v2294
    %v3591 = vpack.c.b16 %v2303, %v2295
    %v3592 = vpack.c.b16 %v2304, %v2296
    %v3593 = vpack.c.b16 %v2305, %v2297
    %v3594 = vpack.c.b16 %v2314, %v2306
    %v3595 = vpack.c.b16 %v2315, %v2307
    %v3596 = vpack.c.b16 %v2316, %v2308
    %v3597 = vpack.c.b16 %v2317, %v2309
    %v3598 = vpack.c.b16 %v2318, %v2310
    %v3599 = vpack.c.b16 %v2319, %v2311
    %v3600 = vpack.c.b16 %v2320, %v2312
    %v3601 = vpack.c.b16 %v2321, %v2313
    %v3602 = vpack.c.b16 %v2330, %v2322
    %v3603 = vpack.c.b16 %v2331, %v2323
    %v3604 = vpack.c.b16 %v2332, %v2324
    %v3605 = vpack.c.b16 %v2333, %v2325
    %v3606 = vpack.c.b16 %v2334, %v2326
    %v3607 = vpack.c.b16 %v2335, %v2327
    %v3608 = vpack.c.b16 %v2336, %v2328
    %v3609 = vpack.c.b16 %v2337, %v2329
    %v3610 = vpack.c.b16 %v2346, %v2338
    %v3611 = vpack.c.b16 %v2347, %v2339
    %v3612 = vpack.c.b16 %v2348, %v2340
    %v3613 = vpack.c.b16 %v2349, %v2341
    %v3614 = vpack.c.b16 %v2350, %v2342
    %v3615 = vpack.c.b16 %v2351, %v2343
    %v3616 = vpack.c.b16 %v2352, %v2344
    %v3617 = vpack.c.b16 %v2353, %v2345
    %v3618 = vpack.c.b16 %v2362, %v2354
    %v3619 = vpack.c.b16 %v2363, %v2355
    %v3620 = vpack.c.b16 %v2364, %v2356
    %v3621 = vpack.c.b16 %v2365, %v2357
    %v3622 = vpack.c.b16 %v2366, %v2358
    %v3623 = vpack.c.b16 %v2367, %v2359
    %v3624 = vpack.c.b16 %v2368, %v2360
    %v3625 = vpack.c.b16 %v2369, %v2361
    %v3626 = vpack.c.b16 %v2378, %v2370
    %v3627 = vpack.c.b16 %v2379, %v2371
    %v3628 = vpack.c.b16 %v2380, %v2372
    %v3629 = vpack.c.b16 %v2381, %v2373
    %v3630 = vpack.c.b16 %v2382, %v2374
    %v3631 = vpack.c.b16 %v2383, %v2375
    %v3632 = vpack.c.b16 %v2384, %v2376
    %v3633 = vpack.c.b16 %v2385, %v2377
    %v3634 = vpack.c.b16 %v2394, %v2386
    %v3635 = vpack.c.b16 %v2395, %v2387
    %v3636 = vpack.c.b16 %v2396, %v2388
    %v3637 = vpack.c.b16 %v2397, %v2389
    %v3638 = vpack.c.b16 %v2398, %v2390
    %v3639 = vpack.c.b16 %v2399, %v2391
    %v3640 = vpack.c.b16 %v2400, %v2392
    %v3641 = vpack.c.b16 %v2401, %v2393
    %v3642 = vpack.c.b16 %v2410, %v2402
    %v3643 = vpack.c.b16 %v2411, %v2403
    %v3644 = vpack.c.b16 %v2412, %v2404
    %v3645 = vpack.c.b16 %v2413, %v2405
    %v3646 = vpack.c.b16 %v2414, %v2406
    %v3647 = vpack.c.b16 %v2415, %v2407
    %v3648 = vpack.c.b16 %v2416, %v2408
    %v3649 = vpack.c.b16 %v2417, %v2409
    %v3650 = vpack.c.b16 %v2426, %v2418
    %v3651 = vpack.c.b16 %v2427, %v2419
    %v3652 = vpack.c.b16 %v2428, %v2420
    %v3653 = vpack.c.b16 %v2429, %v2421
    %v3654 = vpack.c.b16 %v2430, %v2422
    %v3655 = vpack.c.b16 %v2431, %v2423
    %v3656 = vpack.c.b16 %v2432, %v2424
    %v3657 = vpack.c.b16 %v2433, %v2425
    %v3658 = vpack.c.b16 %v2442, %v2434
    %v3659 = vpack.c.b16 %v2443, %v2435
    %v3660 = vpack.c.b16 %v2444, %v2436
    %v3661 = vpack.c.b16 %v2445, %v2437
    %v3662 = vpack.c.b16 %v2446, %v2438
    %v3663 = vpack.c.b16 %v2447, %v2439
    %v3664 = vpack.c.b16 %v2448, %v2440
    %v3665 = vpack.c.b16 %v2449, %v2441
    %v3666 = vpack.c.b16 %v2458, %v2450
    %v3667 = vpack.c.b16 %v2459, %v2451
    %v3668 = vpack.c.b16 %v2460, %v2452
    %v3669 = vpack.c.b16 %v2461, %v2453
    %v3670 = vpack.c.b16 %v2462, %v2454
    %v3671 = vpack.c.b16 %v2463, %v2455
    %v3672 = vpack.c.b16 %v2464, %v2456
    %v3673 = vpack.c.b16 %v2465, %v2457
    %v3674 = vpack.c.b16 %v2474, %v2466
    %v3675 = vpack.c.b16 %v2475, %v2467
    %v3676 = vpack.c.b16 %v2476, %v2468
    %v3677 = vpack.c.b16 %v2477, %v2469
    %v3678 = vpack.c.b16 %v2478, %v2470
    %v3679 = vpack.c.b16 %v2479, %v2471
    %v3680 = vpack.c.b16 %v2480, %v2472
    %v3681 = vpack.c.b16 %v2481, %v2473
    %v3682 = vpack.c.b16 %v2490, %v2482
    %v3683 = vpack.c.b16 %v2491, %v2483
    %v3684 = vpack.c.b16 %v2492, %v2484
    %v3685 = vpack.c.b16 %v2493, %v2485
    %v3686 = vpack.c.b16 %v2494, %v2486
    %v3687 = vpack.c.b16 %v2495, %v2487
    %v3688 = vpack.c.b16 %v2496, %v2488
    %v3689 = vpack.c.b16 %v2497, %v2489
    %v3690 = vpack.c.b16 %v2506, %v2498
    %v3691 = vpack.c.b16 %v2507, %v2499
    %v3692 = vpack.c.b16 %v2508, %v2500
    %v3693 = vpack.c.b16 %v2509, %v2501
    %v3694 = vpack.c.b16 %v2510, %v2502
    %v3695 = vpack.c.b16 %v2511, %v2503
    %v3696 = vpack.c.b16 %v2512, %v2504
    %v3697 = vpack.c.b16 %v2513, %v2505
    %v3698 = vpack.c.b16 %v2522, %v2514
    %v3699 = vpack.c.b16 %v2523, %v2515
    %v3700 = vpack.c.b16 %v2524, %v2516
    %v3701 = vpack.c.b16 %v2525, %v2517
    %v3702 = vpack.c.b16 %v2526, %v2518
    %v3703 = vpack.c.b16 %v2527, %v2519
    %v3704 = vpack.c.b16 %v2528, %v2520
    %v3705 = vpack.c.b16 %v2529, %v2521
    %v3706 = vpack.c.b16 %v2538, %v2530
    %v3707 = vpack.c.b16 %v2539, %v2531
    %v3708 = vpack.c.b16 %v2540, %v2532
    %v3709 = vpack.c.b16 %v2541, %v2533
    %v3710 = vpack.c.b16 %v2542, %v2534
    %v3711 = vpack.c.b16 %v2543, %v2535
    %v3712 = vpack.c.b16 %v2544, %v2536
    %v3713 = vpack.c.b16 %v2545, %v2537
    %v3714 = vpack.c.b16 %v2554, %v2546
    %v3715 = vpack.c.b16 %v2555, %v2547
    %v3716 = vpack.c.b16 %v2556, %v2548
    %v3717 = vpack.c.b16 %v2557, %v2549
    %v3718 = vpack.c.b16 %v2558, %v2550
    %v3719 = vpack.c.b16 %v2559, %v2551
    %v3720 = vpack.c.b16 %v2560, %v2552
    %v3721 = vpack.c.b16 %v2561, %v2553
    %v3722 = vpack.c.b16 %v2570, %v2562
    %v3723 = vpack.c.b16 %v2571, %v2563
    %v3724 = vpack.c.b16 %v2572, %v2564
    %v3725 = vpack.c.b16 %v2573, %v2565
    %v3726 = vpack.c.b16 %v2574, %v2566
    %v3727 = vpack.c.b16 %v2575, %v2567
    %v3728 = vpack.c.b16 %v2576, %v2568
    %v3729 = vpack.c.b16 %v2577, %v2569
    %v3730 = vpack.c.b16 %v2586, %v2578
    %v3731 = vpack.c.b16 %v2587, %v2579
    %v3732 = vpack.c.b16 %v2588, %v2580
    %v3733 = vpack.c.b16 %v2589, %v2581
    %v3734 = vpack.c.b16 %v2590, %v2582
    %v3735 = vpack.c.b16 %v2591, %v2583
    %v3736 = vpack.c.b16 %v2592, %v2584
    %v3737 = vpack.c.b16 %v2593, %v2585
    %v3738 = vpack.c.b16 %v2602, %v2594
    %v3739 = vpack.c.b16 %v2603, %v2595
    %v3740 = vpack.c.b16 %v2604, %v2596
    %v3741 = vpack.c.b16 %v2605, %v2597
    %v3742 = vpack.c.b16 %v2606, %v2598
    %v3743 = vpack.c.b16 %v2607, %v2599
    %v3744 = vpack.c.b16 %v2608, %v2600
    %v3745 = vpack.c.b16 %v2609, %v2601
    %v3746 = vpack.c.b16 %v2618, %v2610
    %v3747 = vpack.c.b16 %v2619, %v2611
    %v3748 = vpack.c.b16 %v2620, %v2612
    %v3749 = vpack.c.b16 %v2621, %v2613
    %v3750 = vpack.c.b16 %v2622, %v2614
    %v3751 = vpack.c.b16 %v2623, %v2615
    %v3752 = vpack.c.b16 %v2624, %v2616
    %v3753 = vpack.c.b16 %v2625, %v2617
    %v3754 = vpack.c.b16 %v2634, %v2626
    %v3755 = vpack.c.b16 %v2635, %v2627
    %v3756 = vpack.c.b16 %v2636, %v2628
    %v3757 = vpack.c.b16 %v2637, %v2629
    %v3758 = vpack.c.b16 %v2638, %v2630
    %v3759 = vpack.c.b16 %v2639, %v2631
    %v3760 = vpack.c.b16 %v2640, %v2632
    %v3761 = vpack.c.b16 %v2641, %v2633
    %v3762 = vpack.c.b16 %v2650, %v2642
    %v3763 = vpack.c.b16 %v2651, %v2643
    %v3764 = vpack.c.b16 %v2652, %v2644
    %v3765 = vpack.c.b16 %v2653, %v2645
    %v3766 = vpack.c.b16 %v2654, %v2646
    %v3767 = vpack.c.b16 %v2655, %v2647
    %v3768 = vpack.c.b16 %v2656, %v2648
    %v3769 = vpack.c.b16 %v2657, %v2649
    %v3770 = vpack.c.b16 %v2666, %v2658
    %v3771 = vpack.c.b16 %v2667, %v2659
    %v3772 = vpack.c.b16 %v2668, %v2660
    %v3773 = vpack.c.b16 %v2669, %v2661
    %v3774 = vpack.c.b16 %v2670, %v2662
    %v3775 = vpack.c.b16 %v2671, %v2663
    %v3776 = vpack.c.b16 %v2672, %v2664
    %v3777 = vpack.c.b16 %v2673, %v2665
    %v3778 = vpack.c.b16 %v2682, %v2674
    %v3779 = vpack.c.b16 %v2683, %v2675
    %v3780 = vpack.c.b16 %v2684, %v2676
    %v3781 = vpack.c.b16 %v2685, %v2677
    %v3782 = vpack.c.b16 %v2686, %v2678
    %v3783 = vpack.c.b16 %v2687, %v2679
    %v3784 = vpack.c.b16 %v2688, %v2680
    %v3785 = vpack.c.b16 %v2689, %v2681
    %v3786 = vpack.c.b16 %v2698, %v2690
    %v3787 = vpack.c.b16 %v2699, %v2691
    %v3788 = vpack.c.b16 %v2700, %v2692
    %v3789 = vpack.c.b16 %v2701, %v2693
    %v3790 = vpack.c.b16 %v2702, %v2694
    %v3791 = vpack.c.b16 %v2703, %v2695
    %v3792 = vpack.c.b16 %v2704, %v2696
    %v3793 = vpack.c.b16 %v2705, %v2697
    %v3794 = vpack.c.b16 %v2714, %v2706
    %v3795 = vpack.c.b16 %v2715, %v2707
    %v3796 = vpack.c.b16 %v2716, %v2708
    %v3797 = vpack.c.b16 %v2717, %v2709
    %v3798 = vpack.c.b16 %v2718, %v2710
    %v3799 = vpack.c.b16 %v2719, %v2711
    %v3800 = vpack.c.b16 %v2720, %v2712
    %v3801 = vpack.c.b16 %v2721, %v2713
    %v3802 = vpack.c.b16 %v2730, %v2722
    %v3803 = vpack.c.b16 %v2731, %v2723
    %v3804 = vpack.c.b16 %v2732, %v2724
    %v3805 = vpack.c.b16 %v2733, %v2725
    %v3806 = vpack.c.b16 %v2734, %v2726
    %v3807 = vpack.c.b16 %v2735, %v2727
    %v3808 = vpack.c.b16 %v2736, %v2728
    %v3809 = vpack.c.b16 %v2737, %v2729
    %v3810 = vpack.c.b16 %v2746, %v2738
    %v3811 = vpack.c.b16 %v2747, %v2739
    %v3812 = vpack.c.b16 %v2748, %v2740
    %v3813 = vpack.c.b16 %v2749, %v2741
    %v3814 = vpack.c.b16 %v2750, %v2742
    %v3815 = vpack.c.b16 %v2751, %v2743
    %v3816 = vpack.c.b16 %v2752, %v2744
    %v3817 = vpack.c.b16 %v2753, %v2745
    %v3818 = vpack.c.b16 %v2762, %v2754
    %v3819 = vpack.c.b16 %v2763, %v2755
    %v3820 = vpack.c.b16 %v2764, %v2756
    %v3821 = vpack.c.b16 %v2765, %v2757
    %v3822 = vpack.c.b16 %v2766, %v2758
    %v3823 = vpack.c.b16 %v2767, %v2759
    %v3824 = vpack.c.b16 %v2768, %v2760
    %v3825 = vpack.c.b16 %v2769, %v2761
    %v3826 = vpack.c.b16 %v2778, %v2770
    %v3827 = vpack.c.b16 %v2779, %v2771
    %v3828 = vpack.c.b16 %v2780, %v2772
    %v3829 = vpack.c.b16 %v2781, %v2773
    %v3830 = vpack.c.b16 %v2782, %v2774
    %v3831 = vpack.c.b16 %v2783, %v2775
    %v3832 = vpack.c.b16 %v2784, %v2776
    %v3833 = vpack.c.b16 %v2785, %v2777
    %v3834 = vpack.c.b16 %v2794, %v2786
    %v3835 = vpack.c.b16 %v2795, %v2787
    %v3836 = vpack.c.b16 %v2796, %v2788
    %v3837 = vpack.c.b16 %v2797, %v2789
    %v3838 = vpack.c.b16 %v2798, %v2790
    %v3839 = vpack.c.b16 %v2799, %v2791
    %v3840 = vpack.c.b16 %v2800, %v2792
    %v3841 = vpack.c.b16 %v2801, %v2793
    %v3842 = vpack.c.b16 %v2810, %v2802
    %v3843 = vpack.c.b16 %v2811, %v2803
    %v3844 = vpack.c.b16 %v2812, %v2804
    %v3845 = vpack.c.b16 %v2813, %v2805
    %v3846 = vpack.c.b16 %v2814, %v2806
    %v3847 = vpack.c.b16 %v2815, %v2807
    %v3848 = vpack.c.b16 %v2816, %v2808
    %v3849 = vpack.c.b16 %v2817, %v2809
    %v3850 = vpack.c.b16 %v2826, %v2818
    %v3851 = vpack.c.b16 %v2827, %v2819
    %v3852 = vpack.c.b16 %v2828, %v2820
    %v3853 = vpack.c.b16 %v2829, %v2821
    %v3854 = vpack.c.b16 %v2830, %v2822
    %v3855 = vpack.c.b16 %v2831, %v2823
    %v3856 = vpack.c.b16 %v2832, %v2824
    %v3857 = vpack.c.b16 %v2833, %v2825
    %v3858 = vpack.c.b16 %v2842, %v2834
    %v3859 = vpack.c.b16 %v2843, %v2835
    %v3860 = vpack.c.b16 %v2844, %v2836
    %v3861 = vpack.c.b16 %v2845, %v2837
    %v3862 = vpack.c.b16 %v2846, %v2838
    %v3863 = vpack.c.b16 %v2847, %v2839
    %v3864 = vpack.c.b16 %v2848, %v2840
    %v3865 = vpack.c.b16 %v2849, %v2841
    %v3866 = vpack.c.b16 %v2858, %v2850
    %v3867 = vpack.c.b16 %v2859, %v2851
    %v3868 = vpack.c.b16 %v2860, %v2852
    %v3869 = vpack.c.b16 %v2861, %v2853
    %v3870 = vpack.c.b16 %v2862, %v2854
    %v3871 = vpack.c.b16 %v2863, %v2855
    %v3872 = vpack.c.b16 %v2864, %v2856
    %v3873 = vpack.c.b16 %v2865, %v2857
    %v3874 = vpack.c.b16 %v2874, %v2866
    %v3875 = vpack.c.b16 %v2875, %v2867
    %v3876 = vpack.c.b16 %v2876, %v2868
    %v3877 = vpack.c.b16 %v2877, %v2869
    %v3878 = vpack.c.b16 %v2878, %v2870
    %v3879 = vpack.c.b16 %v2879, %v2871
    %v3880 = vpack.c.b16 %v2880, %v2872
    %v3881 = vpack.c.b16 %v2881, %v2873
    %v3882 = vpack.c.b16 %v2890, %v2882
    %v3883 = vpack.c.b16 %v2891, %v2883
    %v3884 = vpack.c.b16 %v2892, %v2884
    %v3885 = vpack.c.b16 %v2893, %v2885
    %v3886 = vpack.c.b16 %v2894, %v2886
    %v3887 = vpack.c.b16 %v2895, %v2887
    %v3888 = vpack.c.b16 %v2896, %v2888
    %v3889 = vpack.c.b16 %v2897, %v2889
    %v3890 = vpack.c.b16 %v2906, %v2898
    %v3891 = vpack.c.b16 %v2907, %v2899
    %v3892 = vpack.c.b16 %v2908, %v2900
    %v3893 = vpack.c.b16 %v2909, %v2901
    %v3894 = vpack.c.b16 %v2910, %v2902
    %v3895 = vpack.c.b16 %v2911, %v2903
    %v3896 = vpack.c.b16 %v2912, %v2904
    %v3897 = vpack.c.b16 %v2913, %v2905
    %v3898 = vpack.c.b16 %v2922, %v2914
    %v3899 = vpack.c.b16 %v2923, %v2915
    %v3900 = vpack.c.b16 %v2924, %v2916
    %v3901 = vpack.c.b16 %v2925, %v2917
    %v3902 = vpack.c.b16 %v2926, %v2918
    %v3903 = vpack.c.b16 %v2927, %v2919
    %v3904 = vpack.c.b16 %v2928, %v2920
    %v3905 = vpack.c.b16 %v2929, %v2921
    %v3906 = vpack.c.b16 %v2938, %v2930
    %v3907 = vpack.c.b16 %v2939, %v2931
    %v3908 = vpack.c.b16 %v2940, %v2932
    %v3909 = vpack.c.b16 %v2941, %v2933
    %v3910 = vpack.c.b16 %v2942, %v2934
    %v3911 = vpack.c.b16 %v2943, %v2935
    %v3912 = vpack.c.b16 %v2944, %v2936
    %v3913 = vpack.c.b16 %v2945, %v2937
    %v3914 = vpack.c.b16 %v2954, %v2946
    %v3915 = vpack.c.b16 %v2955, %v2947
    %v3916 = vpack.c.b16 %v2956, %v2948
    %v3917 = vpack.c.b16 %v2957, %v2949
    %v3918 = vpack.c.b16 %v2958, %v2950
    %v3919 = vpack.c.b16 %v2959, %v2951
    %v3920 = vpack.c.b16 %v2960, %v2952
    %v3921 = vpack.c.b16 %v2961, %v2953
    %v3922 = vpack.c.b16 %v2970, %v2962
    %v3923 = vpack.c.b16 %v2971, %v2963
    %v3924 = vpack.c.b16 %v2972, %v2964
    %v3925 = vpack.c.b16 %v2973, %v2965
    %v3926 = vpack.c.b16 %v2974, %v2966
    %v3927 = vpack.c.b16 %v2975, %v2967
    %v3928 = vpack.c.b16 %v2976, %v2968
    %v3929 = vpack.c.b16 %v2977, %v2969
    %v3930 = vpack.c.b16 %v2986, %v2978
    %v3931 = vpack.c.b16 %v2987, %v2979
    %v3932 = vpack.c.b16 %v2988, %v2980
    %v3933 = vpack.c.b16 %v2989, %v2981
    %v3934 = vpack.c.b16 %v2990, %v2982
    %v3935 = vpack.c.b16 %v2991, %v2983
    %v3936 = vpack.c.b16 %v2992, %v2984
    %v3937 = vpack.c.b16 %v2993, %v2985
    %v3938 = vpack.c.b16 %v3002, %v2994
    %v3939 = vpack.c.b16 %v3003, %v2995
    %v3940 = vpack.c.b16 %v3004, %v2996
    %v3941 = vpack.c.b16 %v3005, %v2997
    %v3942 = vpack.c.b16 %v3006, %v2998
    %v3943 = vpack.c.b16 %v3007, %v2999
    %v3944 = vpack.c.b16 %v3008, %v3000
    %v3945 = vpack.c.b16 %v3009, %v3001
    %v3946 = vpack.c.b16 %v3018, %v3010
    %v3947 = vpack.c.b16 %v3019, %v3011
    %v3948 = vpack.c.b16 %v3020, %v3012
    %v3949 = vpack.c.b16 %v3021, %v3013
    %v3950 = vpack.c.b16 %v3022, %v3014
    %v3951 = vpack.c.b16 %v3023, %v3015
    %v3952 = vpack.c.b16 %v3024, %v3016
    %v3953 = vpack.c.b16 %v3025, %v3017
    %v3954 = vpack.c.b16 %v3034, %v3026
    %v3955 = vpack.c.b16 %v3035, %v3027
    %v3956 = vpack.c.b16 %v3036, %v3028
    %v3957 = vpack.c.b16 %v3037, %v3029
    %v3958 = vpack.c.b16 %v3038, %v3030
    %v3959 = vpack.c.b16 %v3039, %v3031
    %v3960 = vpack.c.b16 %v3040, %v3032
    %v3961 = vpack.c.b16 %v3041, %v3033
    %v3962 = vpack.c.b16 %v3050, %v3042
    %v3963 = vpack.c.b16 %v3051, %v3043
    %v3964 = vpack.c.b16 %v3052, %v3044
    %v3965 = vpack.c.b16 %v3053, %v3045
    %v3966 = vpack.c.b16 %v3054, %v3046
    %v3967 = vpack.c.b16 %v3055, %v3047
    %v3968 = vpack.c.b16 %v3056, %v3048
    %v3969 = vpack.c.b16 %v3057, %v3049
    %v3970 = vpack.c.b16 %v3066, %v3058
    %v3971 = vpack.c.b16 %v3067, %v3059
    %v3972 = vpack.c.b16 %v3068, %v3060
    %v3973 = vpack.c.b16 %v3069, %v3061
    %v3974 = vpack.c.b16 %v3070, %v3062
    %v3975 = vpack.c.b16 %v3071, %v3063
    %v3976 = vpack.c.b16 %v3072, %v3064
    %v3977 = vpack.c.b16 %v3073, %v3065
    %v3978 = vpack.c.b16 %v3082, %v3074
    %v3979 = vpack.c.b16 %v3083, %v3075
    %v3980 = vpack.c.b16 %v3084, %v3076
    %v3981 = vpack.c.b16 %v3085, %v3077
    %v3982 = vpack.c.b16 %v3086, %v3078
    %v3983 = vpack.c.b16 %v3087, %v3079
    %v3984 = vpack.c.b16 %v3088, %v3080
    %v3985 = vpack.c.b16 %v3089, %v3081
    %v3986 = vpack.c.b16 %v3098, %v3090
    %v3987 = vpack.c.b16 %v3099, %v3091
    %v3988 = vpack.c.b16 %v3100, %v3092
    %v3989 = vpack.c.b16 %v3101, %v3093
    %v3990 = vpack.c.b16 %v3102, %v3094
    %v3991 = vpack.c.b16 %v3103, %v3095
    %v3992 = vpack.c.b16 %v3104, %v3096
    %v3993 = vpack.c.b16 %v3105, %v3097
    %v3994 = vpack.c.b16 %v3114, %v3106
    %v3995 = vpack.c.b16 %v3115, %v3107
    %v3996 = vpack.c.b16 %v3116, %v3108
    %v3997 = vpack.c.b16 %v3117, %v3109
    %v3998 = vpack.c.b16 %v3118, %v3110
    %v3999 = vpack.c.b16 %v3119, %v3111
    %v4000 = vpack.c.b16 %v3120, %v3112
    %v4001 = vpack.c.b16 %v3121, %v3113
    %v4002 = vpack.c.b16 %v3130, %v3122
    %v4003 = vpack.c.b16 %v3131, %v3123
    %v4004 = vpack.c.b16 %v3132, %v3124
    %v4005 = vpack.c.b16 %v3133, %v3125
    %v4006 = vpack.c.b16 %v3134, %v3126
    %v4007 = vpack.c.b16 %v3135, %v3127
    %v4008 = vpack.c.b16 %v3136, %v3128
    %v4009 = vpack.c.b16 %v3137, %v3129
    %v4010 = vpack.c.b16 %v3146, %v3138
    %v4011 = vpack.c.b16 %v3147, %v3139
    %v4012 = vpack.c.b16 %v3148, %v3140
    %v4013 = vpack.c.b16 %v3149, %v3141
    %v4014 = vpack.c.b16 %v3150, %v3142
    %v4015 = vpack.c.b16 %v3151, %v3143
    %v4016 = vpack.c.b16 %v3152, %v3144
    %v4017 = vpack.c.b16 %v3153, %v3145
    %v4018 = vpack.c.b16 %v3162, %v3154
    %v4019 = vpack.c.b16 %v3163, %v3155
    %v4020 = vpack.c.b16 %v3164, %v3156
    %v4021 = vpack.c.b16 %v3165, %v3157
    %v4022 = vpack.c.b16 %v3166, %v3158
    %v4023 = vpack.c.b16 %v3167, %v3159
    %v4024 = vpack.c.b16 %v3168, %v3160
    %v4025 = vpack.c.b16 %v3169, %v3161
    %v4026 = vpack.c.b16 %v3178, %v3170
    %v4027 = vpack.c.b16 %v3179, %v3171
    %v4028 = vpack.c.b16 %v3180, %v3172
    %v4029 = vpack.c.b16 %v3181, %v3173
    %v4030 = vpack.c.b16 %v3182, %v3174
    %v4031 = vpack.c.b16 %v3183, %v3175
    %v4032 = vpack.c.b16 %v3184, %v3176
    %v4033 = vpack.c.b16 %v3185, %v3177
    %v4034 = vpack.c.b16 %v3194, %v3186
    %v4035 = vpack.c.b16 %v3195, %v3187
    %v4036 = vpack.c.b16 %v3196, %v3188
    %v4037 = vpack.c.b16 %v3197, %v3189
    %v4038 = vpack.c.b16 %v3198, %v3190
    %v4039 = vpack.c.b16 %v3199, %v3191
    %v4040 = vpack.c.b16 %v3200, %v3192
    %v4041 = vpack.c.b16 %v3201, %v3193
    %v4042 = vpack.c.b16 %v3210, %v3202
    %v4043 = vpack.c.b16 %v3211, %v3203
    %v4044 = vpack.c.b16 %v3212, %v3204
    %v4045 = vpack.c.b16 %v3213, %v3205
    %v4046 = vpack.c.b16 %v3214, %v3206
    %v4047 = vpack.c.b16 %v3215, %v3207
    %v4048 = vpack.c.b16 %v3216, %v3208
    %v4049 = vpack.c.b16 %v3217, %v3209
    %v4050 = vpack.c.b16 %v3226, %v3218
    %v4051 = vpack.c.b16 %v3227, %v3219
    %v4052 = vpack.c.b16 %v3228, %v3220
    %v4053 = vpack.c.b16 %v3229, %v3221
    %v4054 = vpack.c.b16 %v3230, %v3222
    %v4055 = vpack.c.b16 %v3231, %v3223
    %v4056 = vpack.c.b16 %v3232, %v3224
    %v4057 = vpack.c.b16 %v3233, %v3225
    %v4058 = vpack.c.b16 %v3242, %v3234
    %v4059 = vpack.c.b16 %v3243, %v3235
    %v4060 = vpack.c.b16 %v3244, %v3236
    %v4061 = vpack.c.b16 %v3245, %v3237
    %v4062 = vpack.c.b16 %v3246, %v3238
    %v4063 = vpack.c.b16 %v3247, %v3239
    %v4064 = vpack.c.b16 %v3248, %v3240
    %v4065 = vpack.c.b16 %v3249, %v3241
    %v4066 = vpack.c.b16 %v3258, %v3250
    %v4067 = vpack.c.b16 %v3259, %v3251
    %v4068 = vpack.c.b16 %v3260, %v3252
    %v4069 = vpack.c.b16 %v3261, %v3253
    %v4070 = vpack.c.b16 %v3262, %v3254
    %v4071 = vpack.c.b16 %v3263, %v3255
    %v4072 = vpack.c.b16 %v3264, %v3256
    %v4073 = vpack.c.b16 %v3265, %v3257
    %v4074 = vpack.c.b16 %v3274, %v3266
    %v4075 = vpack.c.b16 %v3275, %v3267
    %v4076 = vpack.c.b16 %v3276, %v3268
    %v4077 = vpack.c.b16 %v3277, %v3269
    %v4078 = vpack.c.b16 %v3278, %v3270
    %v4079 = vpack.c.b16 %v3279, %v3271
    %v4080 = vpack.c.b16 %v3280, %v3272
    %v4081 = vpack.c.b16 %v3281, %v3273
    %v4082 = vpack.c.b16 %v3290, %v3282
    %v4083 = vpack.c.b16 %v3291, %v3283
    %v4084 = vpack.c.b16 %v3292, %v3284
    %v4085 = vpack.c.b16 %v3293, %v3285
    %v4086 = vpack.c.b16 %v3294, %v3286
    %v4087 = vpack.c.b16 %v3295, %v3287
    %v4088 = vpack.c.b16 %v3296, %v3288
    %v4089 = vpack.c.b16 %v3297, %v3289
    %v4090 = vpack.c.b16 %v3306, %v3298
    %v4091 = vpack.c.b16 %v3307, %v3299
    %v4092 = vpack.c.b16 %v3308, %v3300
    %v4093 = vpack.c.b16 %v3309, %v3301
    %v4094 = vpack.c.b16 %v3310, %v3302
    %v4095 = vpack.c.b16 %v3311, %v3303
    %v4096 = vpack.c.b16 %v3312, %v3304
    %v4097 = vpack.c.b16 %v3313, %v3305
    %vm4882 = vcmask 261120
    %v4884 = vsel %vm4882, %v949, 0
    %4886 = vmatprep.subr.bf16.mxu0 %v3371
    %4887 = vmatpush1.bf16.msra.mxu0 %v3370
    %4888 = vmatprep.subr.bf16.mxu0 %v3363
    %4889 = vmatpush1.bf16.msra.mxu0 %v3362
    %4890 = vmatprep.subr.bf16.mxu0 %v3355
    %4891 = vmatpush1.bf16.msra.mxu0 %v3354
    %4892 = vmatprep.subr.bf16.mxu0 %v3347
    %4893 = vmatpush1.bf16.msra.mxu0 %v3346
    %4894 = vmatprep.subr.bf16.mxu0 %v3339
    %4895 = vmatpush1.bf16.msra.mxu0 %v3338
    %4896 = vmatprep.subr.bf16.mxu0 %v3331
    %4897 = vmatpush1.bf16.msra.mxu0 %v3330
    %4898 = vmatprep.subr.bf16.mxu0 %v3323
    %4899 = vmatpush1.bf16.msra.mxu0 %v3322
    %4900 = vmatprep.subr.bf16.mxu0 %v3315
    %4901 = vmatpush1.bf16.msra.mxu0 %v3314
    %4902 = vmatprep.subr.bf16.mxu0 %v3435
    %4903 = vmatpush2.bf16.msra.mxu0 %v3434
    %4904 = vmatprep.subr.bf16.mxu0 %v3427
    %4905 = vmatpush2.bf16.msra.mxu0 %v3426
    %4906 = vmatprep.subr.bf16.mxu0 %v3419
    %4907 = vmatpush2.bf16.msra.mxu0 %v3418
    %4908 = vmatprep.subr.bf16.mxu0 %v3411
    %4909 = vmatpush2.bf16.msra.mxu0 %v3410
    %4910 = vmatprep.subr.bf16.mxu0 %v3403
    %4911 = vmatpush2.bf16.msra.mxu0 %v3402
    %4912 = vmatprep.subr.bf16.mxu0 %v3395
    %4913 = vmatpush2.bf16.msra.mxu0 %v3394
    %4914 = vmatprep.subr.bf16.mxu0 %v3387
    %4915 = vmatpush2.bf16.msra.mxu0 %v3386
    %4916 = vmatprep.subr.bf16.mxu0 %v3379
    %4917 = vmatpush2.bf16.msra.mxu0 %v3378
    %4918 = vmatprep.mubr.bf16.mxu0 %v938
    %4919 = vmatmul.mubr.bf16.gmra.mxu0 %v937
    %v4920 = vpop.f32.mrf.mxu0
    %v4921 = vadd.f32 %v880, %v4920
    %v4922 = vpop.f32.mrf.mxu0
    %v4923 = vadd.f32 %v884, %v4922
    %v4924 = vpop.f32.mrf.mxu0
    %v4925 = vpop.f32.mrf.mxu0
    %4926 = vdwg.mxu0
    %4927 = vmatprep.subr.bf16.mxu0 %v3499
    %4928 = vmatpush1.bf16.msra.mxu0 %v3498
    %4929 = vmatprep.subr.bf16.mxu0 %v3491
    %4930 = vmatpush1.bf16.msra.mxu0 %v3490
    %4931 = vmatprep.subr.bf16.mxu0 %v3483
    %4932 = vmatpush1.bf16.msra.mxu0 %v3482
    %4933 = vmatprep.subr.bf16.mxu0 %v3475
    %4934 = vmatpush1.bf16.msra.mxu0 %v3474
    %4935 = vmatprep.subr.bf16.mxu0 %v3467
    %4936 = vmatpush1.bf16.msra.mxu0 %v3466
    %4937 = vmatprep.subr.bf16.mxu0 %v3459
    %4938 = vmatpush1.bf16.msra.mxu0 %v3458
    %4939 = vmatprep.subr.bf16.mxu0 %v3451
    %4940 = vmatpush1.bf16.msra.mxu0 %v3450
    %4941 = vmatprep.subr.bf16.mxu0 %v3443
    %4942 = vmatpush1.bf16.msra.mxu0 %v3442
    %4943 = vmatprep.subr.bf16.mxu0 %v3563
    %4944 = vmatpush2.bf16.msra.mxu0 %v3562
    %4945 = vmatprep.subr.bf16.mxu0 %v3555
    %4946 = vmatpush2.bf16.msra.mxu0 %v3554
    %4947 = vmatprep.subr.bf16.mxu0 %v3547
    %4948 = vmatpush2.bf16.msra.mxu0 %v3546
    %4949 = vmatprep.subr.bf16.mxu0 %v3539
    %4950 = vmatpush2.bf16.msra.mxu0 %v3538
    %4951 = vmatprep.subr.bf16.mxu0 %v3531
    %4952 = vmatpush2.bf16.msra.mxu0 %v3530
    %4953 = vmatprep.subr.bf16.mxu0 %v3523
    %4954 = vmatpush2.bf16.msra.mxu0 %v3522
    %4955 = vmatprep.subr.bf16.mxu0 %v3515
    %4956 = vmatpush2.bf16.msra.mxu0 %v3514
    %4957 = vmatprep.subr.bf16.mxu0 %v3507
    %4958 = vmatpush2.bf16.msra.mxu0 %v3506
    %4959 = vmatprep.mubr.bf16.mxu0 %v940
    %4960 = vmatmul.mubr.bf16.gmra.mxu0 %v939
    %v4961 = vpop.f32.mrf.mxu0
    %v4962 = vadd.f32 %v4921, %v4961
    %v4963 = vpop.f32.mrf.mxu0
    %v4964 = vadd.f32 %v4923, %v4963
    %v4965 = vpop.f32.mrf.mxu0
    %v4966 = vpop.f32.mrf.mxu0
    %4967 = vdwg.mxu0
    %4968 = vmatprep.subr.bf16.mxu0 %v3627
    %4969 = vmatpush1.bf16.msra.mxu0 %v3626
    %4970 = vmatprep.subr.bf16.mxu0 %v3619
    %4971 = vmatpush1.bf16.msra.mxu0 %v3618
    %4972 = vmatprep.subr.bf16.mxu0 %v3611
    %4973 = vmatpush1.bf16.msra.mxu0 %v3610
    %4974 = vmatprep.subr.bf16.mxu0 %v3603
    %4975 = vmatpush1.bf16.msra.mxu0 %v3602
    %4976 = vmatprep.subr.bf16.mxu0 %v3595
    %4977 = vmatpush1.bf16.msra.mxu0 %v3594
    %4978 = vmatprep.subr.bf16.mxu0 %v3587
    %4979 = vmatpush1.bf16.msra.mxu0 %v3586
    %4980 = vmatprep.subr.bf16.mxu0 %v3579
    %4981 = vmatpush1.bf16.msra.mxu0 %v3578
    %4982 = vmatprep.subr.bf16.mxu0 %v3571
    %4983 = vmatpush1.bf16.msra.mxu0 %v3570
    %4984 = vmatprep.subr.bf16.mxu0 %v3691
    %4985 = vmatpush2.bf16.msra.mxu0 %v3690
    %4986 = vmatprep.subr.bf16.mxu0 %v3683
    %4987 = vmatpush2.bf16.msra.mxu0 %v3682
    %4988 = vmatprep.subr.bf16.mxu0 %v3675
    %4989 = vmatpush2.bf16.msra.mxu0 %v3674
    %4990 = vmatprep.subr.bf16.mxu0 %v3667
    %4991 = vmatpush2.bf16.msra.mxu0 %v3666
    %4992 = vmatprep.subr.bf16.mxu0 %v3659
    %4993 = vmatpush2.bf16.msra.mxu0 %v3658
    %4994 = vmatprep.subr.bf16.mxu0 %v3651
    %4995 = vmatpush2.bf16.msra.mxu0 %v3650
    %4996 = vmatprep.subr.bf16.mxu0 %v3643
    %4997 = vmatpush2.bf16.msra.mxu0 %v3642
    %4998 = vmatprep.subr.bf16.mxu0 %v3635
    %4999 = vmatpush2.bf16.msra.mxu0 %v3634
    %5000 = vmatprep.mubr.bf16.mxu0 %v942
    %5001 = vmatmul.mubr.bf16.gmra.mxu0 %v941
    %v5002 = vpop.f32.mrf.mxu0
    %v5003 = vadd.f32 %v4962, %v5002
    %v5004 = vpop.f32.mrf.mxu0
    %v5005 = vadd.f32 %v4964, %v5004
    %v5006 = vpop.f32.mrf.mxu0
    %v5007 = vpop.f32.mrf.mxu0
    %5008 = vdwg.mxu0
    %5009 = vmatprep.subr.bf16.mxu0 %v3755
    %5010 = vmatpush1.bf16.msra.mxu0 %v3754
    %5011 = vmatprep.subr.bf16.mxu0 %v3747
    %5012 = vmatpush1.bf16.msra.mxu0 %v3746
    %5013 = vmatprep.subr.bf16.mxu0 %v3739
    %5014 = vmatpush1.bf16.msra.mxu0 %v3738
    %5015 = vmatprep.subr.bf16.mxu0 %v3731
    %5016 = vmatpush1.bf16.msra.mxu0 %v3730
    %5017 = vmatprep.subr.bf16.mxu0 %v3723
    %5018 = vmatpush1.bf16.msra.mxu0 %v3722
    %5019 = vmatprep.subr.bf16.mxu0 %v3715
    %5020 = vmatpush1.bf16.msra.mxu0 %v3714
    %5021 = vmatprep.subr.bf16.mxu0 %v3707
    %5022 = vmatpush1.bf16.msra.mxu0 %v3706
    %5023 = vmatprep.subr.bf16.mxu0 %v3699
    %5024 = vmatpush1.bf16.msra.mxu0 %v3698
    %5025 = vmatprep.subr.bf16.mxu0 %v3819
    %5026 = vmatpush2.bf16.msra.mxu0 %v3818
    %5027 = vmatprep.subr.bf16.mxu0 %v3811
    %5028 = vmatpush2.bf16.msra.mxu0 %v3810
    %5029 = vmatprep.subr.bf16.mxu0 %v3803
    %5030 = vmatpush2.bf16.msra.mxu0 %v3802
    %5031 = vmatprep.subr.bf16.mxu0 %v3795
    %5032 = vmatpush2.bf16.msra.mxu0 %v3794
    %5033 = vmatprep.subr.bf16.mxu0 %v3787
    %5034 = vmatpush2.bf16.msra.mxu0 %v3786
    %5035 = vmatprep.subr.bf16.mxu0 %v3779
    %5036 = vmatpush2.bf16.msra.mxu0 %v3778
    %5037 = vmatprep.subr.bf16.mxu0 %v3771
    %5038 = vmatpush2.bf16.msra.mxu0 %v3770
    %5039 = vmatprep.subr.bf16.mxu0 %v3763
    %5040 = vmatpush2.bf16.msra.mxu0 %v3762
    %5041 = vmatprep.mubr.bf16.mxu0 %v944
    %5042 = vmatmul.mubr.bf16.gmra.mxu0 %v943
    %v5043 = vpop.f32.mrf.mxu0
    %v5044 = vadd.f32 %v5003, %v5043
    %v5045 = vpop.f32.mrf.mxu0
    %v5046 = vadd.f32 %v5005, %v5045
    %v5047 = vpop.f32.mrf.mxu0
    %v5048 = vpop.f32.mrf.mxu0
    %5049 = vdwg.mxu0
    %5050 = vmatprep.subr.bf16.mxu0 %v3883
    %5051 = vmatpush1.bf16.msra.mxu0 %v3882
    %5052 = vmatprep.subr.bf16.mxu0 %v3875
    %5053 = vmatpush1.bf16.msra.mxu0 %v3874
    %5054 = vmatprep.subr.bf16.mxu0 %v3867
    %5055 = vmatpush1.bf16.msra.mxu0 %v3866
    %5056 = vmatprep.subr.bf16.mxu0 %v3859
    %5057 = vmatpush1.bf16.msra.mxu0 %v3858
    %5058 = vmatprep.subr.bf16.mxu0 %v3851
    %5059 = vmatpush1.bf16.msra.mxu0 %v3850
    %5060 = vmatprep.subr.bf16.mxu0 %v3843
    %5061 = vmatpush1.bf16.msra.mxu0 %v3842
    %5062 = vmatprep.subr.bf16.mxu0 %v3835
    %5063 = vmatpush1.bf16.msra.mxu0 %v3834
    %5064 = vmatprep.subr.bf16.mxu0 %v3827
    %5065 = vmatpush1.bf16.msra.mxu0 %v3826
    %5066 = vmatprep.subr.bf16.mxu0 %v3947
    %5067 = vmatpush2.bf16.msra.mxu0 %v3946
    %5068 = vmatprep.subr.bf16.mxu0 %v3939
    %5069 = vmatpush2.bf16.msra.mxu0 %v3938
    %5070 = vmatprep.subr.bf16.mxu0 %v3931
    %5071 = vmatpush2.bf16.msra.mxu0 %v3930
    %5072 = vmatprep.subr.bf16.mxu0 %v3923
    %5073 = vmatpush2.bf16.msra.mxu0 %v3922
    %5074 = vmatprep.subr.bf16.mxu0 %v3915
    %5075 = vmatpush2.bf16.msra.mxu0 %v3914
    %5076 = vmatprep.subr.bf16.mxu0 %v3907
    %5077 = vmatpush2.bf16.msra.mxu0 %v3906
    %5078 = vmatprep.subr.bf16.mxu0 %v3899
    %5079 = vmatpush2.bf16.msra.mxu0 %v3898
    %5080 = vmatprep.subr.bf16.mxu0 %v3891
    %5081 = vmatpush2.bf16.msra.mxu0 %v3890
    %5082 = vmatprep.mubr.bf16.mxu0 %v946
    %5083 = vmatmul.mubr.bf16.gmra.mxu0 %v945
    %v5084 = vpop.f32.mrf.mxu0
    %v5085 = vadd.f32 %v5044, %v5084
    %v5086 = vpop.f32.mrf.mxu0
    %v5087 = vadd.f32 %v5046, %v5086
    %v5088 = vpop.f32.mrf.mxu0
    %v5089 = vpop.f32.mrf.mxu0
    %5090 = vdwg.mxu0
    %5091 = vmatprep.subr.bf16.mxu0 %v4011
    %5092 = vmatpush1.bf16.msra.mxu0 %v4010
    %5093 = vmatprep.subr.bf16.mxu0 %v4003
    %5094 = vmatpush1.bf16.msra.mxu0 %v4002
    %5095 = vmatprep.subr.bf16.mxu0 %v3995
    %5096 = vmatpush1.bf16.msra.mxu0 %v3994
    %5097 = vmatprep.subr.bf16.mxu0 %v3987
    %5098 = vmatpush1.bf16.msra.mxu0 %v3986
    %5099 = vmatprep.subr.bf16.mxu0 %v3979
    %5100 = vmatpush1.bf16.msra.mxu0 %v3978
    %5101 = vmatprep.subr.bf16.mxu0 %v3971
    %5102 = vmatpush1.bf16.msra.mxu0 %v3970
    %5103 = vmatprep.subr.bf16.mxu0 %v3963
    %5104 = vmatpush1.bf16.msra.mxu0 %v3962
    %5105 = vmatprep.subr.bf16.mxu0 %v3955
    %5106 = vmatpush1.bf16.msra.mxu0 %v3954
    %5107 = vmatprep.subr.bf16.mxu0 %v4075
    %5108 = vmatpush2.bf16.msra.mxu0 %v4074
    %5109 = vmatprep.subr.bf16.mxu0 %v4067
    %5110 = vmatpush2.bf16.msra.mxu0 %v4066
    %5111 = vmatprep.subr.bf16.mxu0 %v4059
    %5112 = vmatpush2.bf16.msra.mxu0 %v4058
    %5113 = vmatprep.subr.bf16.mxu0 %v4051
    %5114 = vmatpush2.bf16.msra.mxu0 %v4050
    %5115 = vmatprep.subr.bf16.mxu0 %v4043
    %5116 = vmatpush2.bf16.msra.mxu0 %v4042
    %5117 = vmatprep.subr.bf16.mxu0 %v4035
    %5118 = vmatpush2.bf16.msra.mxu0 %v4034
    %5119 = vmatprep.subr.bf16.mxu0 %v4027
    %5120 = vmatpush2.bf16.msra.mxu0 %v4026
    %5121 = vmatprep.subr.bf16.mxu0 %v4019
    %5122 = vmatpush2.bf16.msra.mxu0 %v4018
    %5123 = vmatprep.mubr.bf16.mxu0 %v948
    %5124 = vmatmul.mubr.bf16.gmra.mxu0 %v947
    %v5125 = vpop.f32.mrf.mxu0
    %v5126 = vadd.f32 %v5085, %v5125
    %v5127 = vpop.f32.mrf.mxu0
    %v5128 = vadd.f32 %v5087, %v5127
    %v5129 = vpop.f32.mrf.mxu0
    %v5130 = vpop.f32.mrf.mxu0
    %5131 = vdwg.mxu0
    %5132 = vmatprep.subr.bf16.mxu0 0
    %5133 = vmatpush1.bf16.msra.mxu0 0
    %5134 = vmatprep.subr.bf16.mxu0 0
    %5135 = vmatpush1.bf16.msra.mxu0 0
    %5136 = vmatprep.subr.bf16.mxu0 0
    %5137 = vmatpush1.bf16.msra.mxu0 0
    %5138 = vmatprep.subr.bf16.mxu0 0
    %5139 = vmatpush1.bf16.msra.mxu0 0
    %5140 = vmatprep.subr.bf16.mxu0 0
    %5141 = vmatpush1.bf16.msra.mxu0 0
    %5142 = vmatprep.subr.bf16.mxu0 0
    %5143 = vmatpush1.bf16.msra.mxu0 0
    %5144 = vmatprep.subr.bf16.mxu0 %v4091
    %5145 = vmatpush1.bf16.msra.mxu0 %v4090
    %5146 = vmatprep.subr.bf16.mxu0 %v4083
    %5147 = vmatpush1.bf16.msra.mxu0 %v4082
    %5148 = vmatprep.subr.bf16.mxu0 0
    %5149 = vmatpush2.bf16.msra.mxu0 0
    %5150 = vmatprep.subr.bf16.mxu0 0
    %5151 = vmatpush2.bf16.msra.mxu0 0
    %5152 = vmatprep.subr.bf16.mxu0 0
    %5153 = vmatpush2.bf16.msra.mxu0 0
    %5154 = vmatprep.subr.bf16.mxu0 0
    %5155 = vmatpush2.bf16.msra.mxu0 0
    %5156 = vmatprep.subr.bf16.mxu0 0
    %5157 = vmatpush2.bf16.msra.mxu0 0
    %5158 = vmatprep.subr.bf16.mxu0 0
    %5159 = vmatpush2.bf16.msra.mxu0 0
    %5160 = vmatprep.subr.bf16.mxu0 0
    %5161 = vmatpush2.bf16.msra.mxu0 0
    %5162 = vmatprep.subr.bf16.mxu0 0
    %5163 = vmatpush2.bf16.msra.mxu0 0
    %5164 = vmatprep.mubr.bf16.mxu0 0
    %5165 = vmatmul.mubr.bf16.gmra.mxu0 %v4884
    %v5166 = vpop.f32.mrf.mxu0
    %v5167 = vadd.f32 %v5126, %v5166
    %v5168 = vpop.f32.mrf.mxu0
    %v5169 = vadd.f32 %v5128, %v5168
    %v5170 = vpop.f32.mrf.mxu0
    %v5171 = vpop.f32.mrf.mxu0
    %5172 = vdwg.mxu0
    %5173 = vmatprep.subr.bf16.mxu0 %v3373
    %5174 = vmatpush1.bf16.msra.mxu0 %v3372
    %5175 = vmatprep.subr.bf16.mxu0 %v3365
    %5176 = vmatpush1.bf16.msra.mxu0 %v3364
    %5177 = vmatprep.subr.bf16.mxu0 %v3357
    %5178 = vmatpush1.bf16.msra.mxu0 %v3356
    %5179 = vmatprep.subr.bf16.mxu0 %v3349
    %5180 = vmatpush1.bf16.msra.mxu0 %v3348
    %5181 = vmatprep.subr.bf16.mxu0 %v3341
    %5182 = vmatpush1.bf16.msra.mxu0 %v3340
    %5183 = vmatprep.subr.bf16.mxu0 %v3333
    %5184 = vmatpush1.bf16.msra.mxu0 %v3332
    %5185 = vmatprep.subr.bf16.mxu0 %v3325
    %5186 = vmatpush1.bf16.msra.mxu0 %v3324
    %5187 = vmatprep.subr.bf16.mxu0 %v3317
    %5188 = vmatpush1.bf16.msra.mxu0 %v3316
    %5189 = vmatprep.subr.bf16.mxu0 %v3437
    %5190 = vmatpush2.bf16.msra.mxu0 %v3436
    %5191 = vmatprep.subr.bf16.mxu0 %v3429
    %5192 = vmatpush2.bf16.msra.mxu0 %v3428
    %5193 = vmatprep.subr.bf16.mxu0 %v3421
    %5194 = vmatpush2.bf16.msra.mxu0 %v3420
    %5195 = vmatprep.subr.bf16.mxu0 %v3413
    %5196 = vmatpush2.bf16.msra.mxu0 %v3412
    %5197 = vmatprep.subr.bf16.mxu0 %v3405
    %5198 = vmatpush2.bf16.msra.mxu0 %v3404
    %5199 = vmatprep.subr.bf16.mxu0 %v3397
    %5200 = vmatpush2.bf16.msra.mxu0 %v3396
    %5201 = vmatprep.subr.bf16.mxu0 %v3389
    %5202 = vmatpush2.bf16.msra.mxu0 %v3388
    %5203 = vmatprep.subr.bf16.mxu0 %v3381
    %5204 = vmatpush2.bf16.msra.mxu0 %v3380
    %5205 = vmatprep.mubr.bf16.mxu0 %v938
    %5206 = vmatmul.mubr.bf16.gmra.mxu0 %v937
    %v5207 = vpop.f32.mrf.mxu0
    %v5208 = vadd.f32 %v888, %v5207
    %v5209 = vpop.f32.mrf.mxu0
    %v5210 = vadd.f32 %v892, %v5209
    %v5211 = vpop.f32.mrf.mxu0
    %v5212 = vpop.f32.mrf.mxu0
    %5213 = vdwg.mxu0
    %5214 = vmatprep.subr.bf16.mxu0 %v3501
    %5215 = vmatpush1.bf16.msra.mxu0 %v3500
    %5216 = vmatprep.subr.bf16.mxu0 %v3493
    %5217 = vmatpush1.bf16.msra.mxu0 %v3492
    %5218 = vmatprep.subr.bf16.mxu0 %v3485
    %5219 = vmatpush1.bf16.msra.mxu0 %v3484
    %5220 = vmatprep.subr.bf16.mxu0 %v3477
    %5221 = vmatpush1.bf16.msra.mxu0 %v3476
    %5222 = vmatprep.subr.bf16.mxu0 %v3469
    %5223 = vmatpush1.bf16.msra.mxu0 %v3468
    %5224 = vmatprep.subr.bf16.mxu0 %v3461
    %5225 = vmatpush1.bf16.msra.mxu0 %v3460
    %5226 = vmatprep.subr.bf16.mxu0 %v3453
    %5227 = vmatpush1.bf16.msra.mxu0 %v3452
    %5228 = vmatprep.subr.bf16.mxu0 %v3445
    %5229 = vmatpush1.bf16.msra.mxu0 %v3444
    %5230 = vmatprep.subr.bf16.mxu0 %v3565
    %5231 = vmatpush2.bf16.msra.mxu0 %v3564
    %5232 = vmatprep.subr.bf16.mxu0 %v3557
    %5233 = vmatpush2.bf16.msra.mxu0 %v3556
    %5234 = vmatprep.subr.bf16.mxu0 %v3549
    %5235 = vmatpush2.bf16.msra.mxu0 %v3548
    %5236 = vmatprep.subr.bf16.mxu0 %v3541
    %5237 = vmatpush2.bf16.msra.mxu0 %v3540
    %5238 = vmatprep.subr.bf16.mxu0 %v3533
    %5239 = vmatpush2.bf16.msra.mxu0 %v3532
    %5240 = vmatprep.subr.bf16.mxu0 %v3525
    %5241 = vmatpush2.bf16.msra.mxu0 %v3524
    %5242 = vmatprep.subr.bf16.mxu0 %v3517
    %5243 = vmatpush2.bf16.msra.mxu0 %v3516
    %5244 = vmatprep.subr.bf16.mxu0 %v3509
    %5245 = vmatpush2.bf16.msra.mxu0 %v3508
    %5246 = vmatprep.mubr.bf16.mxu0 %v940
    %5247 = vmatmul.mubr.bf16.gmra.mxu0 %v939
    %v5248 = vpop.f32.mrf.mxu0
    %v5249 = vadd.f32 %v5208, %v5248
    %v5250 = vpop.f32.mrf.mxu0
    %v5251 = vadd.f32 %v5210, %v5250
    %v5252 = vpop.f32.mrf.mxu0
    %v5253 = vpop.f32.mrf.mxu0
    %5254 = vdwg.mxu0
    %5255 = vmatprep.subr.bf16.mxu0 %v3629
    %5256 = vmatpush1.bf16.msra.mxu0 %v3628
    %5257 = vmatprep.subr.bf16.mxu0 %v3621
    %5258 = vmatpush1.bf16.msra.mxu0 %v3620
    %5259 = vmatprep.subr.bf16.mxu0 %v3613
    %5260 = vmatpush1.bf16.msra.mxu0 %v3612
    %5261 = vmatprep.subr.bf16.mxu0 %v3605
    %5262 = vmatpush1.bf16.msra.mxu0 %v3604
    %5263 = vmatprep.subr.bf16.mxu0 %v3597
    %5264 = vmatpush1.bf16.msra.mxu0 %v3596
    %5265 = vmatprep.subr.bf16.mxu0 %v3589
    %5266 = vmatpush1.bf16.msra.mxu0 %v3588
    %5267 = vmatprep.subr.bf16.mxu0 %v3581
    %5268 = vmatpush1.bf16.msra.mxu0 %v3580
    %5269 = vmatprep.subr.bf16.mxu0 %v3573
    %5270 = vmatpush1.bf16.msra.mxu0 %v3572
    %5271 = vmatprep.subr.bf16.mxu0 %v3693
    %5272 = vmatpush2.bf16.msra.mxu0 %v3692
    %5273 = vmatprep.subr.bf16.mxu0 %v3685
    %5274 = vmatpush2.bf16.msra.mxu0 %v3684
    %5275 = vmatprep.subr.bf16.mxu0 %v3677
    %5276 = vmatpush2.bf16.msra.mxu0 %v3676
    %5277 = vmatprep.subr.bf16.mxu0 %v3669
    %5278 = vmatpush2.bf16.msra.mxu0 %v3668
    %5279 = vmatprep.subr.bf16.mxu0 %v3661
    %5280 = vmatpush2.bf16.msra.mxu0 %v3660
    %5281 = vmatprep.subr.bf16.mxu0 %v3653
    %5282 = vmatpush2.bf16.msra.mxu0 %v3652
    %5283 = vmatprep.subr.bf16.mxu0 %v3645
    %5284 = vmatpush2.bf16.msra.mxu0 %v3644
    %5285 = vmatprep.subr.bf16.mxu0 %v3637
    %5286 = vmatpush2.bf16.msra.mxu0 %v3636
    %5287 = vmatprep.mubr.bf16.mxu0 %v942
    %5288 = vmatmul.mubr.bf16.gmra.mxu0 %v941
    %v5289 = vpop.f32.mrf.mxu0
    %v5290 = vadd.f32 %v5249, %v5289
    %v5291 = vpop.f32.mrf.mxu0
    %v5292 = vadd.f32 %v5251, %v5291
    %v5293 = vpop.f32.mrf.mxu0
    %v5294 = vpop.f32.mrf.mxu0
    %5295 = vdwg.mxu0
    %5296 = vmatprep.subr.bf16.mxu0 %v3757
    %5297 = vmatpush1.bf16.msra.mxu0 %v3756
    %5298 = vmatprep.subr.bf16.mxu0 %v3749
    %5299 = vmatpush1.bf16.msra.mxu0 %v3748
    %5300 = vmatprep.subr.bf16.mxu0 %v3741
    %5301 = vmatpush1.bf16.msra.mxu0 %v3740
    %5302 = vmatprep.subr.bf16.mxu0 %v3733
    %5303 = vmatpush1.bf16.msra.mxu0 %v3732
    %5304 = vmatprep.subr.bf16.mxu0 %v3725
    %5305 = vmatpush1.bf16.msra.mxu0 %v3724
    %5306 = vmatprep.subr.bf16.mxu0 %v3717
    %5307 = vmatpush1.bf16.msra.mxu0 %v3716
    %5308 = vmatprep.subr.bf16.mxu0 %v3709
    %5309 = vmatpush1.bf16.msra.mxu0 %v3708
    %5310 = vmatprep.subr.bf16.mxu0 %v3701
    %5311 = vmatpush1.bf16.msra.mxu0 %v3700
    %5312 = vmatprep.subr.bf16.mxu0 %v3821
    %5313 = vmatpush2.bf16.msra.mxu0 %v3820
    %5314 = vmatprep.subr.bf16.mxu0 %v3813
    %5315 = vmatpush2.bf16.msra.mxu0 %v3812
    %5316 = vmatprep.subr.bf16.mxu0 %v3805
    %5317 = vmatpush2.bf16.msra.mxu0 %v3804
    %5318 = vmatprep.subr.bf16.mxu0 %v3797
    %5319 = vmatpush2.bf16.msra.mxu0 %v3796
    %5320 = vmatprep.subr.bf16.mxu0 %v3789
    %5321 = vmatpush2.bf16.msra.mxu0 %v3788
    %5322 = vmatprep.subr.bf16.mxu0 %v3781
    %5323 = vmatpush2.bf16.msra.mxu0 %v3780
    %5324 = vmatprep.subr.bf16.mxu0 %v3773
    %5325 = vmatpush2.bf16.msra.mxu0 %v3772
    %5326 = vmatprep.subr.bf16.mxu0 %v3765
    %5327 = vmatpush2.bf16.msra.mxu0 %v3764
    %5328 = vmatprep.mubr.bf16.mxu0 %v944
    %5329 = vmatmul.mubr.bf16.gmra.mxu0 %v943
    %v5330 = vpop.f32.mrf.mxu0
    %v5331 = vadd.f32 %v5290, %v5330
    %v5332 = vpop.f32.mrf.mxu0
    %v5333 = vadd.f32 %v5292, %v5332
    %v5334 = vpop.f32.mrf.mxu0
    %v5335 = vpop.f32.mrf.mxu0
    %5336 = vdwg.mxu0
    %5337 = vmatprep.subr.bf16.mxu0 %v3885
    %5338 = vmatpush1.bf16.msra.mxu0 %v3884
    %5339 = vmatprep.subr.bf16.mxu0 %v3877
    %5340 = vmatpush1.bf16.msra.mxu0 %v3876
    %5341 = vmatprep.subr.bf16.mxu0 %v3869
    %5342 = vmatpush1.bf16.msra.mxu0 %v3868
    %5343 = vmatprep.subr.bf16.mxu0 %v3861
    %5344 = vmatpush1.bf16.msra.mxu0 %v3860
    %5345 = vmatprep.subr.bf16.mxu0 %v3853
    %5346 = vmatpush1.bf16.msra.mxu0 %v3852
    %5347 = vmatprep.subr.bf16.mxu0 %v3845
    %5348 = vmatpush1.bf16.msra.mxu0 %v3844
    %5349 = vmatprep.subr.bf16.mxu0 %v3837
    %5350 = vmatpush1.bf16.msra.mxu0 %v3836
    %5351 = vmatprep.subr.bf16.mxu0 %v3829
    %5352 = vmatpush1.bf16.msra.mxu0 %v3828
    %5353 = vmatprep.subr.bf16.mxu0 %v3949
    %5354 = vmatpush2.bf16.msra.mxu0 %v3948
    %5355 = vmatprep.subr.bf16.mxu0 %v3941
    %5356 = vmatpush2.bf16.msra.mxu0 %v3940
    %5357 = vmatprep.subr.bf16.mxu0 %v3933
    %5358 = vmatpush2.bf16.msra.mxu0 %v3932
    %5359 = vmatprep.subr.bf16.mxu0 %v3925
    %5360 = vmatpush2.bf16.msra.mxu0 %v3924
    %5361 = vmatprep.subr.bf16.mxu0 %v3917
    %5362 = vmatpush2.bf16.msra.mxu0 %v3916
    %5363 = vmatprep.subr.bf16.mxu0 %v3909
    %5364 = vmatpush2.bf16.msra.mxu0 %v3908
    %5365 = vmatprep.subr.bf16.mxu0 %v3901
    %5366 = vmatpush2.bf16.msra.mxu0 %v3900
    %5367 = vmatprep.subr.bf16.mxu0 %v3893
    %5368 = vmatpush2.bf16.msra.mxu0 %v3892
    %5369 = vmatprep.mubr.bf16.mxu0 %v946
    %5370 = vmatmul.mubr.bf16.gmra.mxu0 %v945
    %v5371 = vpop.f32.mrf.mxu0
    %v5372 = vadd.f32 %v5331, %v5371
    %v5373 = vpop.f32.mrf.mxu0
    %v5374 = vadd.f32 %v5333, %v5373
    %v5375 = vpop.f32.mrf.mxu0
    %v5376 = vpop.f32.mrf.mxu0
    %5377 = vdwg.mxu0
    %5378 = vmatprep.subr.bf16.mxu0 %v4013
    %5379 = vmatpush1.bf16.msra.mxu0 %v4012
    %5380 = vmatprep.subr.bf16.mxu0 %v4005
    %5381 = vmatpush1.bf16.msra.mxu0 %v4004
    %5382 = vmatprep.subr.bf16.mxu0 %v3997
    %5383 = vmatpush1.bf16.msra.mxu0 %v3996
    %5384 = vmatprep.subr.bf16.mxu0 %v3989
    %5385 = vmatpush1.bf16.msra.mxu0 %v3988
    %5386 = vmatprep.subr.bf16.mxu0 %v3981
    %5387 = vmatpush1.bf16.msra.mxu0 %v3980
    %5388 = vmatprep.subr.bf16.mxu0 %v3973
    %5389 = vmatpush1.bf16.msra.mxu0 %v3972
    %5390 = vmatprep.subr.bf16.mxu0 %v3965
    %5391 = vmatpush1.bf16.msra.mxu0 %v3964
    %5392 = vmatprep.subr.bf16.mxu0 %v3957
    %5393 = vmatpush1.bf16.msra.mxu0 %v3956
    %5394 = vmatprep.subr.bf16.mxu0 %v4077
    %5395 = vmatpush2.bf16.msra.mxu0 %v4076
    %5396 = vmatprep.subr.bf16.mxu0 %v4069
    %5397 = vmatpush2.bf16.msra.mxu0 %v4068
    %5398 = vmatprep.subr.bf16.mxu0 %v4061
    %5399 = vmatpush2.bf16.msra.mxu0 %v4060
    %5400 = vmatprep.subr.bf16.mxu0 %v4053
    %5401 = vmatpush2.bf16.msra.mxu0 %v4052
    %5402 = vmatprep.subr.bf16.mxu0 %v4045
    %5403 = vmatpush2.bf16.msra.mxu0 %v4044
    %5404 = vmatprep.subr.bf16.mxu0 %v4037
    %5405 = vmatpush2.bf16.msra.mxu0 %v4036
    %5406 = vmatprep.subr.bf16.mxu0 %v4029
    %5407 = vmatpush2.bf16.msra.mxu0 %v4028
    %5408 = vmatprep.subr.bf16.mxu0 %v4021
    %5409 = vmatpush2.bf16.msra.mxu0 %v4020
    %5410 = vmatprep.mubr.bf16.mxu0 %v948
    %5411 = vmatmul.mubr.bf16.gmra.mxu0 %v947
    %v5412 = vpop.f32.mrf.mxu0
    %v5413 = vadd.f32 %v5372, %v5412
    %v5414 = vpop.f32.mrf.mxu0
    %v5415 = vadd.f32 %v5374, %v5414
    %v5416 = vpop.f32.mrf.mxu0
    %v5417 = vpop.f32.mrf.mxu0
    %5418 = vdwg.mxu0
    %5419 = vmatprep.subr.bf16.mxu0 0
    %5420 = vmatpush1.bf16.msra.mxu0 0
    %5421 = vmatprep.subr.bf16.mxu0 0
    %5422 = vmatpush1.bf16.msra.mxu0 0
    %5423 = vmatprep.subr.bf16.mxu0 0
    %5424 = vmatpush1.bf16.msra.mxu0 0
    %5425 = vmatprep.subr.bf16.mxu0 0
    %5426 = vmatpush1.bf16.msra.mxu0 0
    %5427 = vmatprep.subr.bf16.mxu0 0
    %5428 = vmatpush1.bf16.msra.mxu0 0
    %5429 = vmatprep.subr.bf16.mxu0 0
    %5430 = vmatpush1.bf16.msra.mxu0 0
    %5431 = vmatprep.subr.bf16.mxu0 %v4093
    %5432 = vmatpush1.bf16.msra.mxu0 %v4092
    %5433 = vmatprep.subr.bf16.mxu0 %v4085
    %5434 = vmatpush1.bf16.msra.mxu0 %v4084
    %5435 = vmatprep.subr.bf16.mxu0 0
    %5436 = vmatpush2.bf16.msra.mxu0 0
    %5437 = vmatprep.subr.bf16.mxu0 0
    %5438 = vmatpush2.bf16.msra.mxu0 0
    %5439 = vmatprep.subr.bf16.mxu0 0
    %5440 = vmatpush2.bf16.msra.mxu0 0
    %5441 = vmatprep.subr.bf16.mxu0 0
    %5442 = vmatpush2.bf16.msra.mxu0 0
    %5443 = vmatprep.subr.bf16.mxu0 0
    %5444 = vmatpush2.bf16.msra.mxu0 0
    %5445 = vmatprep.subr.bf16.mxu0 0
    %5446 = vmatpush2.bf16.msra.mxu0 0
    %5447 = vmatprep.subr.bf16.mxu0 0
    %5448 = vmatpush2.bf16.msra.mxu0 0
    %5449 = vmatprep.subr.bf16.mxu0 0
    %5450 = vmatpush2.bf16.msra.mxu0 0
    %5451 = vmatprep.mubr.bf16.mxu0 0
    %5452 = vmatmul.mubr.bf16.gmra.mxu0 %v4884
    %v5453 = vpop.f32.mrf.mxu0
    %v5454 = vadd.f32 %v5413, %v5453
    %v5455 = vpop.f32.mrf.mxu0
    %v5456 = vadd.f32 %v5415, %v5455
    %v5457 = vpop.f32.mrf.mxu0
    %v5458 = vpop.f32.mrf.mxu0
    %5459 = vdwg.mxu0
    %5460 = vmatprep.subr.bf16.mxu0 %v3375
    %5461 = vmatpush1.bf16.msra.mxu0 %v3374
    %5462 = vmatprep.subr.bf16.mxu0 %v3367
    %5463 = vmatpush1.bf16.msra.mxu0 %v3366
    %5464 = vmatprep.subr.bf16.mxu0 %v3359
    %5465 = vmatpush1.bf16.msra.mxu0 %v3358
    %5466 = vmatprep.subr.bf16.mxu0 %v3351
    %5467 = vmatpush1.bf16.msra.mxu0 %v3350
    %5468 = vmatprep.subr.bf16.mxu0 %v3343
    %5469 = vmatpush1.bf16.msra.mxu0 %v3342
    %5470 = vmatprep.subr.bf16.mxu0 %v3335
    %5471 = vmatpush1.bf16.msra.mxu0 %v3334
    %5472 = vmatprep.subr.bf16.mxu0 %v3327
    %5473 = vmatpush1.bf16.msra.mxu0 %v3326
    %5474 = vmatprep.subr.bf16.mxu0 %v3319
    %5475 = vmatpush1.bf16.msra.mxu0 %v3318
    %5476 = vmatprep.subr.bf16.mxu0 %v3439
    %5477 = vmatpush2.bf16.msra.mxu0 %v3438
    %5478 = vmatprep.subr.bf16.mxu0 %v3431
    %5479 = vmatpush2.bf16.msra.mxu0 %v3430
    %5480 = vmatprep.subr.bf16.mxu0 %v3423
    %5481 = vmatpush2.bf16.msra.mxu0 %v3422
    %5482 = vmatprep.subr.bf16.mxu0 %v3415
    %5483 = vmatpush2.bf16.msra.mxu0 %v3414
    %5484 = vmatprep.subr.bf16.mxu0 %v3407
    %5485 = vmatpush2.bf16.msra.mxu0 %v3406
    %5486 = vmatprep.subr.bf16.mxu0 %v3399
    %5487 = vmatpush2.bf16.msra.mxu0 %v3398
    %5488 = vmatprep.subr.bf16.mxu0 %v3391
    %5489 = vmatpush2.bf16.msra.mxu0 %v3390
    %5490 = vmatprep.subr.bf16.mxu0 %v3383
    %5491 = vmatpush2.bf16.msra.mxu0 %v3382
    %5492 = vmatprep.mubr.bf16.mxu0 %v938
    %5493 = vmatmul.mubr.bf16.gmra.mxu0 %v937
    %v5494 = vpop.f32.mrf.mxu0
    %v5495 = vadd.f32 %v896, %v5494
    %v5496 = vpop.f32.mrf.mxu0
    %v5497 = vadd.f32 %v900, %v5496
    %v5498 = vpop.f32.mrf.mxu0
    %v5499 = vpop.f32.mrf.mxu0
    %5500 = vdwg.mxu0
    %5501 = vmatprep.subr.bf16.mxu0 %v3503
    %5502 = vmatpush1.bf16.msra.mxu0 %v3502
    %5503 = vmatprep.subr.bf16.mxu0 %v3495
    %5504 = vmatpush1.bf16.msra.mxu0 %v3494
    %5505 = vmatprep.subr.bf16.mxu0 %v3487
    %5506 = vmatpush1.bf16.msra.mxu0 %v3486
    %5507 = vmatprep.subr.bf16.mxu0 %v3479
    %5508 = vmatpush1.bf16.msra.mxu0 %v3478
    %5509 = vmatprep.subr.bf16.mxu0 %v3471
    %5510 = vmatpush1.bf16.msra.mxu0 %v3470
    %5511 = vmatprep.subr.bf16.mxu0 %v3463
    %5512 = vmatpush1.bf16.msra.mxu0 %v3462
    %5513 = vmatprep.subr.bf16.mxu0 %v3455
    %5514 = vmatpush1.bf16.msra.mxu0 %v3454
    %5515 = vmatprep.subr.bf16.mxu0 %v3447
    %5516 = vmatpush1.bf16.msra.mxu0 %v3446
    %5517 = vmatprep.subr.bf16.mxu0 %v3567
    %5518 = vmatpush2.bf16.msra.mxu0 %v3566
    %5519 = vmatprep.subr.bf16.mxu0 %v3559
    %5520 = vmatpush2.bf16.msra.mxu0 %v3558
    %5521 = vmatprep.subr.bf16.mxu0 %v3551
    %5522 = vmatpush2.bf16.msra.mxu0 %v3550
    %5523 = vmatprep.subr.bf16.mxu0 %v3543
    %5524 = vmatpush2.bf16.msra.mxu0 %v3542
    %5525 = vmatprep.subr.bf16.mxu0 %v3535
    %5526 = vmatpush2.bf16.msra.mxu0 %v3534
    %5527 = vmatprep.subr.bf16.mxu0 %v3527
    %5528 = vmatpush2.bf16.msra.mxu0 %v3526
    %5529 = vmatprep.subr.bf16.mxu0 %v3519
    %5530 = vmatpush2.bf16.msra.mxu0 %v3518
    %5531 = vmatprep.subr.bf16.mxu0 %v3511
    %5532 = vmatpush2.bf16.msra.mxu0 %v3510
    %5533 = vmatprep.mubr.bf16.mxu0 %v940
    %5534 = vmatmul.mubr.bf16.gmra.mxu0 %v939
    %v5535 = vpop.f32.mrf.mxu0
    %v5536 = vadd.f32 %v5495, %v5535
    %v5537 = vpop.f32.mrf.mxu0
    %v5538 = vadd.f32 %v5497, %v5537
    %v5539 = vpop.f32.mrf.mxu0
    %v5540 = vpop.f32.mrf.mxu0
    %5541 = vdwg.mxu0
    %5542 = vmatprep.subr.bf16.mxu0 %v3631
    %5543 = vmatpush1.bf16.msra.mxu0 %v3630
    %5544 = vmatprep.subr.bf16.mxu0 %v3623
    %5545 = vmatpush1.bf16.msra.mxu0 %v3622
    %5546 = vmatprep.subr.bf16.mxu0 %v3615
    %5547 = vmatpush1.bf16.msra.mxu0 %v3614
    %5548 = vmatprep.subr.bf16.mxu0 %v3607
    %5549 = vmatpush1.bf16.msra.mxu0 %v3606
    %5550 = vmatprep.subr.bf16.mxu0 %v3599
    %5551 = vmatpush1.bf16.msra.mxu0 %v3598
    %5552 = vmatprep.subr.bf16.mxu0 %v3591
    %5553 = vmatpush1.bf16.msra.mxu0 %v3590
    %5554 = vmatprep.subr.bf16.mxu0 %v3583
    %5555 = vmatpush1.bf16.msra.mxu0 %v3582
    %5556 = vmatprep.subr.bf16.mxu0 %v3575
    %5557 = vmatpush1.bf16.msra.mxu0 %v3574
    %5558 = vmatprep.subr.bf16.mxu0 %v3695
    %5559 = vmatpush2.bf16.msra.mxu0 %v3694
    %5560 = vmatprep.subr.bf16.mxu0 %v3687
    %5561 = vmatpush2.bf16.msra.mxu0 %v3686
    %5562 = vmatprep.subr.bf16.mxu0 %v3679
    %5563 = vmatpush2.bf16.msra.mxu0 %v3678
    %5564 = vmatprep.subr.bf16.mxu0 %v3671
    %5565 = vmatpush2.bf16.msra.mxu0 %v3670
    %5566 = vmatprep.subr.bf16.mxu0 %v3663
    %5567 = vmatpush2.bf16.msra.mxu0 %v3662
    %5568 = vmatprep.subr.bf16.mxu0 %v3655
    %5569 = vmatpush2.bf16.msra.mxu0 %v3654
    %5570 = vmatprep.subr.bf16.mxu0 %v3647
    %5571 = vmatpush2.bf16.msra.mxu0 %v3646
    %5572 = vmatprep.subr.bf16.mxu0 %v3639
    %5573 = vmatpush2.bf16.msra.mxu0 %v3638
    %5574 = vmatprep.mubr.bf16.mxu0 %v942
    %5575 = vmatmul.mubr.bf16.gmra.mxu0 %v941
    %v5576 = vpop.f32.mrf.mxu0
    %v5577 = vadd.f32 %v5536, %v5576
    %v5578 = vpop.f32.mrf.mxu0
    %v5579 = vadd.f32 %v5538, %v5578
    %v5580 = vpop.f32.mrf.mxu0
    %v5581 = vpop.f32.mrf.mxu0
    %5582 = vdwg.mxu0
    %5583 = vmatprep.subr.bf16.mxu0 %v3759
    %5584 = vmatpush1.bf16.msra.mxu0 %v3758
    %5585 = vmatprep.subr.bf16.mxu0 %v3751
    %5586 = vmatpush1.bf16.msra.mxu0 %v3750
    %5587 = vmatprep.subr.bf16.mxu0 %v3743
    %5588 = vmatpush1.bf16.msra.mxu0 %v3742
    %5589 = vmatprep.subr.bf16.mxu0 %v3735
    %5590 = vmatpush1.bf16.msra.mxu0 %v3734
    %5591 = vmatprep.subr.bf16.mxu0 %v3727
    %5592 = vmatpush1.bf16.msra.mxu0 %v3726
    %5593 = vmatprep.subr.bf16.mxu0 %v3719
    %5594 = vmatpush1.bf16.msra.mxu0 %v3718
    %5595 = vmatprep.subr.bf16.mxu0 %v3711
    %5596 = vmatpush1.bf16.msra.mxu0 %v3710
    %5597 = vmatprep.subr.bf16.mxu0 %v3703
    %5598 = vmatpush1.bf16.msra.mxu0 %v3702
    %5599 = vmatprep.subr.bf16.mxu0 %v3823
    %5600 = vmatpush2.bf16.msra.mxu0 %v3822
    %5601 = vmatprep.subr.bf16.mxu0 %v3815
    %5602 = vmatpush2.bf16.msra.mxu0 %v3814
    %5603 = vmatprep.subr.bf16.mxu0 %v3807
    %5604 = vmatpush2.bf16.msra.mxu0 %v3806
    %5605 = vmatprep.subr.bf16.mxu0 %v3799
    %5606 = vmatpush2.bf16.msra.mxu0 %v3798
    %5607 = vmatprep.subr.bf16.mxu0 %v3791
    %5608 = vmatpush2.bf16.msra.mxu0 %v3790
    %5609 = vmatprep.subr.bf16.mxu0 %v3783
    %5610 = vmatpush2.bf16.msra.mxu0 %v3782
    %5611 = vmatprep.subr.bf16.mxu0 %v3775
    %5612 = vmatpush2.bf16.msra.mxu0 %v3774
    %5613 = vmatprep.subr.bf16.mxu0 %v3767
    %5614 = vmatpush2.bf16.msra.mxu0 %v3766
    %5615 = vmatprep.mubr.bf16.mxu0 %v944
    %5616 = vmatmul.mubr.bf16.gmra.mxu0 %v943
    %v5617 = vpop.f32.mrf.mxu0
    %v5618 = vadd.f32 %v5577, %v5617
    %v5619 = vpop.f32.mrf.mxu0
    %v5620 = vadd.f32 %v5579, %v5619
    %v5621 = vpop.f32.mrf.mxu0
    %v5622 = vpop.f32.mrf.mxu0
    %5623 = vdwg.mxu0
    %5624 = vmatprep.subr.bf16.mxu0 %v3887
    %5625 = vmatpush1.bf16.msra.mxu0 %v3886
    %5626 = vmatprep.subr.bf16.mxu0 %v3879
    %5627 = vmatpush1.bf16.msra.mxu0 %v3878
    %5628 = vmatprep.subr.bf16.mxu0 %v3871
    %5629 = vmatpush1.bf16.msra.mxu0 %v3870
    %5630 = vmatprep.subr.bf16.mxu0 %v3863
    %5631 = vmatpush1.bf16.msra.mxu0 %v3862
    %5632 = vmatprep.subr.bf16.mxu0 %v3855
    %5633 = vmatpush1.bf16.msra.mxu0 %v3854
    %5634 = vmatprep.subr.bf16.mxu0 %v3847
    %5635 = vmatpush1.bf16.msra.mxu0 %v3846
    %5636 = vmatprep.subr.bf16.mxu0 %v3839
    %5637 = vmatpush1.bf16.msra.mxu0 %v3838
    %5638 = vmatprep.subr.bf16.mxu0 %v3831
    %5639 = vmatpush1.bf16.msra.mxu0 %v3830
    %5640 = vmatprep.subr.bf16.mxu0 %v3951
    %5641 = vmatpush2.bf16.msra.mxu0 %v3950
    %5642 = vmatprep.subr.bf16.mxu0 %v3943
    %5643 = vmatpush2.bf16.msra.mxu0 %v3942
    %5644 = vmatprep.subr.bf16.mxu0 %v3935
    %5645 = vmatpush2.bf16.msra.mxu0 %v3934
    %5646 = vmatprep.subr.bf16.mxu0 %v3927
    %5647 = vmatpush2.bf16.msra.mxu0 %v3926
    %5648 = vmatprep.subr.bf16.mxu0 %v3919
    %5649 = vmatpush2.bf16.msra.mxu0 %v3918
    %5650 = vmatprep.subr.bf16.mxu0 %v3911
    %5651 = vmatpush2.bf16.msra.mxu0 %v3910
    %5652 = vmatprep.subr.bf16.mxu0 %v3903
    %5653 = vmatpush2.bf16.msra.mxu0 %v3902
    %5654 = vmatprep.subr.bf16.mxu0 %v3895
    %5655 = vmatpush2.bf16.msra.mxu0 %v3894
    %5656 = vmatprep.mubr.bf16.mxu0 %v946
    %5657 = vmatmul.mubr.bf16.gmra.mxu0 %v945
    %v5658 = vpop.f32.mrf.mxu0
    %v5659 = vadd.f32 %v5618, %v5658
    %v5660 = vpop.f32.mrf.mxu0
    %v5661 = vadd.f32 %v5620, %v5660
    %v5662 = vpop.f32.mrf.mxu0
    %v5663 = vpop.f32.mrf.mxu0
    %5664 = vdwg.mxu0
    %5665 = vmatprep.subr.bf16.mxu0 %v4015
    %5666 = vmatpush1.bf16.msra.mxu0 %v4014
    %5667 = vmatprep.subr.bf16.mxu0 %v4007
    %5668 = vmatpush1.bf16.msra.mxu0 %v4006
    %5669 = vmatprep.subr.bf16.mxu0 %v3999
    %5670 = vmatpush1.bf16.msra.mxu0 %v3998
    %5671 = vmatprep.subr.bf16.mxu0 %v3991
    %5672 = vmatpush1.bf16.msra.mxu0 %v3990
    %5673 = vmatprep.subr.bf16.mxu0 %v3983
    %5674 = vmatpush1.bf16.msra.mxu0 %v3982
    %5675 = vmatprep.subr.bf16.mxu0 %v3975
    %5676 = vmatpush1.bf16.msra.mxu0 %v3974
    %5677 = vmatprep.subr.bf16.mxu0 %v3967
    %5678 = vmatpush1.bf16.msra.mxu0 %v3966
    %5679 = vmatprep.subr.bf16.mxu0 %v3959
    %5680 = vmatpush1.bf16.msra.mxu0 %v3958
    %5681 = vmatprep.subr.bf16.mxu0 %v4079
    %5682 = vmatpush2.bf16.msra.mxu0 %v4078
    %5683 = vmatprep.subr.bf16.mxu0 %v4071
    %5684 = vmatpush2.bf16.msra.mxu0 %v4070
    %5685 = vmatprep.subr.bf16.mxu0 %v4063
    %5686 = vmatpush2.bf16.msra.mxu0 %v4062
    %5687 = vmatprep.subr.bf16.mxu0 %v4055
    %5688 = vmatpush2.bf16.msra.mxu0 %v4054
    %5689 = vmatprep.subr.bf16.mxu0 %v4047
    %5690 = vmatpush2.bf16.msra.mxu0 %v4046
    %5691 = vmatprep.subr.bf16.mxu0 %v4039
    %5692 = vmatpush2.bf16.msra.mxu0 %v4038
    %5693 = vmatprep.subr.bf16.mxu0 %v4031
    %5694 = vmatpush2.bf16.msra.mxu0 %v4030
    %5695 = vmatprep.subr.bf16.mxu0 %v4023
    %5696 = vmatpush2.bf16.msra.mxu0 %v4022
    %5697 = vmatprep.mubr.bf16.mxu0 %v948
    %5698 = vmatmul.mubr.bf16.gmra.mxu0 %v947
    %v5699 = vpop.f32.mrf.mxu0
    %v5700 = vadd.f32 %v5659, %v5699
    %v5701 = vpop.f32.mrf.mxu0
    %v5702 = vadd.f32 %v5661, %v5701
    %v5703 = vpop.f32.mrf.mxu0
    %v5704 = vpop.f32.mrf.mxu0
    %5705 = vdwg.mxu0
    %5706 = vmatprep.subr.bf16.mxu0 0
    %5707 = vmatpush1.bf16.msra.mxu0 0
    %5708 = vmatprep.subr.bf16.mxu0 0
    %5709 = vmatpush1.bf16.msra.mxu0 0
    %5710 = vmatprep.subr.bf16.mxu0 0
    %5711 = vmatpush1.bf16.msra.mxu0 0
    %5712 = vmatprep.subr.bf16.mxu0 0
    %5713 = vmatpush1.bf16.msra.mxu0 0
    %5714 = vmatprep.subr.bf16.mxu0 0
    %5715 = vmatpush1.bf16.msra.mxu0 0
    %5716 = vmatprep.subr.bf16.mxu0 0
    %5717 = vmatpush1.bf16.msra.mxu0 0
    %5718 = vmatprep.subr.bf16.mxu0 %v4095
    %5719 = vmatpush1.bf16.msra.mxu0 %v4094
    %5720 = vmatprep.subr.bf16.mxu0 %v4087
    %5721 = vmatpush1.bf16.msra.mxu0 %v4086
    %5722 = vmatprep.subr.bf16.mxu0 0
    %5723 = vmatpush2.bf16.msra.mxu0 0
    %5724 = vmatprep.subr.bf16.mxu0 0
    %5725 = vmatpush2.bf16.msra.mxu0 0
    %5726 = vmatprep.subr.bf16.mxu0 0
    %5727 = vmatpush2.bf16.msra.mxu0 0
    %5728 = vmatprep.subr.bf16.mxu0 0
    %5729 = vmatpush2.bf16.msra.mxu0 0
    %5730 = vmatprep.subr.bf16.mxu0 0
    %5731 = vmatpush2.bf16.msra.mxu0 0
    %5732 = vmatprep.subr.bf16.mxu0 0
    %5733 = vmatpush2.bf16.msra.mxu0 0
    %5734 = vmatprep.subr.bf16.mxu0 0
    %5735 = vmatpush2.bf16.msra.mxu0 0
    %5736 = vmatprep.subr.bf16.mxu0 0
    %5737 = vmatpush2.bf16.msra.mxu0 0
    %5738 = vmatprep.mubr.bf16.mxu0 0
    %5739 = vmatmul.mubr.bf16.gmra.mxu0 %v4884
    %v5740 = vpop.f32.mrf.mxu0
    %v5741 = vadd.f32 %v5700, %v5740
    %v5742 = vpop.f32.mrf.mxu0
    %v5743 = vadd.f32 %v5702, %v5742
    %v5744 = vpop.f32.mrf.mxu0
    %v5745 = vpop.f32.mrf.mxu0
    %5746 = vdwg.mxu0
    %5747 = vmatprep.subr.bf16.mxu0 %v3377
    %5748 = vmatpush1.bf16.msra.mxu0 %v3376
    %5749 = vmatprep.subr.bf16.mxu0 %v3369
    %5750 = vmatpush1.bf16.msra.mxu0 %v3368
    %5751 = vmatprep.subr.bf16.mxu0 %v3361
    %5752 = vmatpush1.bf16.msra.mxu0 %v3360
    %5753 = vmatprep.subr.bf16.mxu0 %v3353
    %5754 = vmatpush1.bf16.msra.mxu0 %v3352
    %5755 = vmatprep.subr.bf16.mxu0 %v3345
    %5756 = vmatpush1.bf16.msra.mxu0 %v3344
    %5757 = vmatprep.subr.bf16.mxu0 %v3337
    %5758 = vmatpush1.bf16.msra.mxu0 %v3336
    %5759 = vmatprep.subr.bf16.mxu0 %v3329
    %5760 = vmatpush1.bf16.msra.mxu0 %v3328
    %5761 = vmatprep.subr.bf16.mxu0 %v3321
    %5762 = vmatpush1.bf16.msra.mxu0 %v3320
    %5763 = vmatprep.subr.bf16.mxu0 %v3441
    %5764 = vmatpush2.bf16.msra.mxu0 %v3440
    %5765 = vmatprep.subr.bf16.mxu0 %v3433
    %5766 = vmatpush2.bf16.msra.mxu0 %v3432
    %5767 = vmatprep.subr.bf16.mxu0 %v3425
    %5768 = vmatpush2.bf16.msra.mxu0 %v3424
    %5769 = vmatprep.subr.bf16.mxu0 %v3417
    %5770 = vmatpush2.bf16.msra.mxu0 %v3416
    %5771 = vmatprep.subr.bf16.mxu0 %v3409
    %5772 = vmatpush2.bf16.msra.mxu0 %v3408
    %5773 = vmatprep.subr.bf16.mxu0 %v3401
    %5774 = vmatpush2.bf16.msra.mxu0 %v3400
    %5775 = vmatprep.subr.bf16.mxu0 %v3393
    %5776 = vmatpush2.bf16.msra.mxu0 %v3392
    %5777 = vmatprep.subr.bf16.mxu0 %v3385
    %5778 = vmatpush2.bf16.msra.mxu0 %v3384
    %5779 = vmatprep.mubr.bf16.mxu0 %v938
    %5780 = vmatmul.mubr.bf16.gmra.mxu0 %v937
    %v5781 = vpop.f32.mrf.mxu0
    %v5782 = vadd.f32 %v904, %v5781
    %v5783 = vpop.f32.mrf.mxu0
    %v5784 = vadd.f32 %v908, %v5783
    %v5785 = vpop.f32.mrf.mxu0
    %v5786 = vpop.f32.mrf.mxu0
    %5787 = vdwg.mxu0
    %5788 = vmatprep.subr.bf16.mxu0 %v3505
    %5789 = vmatpush1.bf16.msra.mxu0 %v3504
    %5790 = vmatprep.subr.bf16.mxu0 %v3497
    %5791 = vmatpush1.bf16.msra.mxu0 %v3496
    %5792 = vmatprep.subr.bf16.mxu0 %v3489
    %5793 = vmatpush1.bf16.msra.mxu0 %v3488
    %5794 = vmatprep.subr.bf16.mxu0 %v3481
    %5795 = vmatpush1.bf16.msra.mxu0 %v3480
    %5796 = vmatprep.subr.bf16.mxu0 %v3473
    %5797 = vmatpush1.bf16.msra.mxu0 %v3472
    %5798 = vmatprep.subr.bf16.mxu0 %v3465
    %5799 = vmatpush1.bf16.msra.mxu0 %v3464
    %5800 = vmatprep.subr.bf16.mxu0 %v3457
    %5801 = vmatpush1.bf16.msra.mxu0 %v3456
    %5802 = vmatprep.subr.bf16.mxu0 %v3449
    %5803 = vmatpush1.bf16.msra.mxu0 %v3448
    %5804 = vmatprep.subr.bf16.mxu0 %v3569
    %5805 = vmatpush2.bf16.msra.mxu0 %v3568
    %5806 = vmatprep.subr.bf16.mxu0 %v3561
    %5807 = vmatpush2.bf16.msra.mxu0 %v3560
    %5808 = vmatprep.subr.bf16.mxu0 %v3553
    %5809 = vmatpush2.bf16.msra.mxu0 %v3552
    %5810 = vmatprep.subr.bf16.mxu0 %v3545
    %5811 = vmatpush2.bf16.msra.mxu0 %v3544
    %5812 = vmatprep.subr.bf16.mxu0 %v3537
    %5813 = vmatpush2.bf16.msra.mxu0 %v3536
    %5814 = vmatprep.subr.bf16.mxu0 %v3529
    %5815 = vmatpush2.bf16.msra.mxu0 %v3528
    %5816 = vmatprep.subr.bf16.mxu0 %v3521
    %5817 = vmatpush2.bf16.msra.mxu0 %v3520
    %5818 = vmatprep.subr.bf16.mxu0 %v3513
    %5819 = vmatpush2.bf16.msra.mxu0 %v3512
    %5820 = vmatprep.mubr.bf16.mxu0 %v940
    %5821 = vmatmul.mubr.bf16.gmra.mxu0 %v939
    %v5822 = vpop.f32.mrf.mxu0
    %v5823 = vadd.f32 %v5782, %v5822
    %v5824 = vpop.f32.mrf.mxu0
    %v5825 = vadd.f32 %v5784, %v5824
    %v5826 = vpop.f32.mrf.mxu0
    %v5827 = vpop.f32.mrf.mxu0
    %5828 = vdwg.mxu0
    %5829 = vmatprep.subr.bf16.mxu0 %v3633
    %5830 = vmatpush1.bf16.msra.mxu0 %v3632
    %5831 = vmatprep.subr.bf16.mxu0 %v3625
    %5832 = vmatpush1.bf16.msra.mxu0 %v3624
    %5833 = vmatprep.subr.bf16.mxu0 %v3617
    %5834 = vmatpush1.bf16.msra.mxu0 %v3616
    %5835 = vmatprep.subr.bf16.mxu0 %v3609
    %5836 = vmatpush1.bf16.msra.mxu0 %v3608
    %5837 = vmatprep.subr.bf16.mxu0 %v3601
    %5838 = vmatpush1.bf16.msra.mxu0 %v3600
    %5839 = vmatprep.subr.bf16.mxu0 %v3593
    %5840 = vmatpush1.bf16.msra.mxu0 %v3592
    %5841 = vmatprep.subr.bf16.mxu0 %v3585
    %5842 = vmatpush1.bf16.msra.mxu0 %v3584
    %5843 = vmatprep.subr.bf16.mxu0 %v3577
    %5844 = vmatpush1.bf16.msra.mxu0 %v3576
    %5845 = vmatprep.subr.bf16.mxu0 %v3697
    %5846 = vmatpush2.bf16.msra.mxu0 %v3696
    %5847 = vmatprep.subr.bf16.mxu0 %v3689
    %5848 = vmatpush2.bf16.msra.mxu0 %v3688
    %5849 = vmatprep.subr.bf16.mxu0 %v3681
    %5850 = vmatpush2.bf16.msra.mxu0 %v3680
    %5851 = vmatprep.subr.bf16.mxu0 %v3673
    %5852 = vmatpush2.bf16.msra.mxu0 %v3672
    %5853 = vmatprep.subr.bf16.mxu0 %v3665
    %5854 = vmatpush2.bf16.msra.mxu0 %v3664
    %5855 = vmatprep.subr.bf16.mxu0 %v3657
    %5856 = vmatpush2.bf16.msra.mxu0 %v3656
    %5857 = vmatprep.subr.bf16.mxu0 %v3649
    %5858 = vmatpush2.bf16.msra.mxu0 %v3648
    %5859 = vmatprep.subr.bf16.mxu0 %v3641
    %5860 = vmatpush2.bf16.msra.mxu0 %v3640
    %5861 = vmatprep.mubr.bf16.mxu0 %v942
    %5862 = vmatmul.mubr.bf16.gmra.mxu0 %v941
    %v5863 = vpop.f32.mrf.mxu0
    %v5864 = vadd.f32 %v5823, %v5863
    %v5865 = vpop.f32.mrf.mxu0
    %v5866 = vadd.f32 %v5825, %v5865
    %v5867 = vpop.f32.mrf.mxu0
    %v5868 = vpop.f32.mrf.mxu0
    %5869 = vdwg.mxu0
    %5870 = vmatprep.subr.bf16.mxu0 %v3761
    %5871 = vmatpush1.bf16.msra.mxu0 %v3760
    %5872 = vmatprep.subr.bf16.mxu0 %v3753
    %5873 = vmatpush1.bf16.msra.mxu0 %v3752
    %5874 = vmatprep.subr.bf16.mxu0 %v3745
    %5875 = vmatpush1.bf16.msra.mxu0 %v3744
    %5876 = vmatprep.subr.bf16.mxu0 %v3737
    %5877 = vmatpush1.bf16.msra.mxu0 %v3736
    %5878 = vmatprep.subr.bf16.mxu0 %v3729
    %5879 = vmatpush1.bf16.msra.mxu0 %v3728
    %5880 = vmatprep.subr.bf16.mxu0 %v3721
    %5881 = vmatpush1.bf16.msra.mxu0 %v3720
    %5882 = vmatprep.subr.bf16.mxu0 %v3713
    %5883 = vmatpush1.bf16.msra.mxu0 %v3712
    %5884 = vmatprep.subr.bf16.mxu0 %v3705
    %5885 = vmatpush1.bf16.msra.mxu0 %v3704
    %5886 = vmatprep.subr.bf16.mxu0 %v3825
    %5887 = vmatpush2.bf16.msra.mxu0 %v3824
    %5888 = vmatprep.subr.bf16.mxu0 %v3817
    %5889 = vmatpush2.bf16.msra.mxu0 %v3816
    %5890 = vmatprep.subr.bf16.mxu0 %v3809
    %5891 = vmatpush2.bf16.msra.mxu0 %v3808
    %5892 = vmatprep.subr.bf16.mxu0 %v3801
    %5893 = vmatpush2.bf16.msra.mxu0 %v3800
    %5894 = vmatprep.subr.bf16.mxu0 %v3793
    %5895 = vmatpush2.bf16.msra.mxu0 %v3792
    %5896 = vmatprep.subr.bf16.mxu0 %v3785
    %5897 = vmatpush2.bf16.msra.mxu0 %v3784
    %5898 = vmatprep.subr.bf16.mxu0 %v3777
    %5899 = vmatpush2.bf16.msra.mxu0 %v3776
    %5900 = vmatprep.subr.bf16.mxu0 %v3769
    %5901 = vmatpush2.bf16.msra.mxu0 %v3768
    %5902 = vmatprep.mubr.bf16.mxu0 %v944
    %5903 = vmatmul.mubr.bf16.gmra.mxu0 %v943
    %v5904 = vpop.f32.mrf.mxu0
    %v5905 = vadd.f32 %v5864, %v5904
    %v5906 = vpop.f32.mrf.mxu0
    %v5907 = vadd.f32 %v5866, %v5906
    %v5908 = vpop.f32.mrf.mxu0
    %v5909 = vpop.f32.mrf.mxu0
    %5910 = vdwg.mxu0
    %5911 = vmatprep.subr.bf16.mxu0 %v3889
    %5912 = vmatpush1.bf16.msra.mxu0 %v3888
    %5913 = vmatprep.subr.bf16.mxu0 %v3881
    %5914 = vmatpush1.bf16.msra.mxu0 %v3880
    %5915 = vmatprep.subr.bf16.mxu0 %v3873
    %5916 = vmatpush1.bf16.msra.mxu0 %v3872
    %5917 = vmatprep.subr.bf16.mxu0 %v3865
    %5918 = vmatpush1.bf16.msra.mxu0 %v3864
    %5919 = vmatprep.subr.bf16.mxu0 %v3857
    %5920 = vmatpush1.bf16.msra.mxu0 %v3856
    %5921 = vmatprep.subr.bf16.mxu0 %v3849
    %5922 = vmatpush1.bf16.msra.mxu0 %v3848
    %5923 = vmatprep.subr.bf16.mxu0 %v3841
    %5924 = vmatpush1.bf16.msra.mxu0 %v3840
    %5925 = vmatprep.subr.bf16.mxu0 %v3833
    %5926 = vmatpush1.bf16.msra.mxu0 %v3832
    %5927 = vmatprep.subr.bf16.mxu0 %v3953
    %5928 = vmatpush2.bf16.msra.mxu0 %v3952
    %5929 = vmatprep.subr.bf16.mxu0 %v3945
    %5930 = vmatpush2.bf16.msra.mxu0 %v3944
    %5931 = vmatprep.subr.bf16.mxu0 %v3937
    %5932 = vmatpush2.bf16.msra.mxu0 %v3936
    %5933 = vmatprep.subr.bf16.mxu0 %v3929
    %5934 = vmatpush2.bf16.msra.mxu0 %v3928
    %5935 = vmatprep.subr.bf16.mxu0 %v3921
    %5936 = vmatpush2.bf16.msra.mxu0 %v3920
    %5937 = vmatprep.subr.bf16.mxu0 %v3913
    %5938 = vmatpush2.bf16.msra.mxu0 %v3912
    %5939 = vmatprep.subr.bf16.mxu0 %v3905
    %5940 = vmatpush2.bf16.msra.mxu0 %v3904
    %5941 = vmatprep.subr.bf16.mxu0 %v3897
    %5942 = vmatpush2.bf16.msra.mxu0 %v3896
    %5943 = vmatprep.mubr.bf16.mxu0 %v946
    %5944 = vmatmul.mubr.bf16.gmra.mxu0 %v945
    %v5945 = vpop.f32.mrf.mxu0
    %v5946 = vadd.f32 %v5905, %v5945
    %v5947 = vpop.f32.mrf.mxu0
    %v5948 = vadd.f32 %v5907, %v5947
    %v5949 = vpop.f32.mrf.mxu0
    %v5950 = vpop.f32.mrf.mxu0
    %5951 = vdwg.mxu0
    %5952 = vmatprep.subr.bf16.mxu0 %v4017
    %5953 = vmatpush1.bf16.msra.mxu0 %v4016
    %5954 = vmatprep.subr.bf16.mxu0 %v4009
    %5955 = vmatpush1.bf16.msra.mxu0 %v4008
    %5956 = vmatprep.subr.bf16.mxu0 %v4001
    %5957 = vmatpush1.bf16.msra.mxu0 %v4000
    %5958 = vmatprep.subr.bf16.mxu0 %v3993
    %5959 = vmatpush1.bf16.msra.mxu0 %v3992
    %5960 = vmatprep.subr.bf16.mxu0 %v3985
    %5961 = vmatpush1.bf16.msra.mxu0 %v3984
    %5962 = vmatprep.subr.bf16.mxu0 %v3977
    %5963 = vmatpush1.bf16.msra.mxu0 %v3976
    %5964 = vmatprep.subr.bf16.mxu0 %v3969
    %5965 = vmatpush1.bf16.msra.mxu0 %v3968
    %5966 = vmatprep.subr.bf16.mxu0 %v3961
    %5967 = vmatpush1.bf16.msra.mxu0 %v3960
    %5968 = vmatprep.subr.bf16.mxu0 %v4081
    %5969 = vmatpush2.bf16.msra.mxu0 %v4080
    %5970 = vmatprep.subr.bf16.mxu0 %v4073
    %5971 = vmatpush2.bf16.msra.mxu0 %v4072
    %5972 = vmatprep.subr.bf16.mxu0 %v4065
    %5973 = vmatpush2.bf16.msra.mxu0 %v4064
    %5974 = vmatprep.subr.bf16.mxu0 %v4057
    %5975 = vmatpush2.bf16.msra.mxu0 %v4056
    %5976 = vmatprep.subr.bf16.mxu0 %v4049
    %5977 = vmatpush2.bf16.msra.mxu0 %v4048
    %5978 = vmatprep.subr.bf16.mxu0 %v4041
    %5979 = vmatpush2.bf16.msra.mxu0 %v4040
    %5980 = vmatprep.subr.bf16.mxu0 %v4033
    %5981 = vmatpush2.bf16.msra.mxu0 %v4032
    %5982 = vmatprep.subr.bf16.mxu0 %v4025
    %5983 = vmatpush2.bf16.msra.mxu0 %v4024
    %5984 = vmatprep.mubr.bf16.mxu0 %v948
    %5985 = vmatmul.mubr.bf16.gmra.mxu0 %v947
    %v5986 = vpop.f32.mrf.mxu0
    %v5987 = vadd.f32 %v5946, %v5986
    %v5988 = vpop.f32.mrf.mxu0
    %v5989 = vadd.f32 %v5948, %v5988
    %v5990 = vpop.f32.mrf.mxu0
    %v5991 = vpop.f32.mrf.mxu0
    %5992 = vdwg.mxu0
    %5993 = vmatprep.subr.bf16.mxu0 0
    %5994 = vmatpush1.bf16.msra.mxu0 0
    %5995 = vmatprep.subr.bf16.mxu0 0
    %5996 = vmatpush1.bf16.msra.mxu0 0
    %5997 = vmatprep.subr.bf16.mxu0 0
    %5998 = vmatpush1.bf16.msra.mxu0 0
    %5999 = vmatprep.subr.bf16.mxu0 0
    %6000 = vmatpush1.bf16.msra.mxu0 0
    %6001 = vmatprep.subr.bf16.mxu0 0
    %6002 = vmatpush1.bf16.msra.mxu0 0
    %6003 = vmatprep.subr.bf16.mxu0 0
    %6004 = vmatpush1.bf16.msra.mxu0 0
    %6005 = vmatprep.subr.bf16.mxu0 %v4097
    %6006 = vmatpush1.bf16.msra.mxu0 %v4096
    %6007 = vmatprep.subr.bf16.mxu0 %v4089
    %6008 = vmatpush1.bf16.msra.mxu0 %v4088
    %6009 = vmatprep.subr.bf16.mxu0 0
    %6010 = vmatpush2.bf16.msra.mxu0 0
    %6011 = vmatprep.subr.bf16.mxu0 0
    %6012 = vmatpush2.bf16.msra.mxu0 0
    %6013 = vmatprep.subr.bf16.mxu0 0
    %6014 = vmatpush2.bf16.msra.mxu0 0
    %6015 = vmatprep.subr.bf16.mxu0 0
    %6016 = vmatpush2.bf16.msra.mxu0 0
    %6017 = vmatprep.subr.bf16.mxu0 0
    %6018 = vmatpush2.bf16.msra.mxu0 0
    %6019 = vmatprep.subr.bf16.mxu0 0
    %6020 = vmatpush2.bf16.msra.mxu0 0
    %6021 = vmatprep.subr.bf16.mxu0 0
    %6022 = vmatpush2.bf16.msra.mxu0 0
    %6023 = vmatprep.subr.bf16.mxu0 0
    %6024 = vmatpush2.bf16.msra.mxu0 0
    %6025 = vmatprep.mubr.bf16.mxu0 0
    %6026 = vmatmul.mubr.bf16.gmra.mxu0 %v4884
    %v6027 = vpop.f32.mrf.mxu0
    %v6028 = vadd.f32 %v5987, %v6027
    %v6029 = vpop.f32.mrf.mxu0
    %v6030 = vadd.f32 %v5989, %v6029
    %v6031 = vpop.f32.mrf.mxu0
    %v6032 = vpop.f32.mrf.mxu0
    %6033 = vdwg.mxu0
    %v6034 = vmax.f32 %v5167, 0.0
    %v6035 = vmax.f32 %v5169, 0.0
    %v6036 = vmax.f32 %v5454, 0.0
    %v6037 = vmax.f32 %v5456, 0.0
    %v6038 = vmax.f32 %v5741, 0.0
    %v6039 = vmax.f32 %v5743, 0.0
    %v6040 = vmax.f32 %v6028, 0.0
    %v6041 = vmax.f32 %v6030, 0.0
    %v6042 = vpack.c.bf16 %v6034, %v6034
    %v6043 = vpack.c.bf16 %v6035, %v6035
    %v6044 = vpack.c.bf16 %v6036, %v6036
    %v6045 = vpack.c.bf16 %v6037, %v6037
    %v6046 = vpack.c.bf16 %v6038, %v6038
    %v6047 = vpack.c.bf16 %v6039, %v6039
    %v6048 = vpack.c.bf16 %v6040, %v6040
    %v6049 = vpack.c.bf16 %v6041, %v6041
    %v6050 = vld [vmem:[#allocation8] sm:$0xf]
    %v6051 = vld [vmem:[#allocation8 + $0x4] sm:$0xf]
    %v6052 = vld [vmem:[#allocation8 + $0x8] sm:$0xf]
    %v6053 = vld [vmem:[#allocation8 + $0xc] sm:$0xf]
    %v6054 = vld [vmem:[#allocation8 + $0x10] sm:$0xf]
    %v6055 = vld [vmem:[#allocation8 + $0x14] sm:$0xf]
    %v6056 = vld [vmem:[#allocation8 + $0x18] sm:$0xf]
    %v6057 = vld [vmem:[#allocation8 + $0x1c] sm:$0xf]
    %v6058 = vld [vmem:[#allocation8 + $0x20] sm:$0xf]
    %v6059 = vld [vmem:[#allocation8 + $0x24] sm:$0xf]
    %v6060 = vld [vmem:[#allocation8 + $0x28] sm:$0xf]
    %v6061 = vld [vmem:[#allocation8 + $0x2c] sm:$0xf]
    %v6062 = vld [vmem:[#allocation8 + $0x30] sm:$0xf]
    %v6063 = vld [vmem:[#allocation8 + $0x34] sm:$0xf]
    %v6064 = vld [vmem:[#allocation8 + $0x38] sm:$0xf]
    %v6065 = vld [vmem:[#allocation8 + $0x3c] sm:$0xf]
    %v6066 = vld [vmem:[#allocation8 + $0x40] sm:$0xf]
    %v6067 = vld [vmem:[#allocation8 + $0x44] sm:$0xf]
    %v6068 = vld [vmem:[#allocation8 + $0x48] sm:$0xf]
    %v6069 = vld [vmem:[#allocation8 + $0x4c] sm:$0xf]
    %v6070 = vld [vmem:[#allocation8 + $0x50] sm:$0xf]
    %v6071 = vld [vmem:[#allocation8 + $0x54] sm:$0xf]
    %v6072 = vld [vmem:[#allocation8 + $0x58] sm:$0xf]
    %v6073 = vld [vmem:[#allocation8 + $0x5c] sm:$0xf]
    %v6074 = vld [vmem:[#allocation8 + $0x60] sm:$0xf]
    %v6075 = vld [vmem:[#allocation8 + $0x64] sm:$0xf]
    %v6076 = vld [vmem:[#allocation8 + $0x68] sm:$0xf]
    %v6077 = vld [vmem:[#allocation8 + $0x6c] sm:$0xf]
    %v6078 = vld [vmem:[#allocation8 + $0x70] sm:$0xf]
    %v6079 = vld [vmem:[#allocation8 + $0x74] sm:$0xf]
    %v6080 = vld [vmem:[#allocation8 + $0x78] sm:$0xf]
    %v6081 = vld [vmem:[#allocation8 + $0x7c] sm:$0xf]
    %v6082 = vld [vmem:[#allocation8 + $0x80] sm:$0xf]
    %v6083 = vld [vmem:[#allocation8 + $0x84] sm:$0xf]
    %v6084 = vld [vmem:[#allocation8 + $0x88] sm:$0xf]
    %v6085 = vld [vmem:[#allocation8 + $0x8c] sm:$0xf]
    %v6086 = vld [vmem:[#allocation8 + $0x90] sm:$0xf]
    %v6087 = vld [vmem:[#allocation8 + $0x94] sm:$0xf]
    %v6088 = vld [vmem:[#allocation8 + $0x98] sm:$0xf]
    %v6089 = vld [vmem:[#allocation8 + $0x9c] sm:$0xf]
    %v6090 = vld [vmem:[#allocation8 + $0xa0] sm:$0xf]
    %v6091 = vld [vmem:[#allocation8 + $0xa4] sm:$0xf]
    %v6092 = vld [vmem:[#allocation8 + $0xa8] sm:$0xf]
    %v6093 = vld [vmem:[#allocation8 + $0xac] sm:$0xf]
    %v6094 = vld [vmem:[#allocation8 + $0xb0] sm:$0xf]
    %v6095 = vld [vmem:[#allocation8 + $0xb4] sm:$0xf]
    %v6096 = vld [vmem:[#allocation8 + $0xb8] sm:$0xf]
    %v6097 = vld [vmem:[#allocation8 + $0xbc] sm:$0xf]
    %v6098 = vld [vmem:[#allocation8 + $0xc0] sm:$0xf]
    %v6099 = vld [vmem:[#allocation8 + $0xc4] sm:$0xf]
    %v6100 = vld [vmem:[#allocation8 + $0xc8] sm:$0xf]
    %v6101 = vld [vmem:[#allocation8 + $0xcc] sm:$0xf]
    %v6102 = vld [vmem:[#allocation8 + $0xd0] sm:$0xf]
    %v6103 = vld [vmem:[#allocation8 + $0xd4] sm:$0xf]
    %v6104 = vld [vmem:[#allocation8 + $0xd8] sm:$0xf]
    %v6105 = vld [vmem:[#allocation8 + $0xdc] sm:$0xf]
    %v6106 = vld [vmem:[#allocation8 + $0xe0] sm:$0xf]
    %v6107 = vld [vmem:[#allocation8 + $0xe4] sm:$0xf]
    %v6108 = vld [vmem:[#allocation8 + $0xe8] sm:$0xf]
    %v6109 = vld [vmem:[#allocation8 + $0xec] sm:$0xf]
    %v6110 = vld [vmem:[#allocation8 + $0xf0] sm:$0xf]
    %v6111 = vld [vmem:[#allocation8 + $0xf4] sm:$0xf]
    %v6112 = vld [vmem:[#allocation8 + $0xf8] sm:$0xf]
    %v6113 = vld [vmem:[#allocation8 + $0xfc] sm:$0xf]
    %v6114 = vld [vmem:[#allocation8 + $0x100] sm:$0xf]
    %v6115 = vld [vmem:[#allocation8 + $0x104] sm:$0xf]
    %v6116 = vld [vmem:[#allocation8 + $0x108] sm:$0xf]
    %v6117 = vld [vmem:[#allocation8 + $0x10c] sm:$0xf]
    %v6118 = vld [vmem:[#allocation8 + $0x110] sm:$0xf]
    %v6119 = vld [vmem:[#allocation8 + $0x114] sm:$0xf]
    %v6120 = vld [vmem:[#allocation8 + $0x118] sm:$0xf]
    %v6121 = vld [vmem:[#allocation8 + $0x11c] sm:$0xf]
    %v6122 = vld [vmem:[#allocation8 + $0x120] sm:$0xf]
    %v6123 = vld [vmem:[#allocation8 + $0x124] sm:$0xf]
    %v6124 = vld [vmem:[#allocation8 + $0x128] sm:$0xf]
    %v6125 = vld [vmem:[#allocation8 + $0x12c] sm:$0xf]
    %v6126 = vld [vmem:[#allocation8 + $0x130] sm:$0xf]
    %v6127 = vld [vmem:[#allocation8 + $0x134] sm:$0xf]
    %v6128 = vld [vmem:[#allocation8 + $0x138] sm:$0xf]
    %v6129 = vld [vmem:[#allocation8 + $0x13c] sm:$0xf]
    %v6130 = vld [vmem:[#allocation8 + $0x140] sm:$0xf]
    %v6131 = vld [vmem:[#allocation8 + $0x144] sm:$0xf]
    %v6132 = vld [vmem:[#allocation8 + $0x148] sm:$0xf]
    %v6133 = vld [vmem:[#allocation8 + $0x14c] sm:$0xf]
    %v6134 = vld [vmem:[#allocation8 + $0x150] sm:$0xf]
    %v6135 = vld [vmem:[#allocation8 + $0x154] sm:$0xf]
    %v6136 = vld [vmem:[#allocation8 + $0x158] sm:$0xf]
    %v6137 = vld [vmem:[#allocation8 + $0x15c] sm:$0xf]
    %v6138 = vld [vmem:[#allocation8 + $0x160] sm:$0xf]
    %v6139 = vld [vmem:[#allocation8 + $0x164] sm:$0xf]
    %v6140 = vld [vmem:[#allocation8 + $0x168] sm:$0xf]
    %v6141 = vld [vmem:[#allocation8 + $0x16c] sm:$0xf]
    %v6142 = vld [vmem:[#allocation8 + $0x170] sm:$0xf]
    %v6143 = vld [vmem:[#allocation8 + $0x174] sm:$0xf]
    %v6144 = vld [vmem:[#allocation8 + $0x178] sm:$0xf]
    %v6145 = vld [vmem:[#allocation8 + $0x17c] sm:$0xf]
    %v6146 = vld [vmem:[#allocation8 + $0x180] sm:$0xf]
    %v6147 = vld [vmem:[#allocation8 + $0x184] sm:$0xf]
    %v6148 = vld [vmem:[#allocation8 + $0x188] sm:$0xf]
    %v6149 = vld [vmem:[#allocation8 + $0x18c] sm:$0xf]
    %v6150 = vld [vmem:[#allocation8 + $0x190] sm:$0xf]
    %v6151 = vld [vmem:[#allocation8 + $0x194] sm:$0xf]
    %v6152 = vld [vmem:[#allocation8 + $0x198] sm:$0xf]
    %v6153 = vld [vmem:[#allocation8 + $0x19c] sm:$0xf]
    %v6154 = vld [vmem:[#allocation8 + $0x1a0] sm:$0xf]
    %v6155 = vld [vmem:[#allocation8 + $0x1a4] sm:$0xf]
    %v6156 = vld [vmem:[#allocation8 + $0x1a8] sm:$0xf]
    %v6157 = vld [vmem:[#allocation8 + $0x1ac] sm:$0xf]
    %v6158 = vld [vmem:[#allocation8 + $0x1b0] sm:$0xf]
    %v6159 = vld [vmem:[#allocation8 + $0x1b4] sm:$0xf]
    %v6160 = vld [vmem:[#allocation8 + $0x1b8] sm:$0xf]
    %v6161 = vld [vmem:[#allocation8 + $0x1bc] sm:$0xf]
    %v6162 = vld [vmem:[#allocation8 + $0x1c0] sm:$0xf]
    %v6163 = vld [vmem:[#allocation8 + $0x1c4] sm:$0xf]
    %v6164 = vld [vmem:[#allocation8 + $0x1c8] sm:$0xf]
    %v6165 = vld [vmem:[#allocation8 + $0x1cc] sm:$0xf]
    %v6166 = vld [vmem:[#allocation8 + $0x1d0] sm:$0xf]
    %v6167 = vld [vmem:[#allocation8 + $0x1d4] sm:$0xf]
    %v6168 = vld [vmem:[#allocation8 + $0x1d8] sm:$0xf]
    %v6169 = vld [vmem:[#allocation8 + $0x1dc] sm:$0xf]
    %v6170 = vld [vmem:[#allocation8 + $0x1e0] sm:$0xf]
    %v6171 = vld [vmem:[#allocation8 + $0x1e4] sm:$0xf]
    %v6172 = vld [vmem:[#allocation8 + $0x1e8] sm:$0xf]
    %v6173 = vld [vmem:[#allocation8 + $0x1ec] sm:$0xf]
    %v6174 = vld [vmem:[#allocation8 + $0x1f0] sm:$0xf]
    %v6175 = vld [vmem:[#allocation8 + $0x1f4] sm:$0xf]
    %v6176 = vld [vmem:[#allocation8 + $0x1f8] sm:$0xf]
    %v6177 = vld [vmem:[#allocation8 + $0x1fc] sm:$0xf]
    %v6178 = vld [vmem:[#allocation10] sm:$0x1]
    %v6180 = vlaneseq
    %v6181 = vshrl.u32 %v6180, 7
    %v6182 = vsub.s32 0, %v6181
    %v6183 = vrot.slane %v6178, %v6182
    %v6313 = vunpack.c.l.b16 %v6050
    %v6314 = vunpack.c.l.b16 %v6051
    %v6315 = vunpack.c.l.b16 %v6052
    %v6316 = vunpack.c.l.b16 %v6053
    %v6317 = vunpack.c.l.b16 %v6054
    %v6318 = vunpack.c.l.b16 %v6055
    %v6319 = vunpack.c.l.b16 %v6056
    %v6320 = vunpack.c.l.b16 %v6057
    %v6321 = vunpack.c.l.b16 %v6058
    %v6322 = vunpack.c.l.b16 %v6059
    %v6323 = vunpack.c.l.b16 %v6060
    %v6324 = vunpack.c.l.b16 %v6061
    %v6325 = vunpack.c.l.b16 %v6062
    %v6326 = vunpack.c.l.b16 %v6063
    %v6327 = vunpack.c.l.b16 %v6064
    %v6328 = vunpack.c.l.b16 %v6065
    %v6329 = vunpack.c.l.b16 %v6066
    %v6330 = vunpack.c.l.b16 %v6067
    %v6331 = vunpack.c.l.b16 %v6068
    %v6332 = vunpack.c.l.b16 %v6069
    %v6333 = vunpack.c.l.b16 %v6070
    %v6334 = vunpack.c.l.b16 %v6071
    %v6335 = vunpack.c.l.b16 %v6072
    %v6336 = vunpack.c.l.b16 %v6073
    %v6337 = vunpack.c.l.b16 %v6074
    %v6338 = vunpack.c.l.b16 %v6075
    %v6339 = vunpack.c.l.b16 %v6076
    %v6340 = vunpack.c.l.b16 %v6077
    %v6341 = vunpack.c.l.b16 %v6078
    %v6342 = vunpack.c.l.b16 %v6079
    %v6343 = vunpack.c.l.b16 %v6080
    %v6344 = vunpack.c.l.b16 %v6081
    %v6345 = vunpack.c.l.b16 %v6082
    %v6346 = vunpack.c.l.b16 %v6083
    %v6347 = vunpack.c.l.b16 %v6084
    %v6348 = vunpack.c.l.b16 %v6085
    %v6349 = vunpack.c.l.b16 %v6086
    %v6350 = vunpack.c.l.b16 %v6087
    %v6351 = vunpack.c.l.b16 %v6088
    %v6352 = vunpack.c.l.b16 %v6089
    %v6353 = vunpack.c.l.b16 %v6090
    %v6354 = vunpack.c.l.b16 %v6091
    %v6355 = vunpack.c.l.b16 %v6092
    %v6356 = vunpack.c.l.b16 %v6093
    %v6357 = vunpack.c.l.b16 %v6094
    %v6358 = vunpack.c.l.b16 %v6095
    %v6359 = vunpack.c.l.b16 %v6096
    %v6360 = vunpack.c.l.b16 %v6097
    %v6361 = vunpack.c.l.b16 %v6098
    %v6362 = vunpack.c.l.b16 %v6099
    %v6363 = vunpack.c.l.b16 %v6100
    %v6364 = vunpack.c.l.b16 %v6101
    %v6365 = vunpack.c.l.b16 %v6102
    %v6366 = vunpack.c.l.b16 %v6103
    %v6367 = vunpack.c.l.b16 %v6104
    %v6368 = vunpack.c.l.b16 %v6105
    %v6369 = vunpack.c.l.b16 %v6106
    %v6370 = vunpack.c.l.b16 %v6107
    %v6371 = vunpack.c.l.b16 %v6108
    %v6372 = vunpack.c.l.b16 %v6109
    %v6373 = vunpack.c.l.b16 %v6110
    %v6374 = vunpack.c.l.b16 %v6111
    %v6375 = vunpack.c.l.b16 %v6112
    %v6376 = vunpack.c.l.b16 %v6113
    %v6377 = vunpack.c.l.b16 %v6114
    %v6378 = vunpack.c.l.b16 %v6115
    %v6379 = vunpack.c.l.b16 %v6116
    %v6380 = vunpack.c.l.b16 %v6117
    %v6381 = vunpack.c.l.b16 %v6118
    %v6382 = vunpack.c.l.b16 %v6119
    %v6383 = vunpack.c.l.b16 %v6120
    %v6384 = vunpack.c.l.b16 %v6121
    %v6385 = vunpack.c.l.b16 %v6122
    %v6386 = vunpack.c.l.b16 %v6123
    %v6387 = vunpack.c.l.b16 %v6124
    %v6388 = vunpack.c.l.b16 %v6125
    %v6389 = vunpack.c.l.b16 %v6126
    %v6390 = vunpack.c.l.b16 %v6127
    %v6391 = vunpack.c.l.b16 %v6128
    %v6392 = vunpack.c.l.b16 %v6129
    %v6393 = vunpack.c.l.b16 %v6130
    %v6394 = vunpack.c.l.b16 %v6131
    %v6395 = vunpack.c.l.b16 %v6132
    %v6396 = vunpack.c.l.b16 %v6133
    %v6397 = vunpack.c.l.b16 %v6134
    %v6398 = vunpack.c.l.b16 %v6135
    %v6399 = vunpack.c.l.b16 %v6136
    %v6400 = vunpack.c.l.b16 %v6137
    %v6401 = vunpack.c.l.b16 %v6138
    %v6402 = vunpack.c.l.b16 %v6139
    %v6403 = vunpack.c.l.b16 %v6140
    %v6404 = vunpack.c.l.b16 %v6141
    %v6405 = vunpack.c.l.b16 %v6142
    %v6406 = vunpack.c.l.b16 %v6143
    %v6407 = vunpack.c.l.b16 %v6144
    %v6408 = vunpack.c.l.b16 %v6145
    %v6409 = vunpack.c.l.b16 %v6146
    %v6410 = vunpack.c.l.b16 %v6147
    %v6411 = vunpack.c.l.b16 %v6148
    %v6412 = vunpack.c.l.b16 %v6149
    %v6413 = vunpack.c.l.b16 %v6150
    %v6414 = vunpack.c.l.b16 %v6151
    %v6415 = vunpack.c.l.b16 %v6152
    %v6416 = vunpack.c.l.b16 %v6153
    %v6417 = vunpack.c.l.b16 %v6154
    %v6418 = vunpack.c.l.b16 %v6155
    %v6419 = vunpack.c.l.b16 %v6156
    %v6420 = vunpack.c.l.b16 %v6157
    %v6421 = vunpack.c.l.b16 %v6158
    %v6422 = vunpack.c.l.b16 %v6159
    %v6423 = vunpack.c.l.b16 %v6160
    %v6424 = vunpack.c.l.b16 %v6161
    %v6425 = vunpack.c.l.b16 %v6162
    %v6426 = vunpack.c.l.b16 %v6163
    %v6427 = vunpack.c.l.b16 %v6164
    %v6428 = vunpack.c.l.b16 %v6165
    %v6429 = vunpack.c.l.b16 %v6166
    %v6430 = vunpack.c.l.b16 %v6167
    %v6431 = vunpack.c.l.b16 %v6168
    %v6432 = vunpack.c.l.b16 %v6169
    %v6433 = vunpack.c.l.b16 %v6170
    %v6434 = vunpack.c.l.b16 %v6171
    %v6435 = vunpack.c.l.b16 %v6172
    %v6436 = vunpack.c.l.b16 %v6173
    %v6437 = vunpack.c.l.b16 %v6174
    %v6438 = vunpack.c.l.b16 %v6175
    %v6439 = vunpack.c.l.b16 %v6176
    %v6440 = vunpack.c.l.b16 %v6177
    %v6441 = vpack.c.b16 %v6314, %v6313
    %v6442 = vpack.c.b16 %v6316, %v6315
    %v6443 = vpack.c.b16 %v6318, %v6317
    %v6444 = vpack.c.b16 %v6320, %v6319
    %v6445 = vpack.c.b16 %v6322, %v6321
    %v6446 = vpack.c.b16 %v6324, %v6323
    %v6447 = vpack.c.b16 %v6326, %v6325
    %v6448 = vpack.c.b16 %v6328, %v6327
    %v6449 = vpack.c.b16 %v6330, %v6329
    %v6450 = vpack.c.b16 %v6332, %v6331
    %v6451 = vpack.c.b16 %v6334, %v6333
    %v6452 = vpack.c.b16 %v6336, %v6335
    %v6453 = vpack.c.b16 %v6338, %v6337
    %v6454 = vpack.c.b16 %v6340, %v6339
    %v6455 = vpack.c.b16 %v6342, %v6341
    %v6456 = vpack.c.b16 %v6344, %v6343
    %v6457 = vpack.c.b16 %v6346, %v6345
    %v6458 = vpack.c.b16 %v6348, %v6347
    %v6459 = vpack.c.b16 %v6350, %v6349
    %v6460 = vpack.c.b16 %v6352, %v6351
    %v6461 = vpack.c.b16 %v6354, %v6353
    %v6462 = vpack.c.b16 %v6356, %v6355
    %v6463 = vpack.c.b16 %v6358, %v6357
    %v6464 = vpack.c.b16 %v6360, %v6359
    %v6465 = vpack.c.b16 %v6362, %v6361
    %v6466 = vpack.c.b16 %v6364, %v6363
    %v6467 = vpack.c.b16 %v6366, %v6365
    %v6468 = vpack.c.b16 %v6368, %v6367
    %v6469 = vpack.c.b16 %v6370, %v6369
    %v6470 = vpack.c.b16 %v6372, %v6371
    %v6471 = vpack.c.b16 %v6374, %v6373
    %v6472 = vpack.c.b16 %v6376, %v6375
    %v6473 = vpack.c.b16 %v6378, %v6377
    %v6474 = vpack.c.b16 %v6380, %v6379
    %v6475 = vpack.c.b16 %v6382, %v6381
    %v6476 = vpack.c.b16 %v6384, %v6383
    %v6477 = vpack.c.b16 %v6386, %v6385
    %v6478 = vpack.c.b16 %v6388, %v6387
    %v6479 = vpack.c.b16 %v6390, %v6389
    %v6480 = vpack.c.b16 %v6392, %v6391
    %v6481 = vpack.c.b16 %v6394, %v6393
    %v6482 = vpack.c.b16 %v6396, %v6395
    %v6483 = vpack.c.b16 %v6398, %v6397
    %v6484 = vpack.c.b16 %v6400, %v6399
    %v6485 = vpack.c.b16 %v6402, %v6401
    %v6486 = vpack.c.b16 %v6404, %v6403
    %v6487 = vpack.c.b16 %v6406, %v6405
    %v6488 = vpack.c.b16 %v6408, %v6407
    %v6489 = vpack.c.b16 %v6410, %v6409
    %v6490 = vpack.c.b16 %v6412, %v6411
    %v6491 = vpack.c.b16 %v6414, %v6413
    %v6492 = vpack.c.b16 %v6416, %v6415
    %v6493 = vpack.c.b16 %v6418, %v6417
    %v6494 = vpack.c.b16 %v6420, %v6419
    %v6495 = vpack.c.b16 %v6422, %v6421
    %v6496 = vpack.c.b16 %v6424, %v6423
    %v6497 = vpack.c.b16 %v6426, %v6425
    %v6498 = vpack.c.b16 %v6428, %v6427
    %v6499 = vpack.c.b16 %v6430, %v6429
    %v6500 = vpack.c.b16 %v6432, %v6431
    %v6501 = vpack.c.b16 %v6434, %v6433
    %v6502 = vpack.c.b16 %v6436, %v6435
    %v6503 = vpack.c.b16 %v6438, %v6437
    %v6504 = vpack.c.b16 %v6440, %v6439
    %6569 = vmatprep.subr.bf16.mxu0 0
    %6570 = vmatpush1.bf16.msra.mxu0 %v6448
    %6571 = vmatprep.subr.bf16.mxu0 0
    %6572 = vmatpush1.bf16.msra.mxu0 %v6447
    %6573 = vmatprep.subr.bf16.mxu0 0
    %6574 = vmatpush1.bf16.msra.mxu0 %v6446
    %6575 = vmatprep.subr.bf16.mxu0 0
    %6576 = vmatpush1.bf16.msra.mxu0 %v6445
    %6577 = vmatprep.subr.bf16.mxu0 0
    %6578 = vmatpush1.bf16.msra.mxu0 %v6444
    %6579 = vmatprep.subr.bf16.mxu0 0
    %6580 = vmatpush1.bf16.msra.mxu0 %v6443
    %6581 = vmatprep.subr.bf16.mxu0 0
    %6582 = vmatpush1.bf16.msra.mxu0 %v6442
    %6583 = vmatprep.subr.bf16.mxu0 0
    %6584 = vmatpush1.bf16.msra.mxu0 %v6441
    %6585 = vmatprep.subr.bf16.mxu0 0
    %6586 = vmatpush2.bf16.msra.mxu0 %v6456
    %6587 = vmatprep.subr.bf16.mxu0 0
    %6588 = vmatpush2.bf16.msra.mxu0 %v6455
    %6589 = vmatprep.subr.bf16.mxu0 0
    %6590 = vmatpush2.bf16.msra.mxu0 %v6454
    %6591 = vmatprep.subr.bf16.mxu0 0
    %6592 = vmatpush2.bf16.msra.mxu0 %v6453
    %6593 = vmatprep.subr.bf16.mxu0 0
    %6594 = vmatpush2.bf16.msra.mxu0 %v6452
    %6595 = vmatprep.subr.bf16.mxu0 0
    %6596 = vmatpush2.bf16.msra.mxu0 %v6451
    %6597 = vmatprep.subr.bf16.mxu0 0
    %6598 = vmatpush2.bf16.msra.mxu0 %v6450
    %6599 = vmatprep.subr.bf16.mxu0 0
    %6600 = vmatpush2.bf16.msra.mxu0 %v6449
    %6601 = vmatprep.mubr.bf16.mxu0 %v6043
    %6602 = vmatmul.mubr.bf16.gmra.mxu0 %v6042
    %v6603 = vpop.f32.mrf.mxu0
    %v6604 = vadd.f32 %v6183, %v6603
    %v6605 = vpop.f32.mrf.mxu0
    %v6606 = vpop.f32.mrf.mxu0
    %v6607 = vpop.f32.mrf.mxu0
    %6608 = vdwg.mxu0
    %6609 = vmatprep.subr.bf16.mxu0 0
    %6610 = vmatpush1.bf16.msra.mxu0 %v6464
    %6611 = vmatprep.subr.bf16.mxu0 0
    %6612 = vmatpush1.bf16.msra.mxu0 %v6463
    %6613 = vmatprep.subr.bf16.mxu0 0
    %6614 = vmatpush1.bf16.msra.mxu0 %v6462
    %6615 = vmatprep.subr.bf16.mxu0 0
    %6616 = vmatpush1.bf16.msra.mxu0 %v6461
    %6617 = vmatprep.subr.bf16.mxu0 0
    %6618 = vmatpush1.bf16.msra.mxu0 %v6460
    %6619 = vmatprep.subr.bf16.mxu0 0
    %6620 = vmatpush1.bf16.msra.mxu0 %v6459
    %6621 = vmatprep.subr.bf16.mxu0 0
    %6622 = vmatpush1.bf16.msra.mxu0 %v6458
    %6623 = vmatprep.subr.bf16.mxu0 0
    %6624 = vmatpush1.bf16.msra.mxu0 %v6457
    %6625 = vmatprep.subr.bf16.mxu0 0
    %6626 = vmatpush2.bf16.msra.mxu0 %v6472
    %6627 = vmatprep.subr.bf16.mxu0 0
    %6628 = vmatpush2.bf16.msra.mxu0 %v6471
    %6629 = vmatprep.subr.bf16.mxu0 0
    %6630 = vmatpush2.bf16.msra.mxu0 %v6470
    %6631 = vmatprep.subr.bf16.mxu0 0
    %6632 = vmatpush2.bf16.msra.mxu0 %v6469
    %6633 = vmatprep.subr.bf16.mxu0 0
    %6634 = vmatpush2.bf16.msra.mxu0 %v6468
    %6635 = vmatprep.subr.bf16.mxu0 0
    %6636 = vmatpush2.bf16.msra.mxu0 %v6467
    %6637 = vmatprep.subr.bf16.mxu0 0
    %6638 = vmatpush2.bf16.msra.mxu0 %v6466
    %6639 = vmatprep.subr.bf16.mxu0 0
    %6640 = vmatpush2.bf16.msra.mxu0 %v6465
    %6641 = vmatprep.mubr.bf16.mxu0 %v6045
    %6642 = vmatmul.mubr.bf16.gmra.mxu0 %v6044
    %v6643 = vpop.f32.mrf.mxu0
    %v6644 = vadd.f32 %v6604, %v6643
    %v6645 = vpop.f32.mrf.mxu0
    %v6646 = vpop.f32.mrf.mxu0
    %v6647 = vpop.f32.mrf.mxu0
    %6648 = vdwg.mxu0
    %6649 = vmatprep.subr.bf16.mxu0 0
    %6650 = vmatpush1.bf16.msra.mxu0 %v6480
    %6651 = vmatprep.subr.bf16.mxu0 0
    %6652 = vmatpush1.bf16.msra.mxu0 %v6479
    %6653 = vmatprep.subr.bf16.mxu0 0
    %6654 = vmatpush1.bf16.msra.mxu0 %v6478
    %6655 = vmatprep.subr.bf16.mxu0 0
    %6656 = vmatpush1.bf16.msra.mxu0 %v6477
    %6657 = vmatprep.subr.bf16.mxu0 0
    %6658 = vmatpush1.bf16.msra.mxu0 %v6476
    %6659 = vmatprep.subr.bf16.mxu0 0
    %6660 = vmatpush1.bf16.msra.mxu0 %v6475
    %6661 = vmatprep.subr.bf16.mxu0 0
    %6662 = vmatpush1.bf16.msra.mxu0 %v6474
    %6663 = vmatprep.subr.bf16.mxu0 0
    %6664 = vmatpush1.bf16.msra.mxu0 %v6473
    %6665 = vmatprep.subr.bf16.mxu0 0
    %6666 = vmatpush2.bf16.msra.mxu0 %v6488
    %6667 = vmatprep.subr.bf16.mxu0 0
    %6668 = vmatpush2.bf16.msra.mxu0 %v6487
    %6669 = vmatprep.subr.bf16.mxu0 0
    %6670 = vmatpush2.bf16.msra.mxu0 %v6486
    %6671 = vmatprep.subr.bf16.mxu0 0
    %6672 = vmatpush2.bf16.msra.mxu0 %v6485
    %6673 = vmatprep.subr.bf16.mxu0 0
    %6674 = vmatpush2.bf16.msra.mxu0 %v6484
    %6675 = vmatprep.subr.bf16.mxu0 0
    %6676 = vmatpush2.bf16.msra.mxu0 %v6483
    %6677 = vmatprep.subr.bf16.mxu0 0
    %6678 = vmatpush2.bf16.msra.mxu0 %v6482
    %6679 = vmatprep.subr.bf16.mxu0 0
    %6680 = vmatpush2.bf16.msra.mxu0 %v6481
    %6681 = vmatprep.mubr.bf16.mxu0 %v6047
    %6682 = vmatmul.mubr.bf16.gmra.mxu0 %v6046
    %v6683 = vpop.f32.mrf.mxu0
    %v6684 = vadd.f32 %v6644, %v6683
    %v6685 = vpop.f32.mrf.mxu0
    %v6686 = vpop.f32.mrf.mxu0
    %v6687 = vpop.f32.mrf.mxu0
    %6688 = vdwg.mxu0
    %6689 = vmatprep.subr.bf16.mxu0 0
    %6690 = vmatpush1.bf16.msra.mxu0 %v6496
    %6691 = vmatprep.subr.bf16.mxu0 0
    %6692 = vmatpush1.bf16.msra.mxu0 %v6495
    %6693 = vmatprep.subr.bf16.mxu0 0
    %6694 = vmatpush1.bf16.msra.mxu0 %v6494
    %6695 = vmatprep.subr.bf16.mxu0 0
    %6696 = vmatpush1.bf16.msra.mxu0 %v6493
    %6697 = vmatprep.subr.bf16.mxu0 0
    %6698 = vmatpush1.bf16.msra.mxu0 %v6492
    %6699 = vmatprep.subr.bf16.mxu0 0
    %6700 = vmatpush1.bf16.msra.mxu0 %v6491
    %6701 = vmatprep.subr.bf16.mxu0 0
    %6702 = vmatpush1.bf16.msra.mxu0 %v6490
    %6703 = vmatprep.subr.bf16.mxu0 0
    %6704 = vmatpush1.bf16.msra.mxu0 %v6489
    %6705 = vmatprep.subr.bf16.mxu0 0
    %6706 = vmatpush2.bf16.msra.mxu0 %v6504
    %6707 = vmatprep.subr.bf16.mxu0 0
    %6708 = vmatpush2.bf16.msra.mxu0 %v6503
    %6709 = vmatprep.subr.bf16.mxu0 0
    %6710 = vmatpush2.bf16.msra.mxu0 %v6502
    %6711 = vmatprep.subr.bf16.mxu0 0
    %6712 = vmatpush2.bf16.msra.mxu0 %v6501
    %6713 = vmatprep.subr.bf16.mxu0 0
    %6714 = vmatpush2.bf16.msra.mxu0 %v6500
    %6715 = vmatprep.subr.bf16.mxu0 0
    %6716 = vmatpush2.bf16.msra.mxu0 %v6499
    %6717 = vmatprep.subr.bf16.mxu0 0
    %6718 = vmatpush2.bf16.msra.mxu0 %v6498
    %6719 = vmatprep.subr.bf16.mxu0 0
    %6720 = vmatpush2.bf16.msra.mxu0 %v6497
    %6721 = vmatprep.mubr.bf16.mxu0 %v6049
    %6722 = vmatmul.mubr.bf16.gmra.mxu0 %v6048
    %v6723 = vpop.f32.mrf.mxu0
    %v6724 = vadd.f32 %v6684, %v6723
    %v6725 = vpop.f32.mrf.mxu0
    %v6726 = vpop.f32.mrf.mxu0
    %v6727 = vpop.f32.mrf.mxu0
    %6728 = vdwg.mxu0
    %6729 = vst [vmem:[#allocation11] sm:$0xff] %v6724
    // Predicated region
    $region42: #{tpu_custom_call.1} parent=1 // pred_check
      _
    $region43: #{tpu_custom_call.1} parent=1 // pred_check_branch
      %6731 = sbr.rel (0) target = $region45
    $region44: #{tpu_custom_call.1} parent=1 // pred_region
      %s6733 = ssub.s32 128, 128
      %6734 = vsyncadd [#allocation4], %s6733
      %s6736 = sshll.u32 [#allocation11], 4
      %s6737 = int_to_ptr.vmem [resolvable:$true] %s6736
      %6739 = dma.vmem_to_hbm [thread:$0]  %s6737, 128, %s5, [#allocation4]
    $region45: #{tpu_custom_call.1} parent=1 // pred_fallthru
      _
    // Predicated region
    $region46: #{tpu_custom_call.1} parent=1 // pred_check
      _
    $region47: #{tpu_custom_call.1} parent=1 // pred_check_branch
      %6741 = sbr.rel (0) target = $region49
    $region48: #{tpu_custom_call.1} parent=1 // pred_region
      %6742 = dma.done [#allocation4], 128
    $region49: #{tpu_custom_call.1} parent=1 // pred_fallthru
      _
    %6743 = vsyncpa [#allocation3], 1
    %6744 = vsyncpa [#allocation6], 1
    %6745 = vsyncpa [#allocation9], 1
    %6746 = vsyncpa [#allocation4], 1

</llo_original>
